<compile_context>
chip_gen: v7x
topology: tpu7x:2x2x1
jax: 0.10.0
libtpu: 0.0.40
codegen_flags: <defaults>
</compile_context>

<pallas_src>
import functools

import numpy as np
import jax
import jax.numpy as jnp
from jax import lax
from jax.experimental import pallas as pl
from jax.experimental.pallas import tpu as pltpu

# Model constants (fixed by the PyTorch module definition)
d_k = d_v = 16
d_model = 128
n_heads = 8
LN_EPS = 1e-5
NEG_INF = -1e9


def _mha_kernel(*refs, bblk, lq, lk, has_mask):
    """One grid step = BBLK batch elements: projections + attention + fc + LayerNorm."""
    it = iter(refs)
    q_ref = next(it)
    k_ref = next(it)
    v_ref = next(it)
    mask_ref = next(it) if has_mask else None
    w0T_ref = next(it) if has_mask else None          # fc0 only exists on the mask path
    wqT_ref = next(it)
    wkT_ref = next(it)
    wvT_ref = next(it)
    woT_ref = next(it)
    g_ref = next(it)
    b_ref = next(it)
    out_ref = next(it)
    attn_ref = next(it)
    ctx_ref = next(it)                                # VMEM scratch [bblk, lq, H*dv] f32

    M = bblk * lq
    x = q_ref[...].reshape(M, d_model)                # bf16 [M, 128]
    kx = k_ref[...].reshape(bblk * lk, d_model)       # bf16
    vx = v_ref[...].reshape(bblk * lk, d_model)       # bf16

    # Projections: contraction-128 matmuls, bf16 operands, f32 MXU accumulation.
    # The 1/sqrt(d_k) softmax scale is already folded into wqT (wrapper).
    if has_mask:
        residual = jnp.dot(x, w0T_ref[...], preferred_element_type=jnp.float32)
    else:
        residual = x.astype(jnp.float32)              # PyTorch: residual = input_Q
    Q = jnp.dot(x, wqT_ref[...], preferred_element_type=jnp.float32)    # [M, H*dk]
    K = jnp.dot(kx, wkT_ref[...], preferred_element_type=jnp.float32)   # [bblk*lk, H*dk]
    V = jnp.dot(vx, wvT_ref[...], preferred_element_type=jnp.float32)   # [bblk*lk, H*dv]

    # bf16 operands for the attention core (MXU-native), shaped with a BBLK batch dim.
    Qb = Q.astype(jnp.bfloat16).reshape(bblk, lq, n_heads * d_k)
    Kb = K.astype(jnp.bfloat16).reshape(bblk, lk, n_heads * d_k)
    Vb = V.astype(jnp.bfloat16).reshape(bblk, lk, n_heads * d_v)

    if has_mask:
        mask_add = mask_ref[...].astype(jnp.float32)  # [bblk, lq, lk], 0 / -1e9

    for h in range(n_heads):                          # static loop, H = 8
        hq = slice(h * d_k, (h + 1) * d_k)
        hv = slice(h * d_v, (h + 1) * d_v)
        # scores_h = Q_h @ K_h^T (scale pre-folded), batched over BBLK on the MXU
        s = jnp.einsum('bqd,bkd->bqk', Qb[:, :, hq], Kb[:, :, hq],
                       preferred_element_type=jnp.float32)              # [bblk, lq, lk]
        if has_mask:
            s = s + mask_add
        smax = jnp.max(s, axis=-1, keepdims=True)
        p = jnp.exp(s - smax)
        attn_h = p / jnp.sum(p, axis=-1, keepdims=True)                 # exact softmax
        attn_ref[:, :, h * lk:(h + 1) * lk] = attn_h                    # lane-dense layout
        # context_h = attn_h @ V_h, staged into the context slab (bf16 probs on the MXU)
        ctx_ref[:, :, hv] = jnp.einsum('bqk,bkd->bqd',
                                       attn_h.astype(jnp.bfloat16), Vb[:, :, hv],
                                       preferred_element_type=jnp.float32)

    # Output projection: ONE contraction-128 matmul over the assembled context slab.
    ctx = ctx_ref[...].astype(jnp.bfloat16).reshape(M, n_heads * d_v)
    y = residual + jnp.dot(ctx, woT_ref[...], preferred_element_type=jnp.float32)

    # LayerNorm (f32 statistics, biased variance, eps = 1e-5)
    mean = jnp.mean(y, axis=-1, keepdims=True)
    var = jnp.mean((y - mean) ** 2, axis=-1, keepdims=True)
    out = (y - mean) * lax.rsqrt(var + LN_EPS) * g_ref[...] + b_ref[...]
    out_ref[...] = out.reshape(bblk, lq, d_model)


def _pick_bblk(B, Lq):
    """Batch elements per grid step: fill the MXU M dim (<=256 rows per step) while
    keeping >=2 grid steps when B allows (v7x has 2 TensorCores)."""
    divs = [c for c in range(1, B + 1) if B % c == 0 and c * Lq <= 256]
    if not divs:
        return 1
    multi = [c for c in divs if B // c >= 2]
    return max(multi) if multi else max(divs)


def multi_head_attention(input_Q, input_K, input_V, attn_mask, params):
    """
    input_Q: [B, Lq, d_model] f32
    input_K: [B, Lk, d_model] f32
    input_V: [B, Lk, d_model] f32
    attn_mask: [B, Lq, Lk] (1.0 / True = masked) or None
    params: PyTorch [out, in] convention weights + LayerNorm gamma/beta
    returns (out [B, Lq, d_model] f32, attn [B, n_heads, Lq, Lk] f32)
    """
    B, Lq, D = input_Q.shape
    _, Lk, _ = input_K.shape
    assert D == d_model

    has_mask = attn_mask is not None
    bblk = _pick_bblk(B, Lq)

    scale = 1.0 / float(np.sqrt(d_k))
    # Pre-transpose weights to [in, out]; fold the softmax scale into W_Q; bf16 MXU operands.
    wqT = (params["wq"].T * scale).astype(jnp.bfloat16)
    wkT = params["wk"].T.astype(jnp.bfloat16)
    wvT = params["wv"].T.astype(jnp.bfloat16)
    woT = params["wo"].T.astype(jnp.bfloat16)
    g = params["g"].reshape(1, d_model).astype(jnp.float32)
    b = params["b"].reshape(1, d_model).astype(jnp.float32)

    qb = input_Q.astype(jnp.bfloat16)
    kb = input_K.astype(jnp.bfloat16)
    vb = input_V.astype(jnp.bfloat16)

    full2d = lambda shape: pl.BlockSpec(shape, lambda i: (0, 0))

    operands = [qb, kb, vb]
    in_specs = [
        pl.BlockSpec((bblk, Lq, d_model), lambda i: (i, 0, 0)),
        pl.BlockSpec((bblk, Lk, d_model), lambda i: (i, 0, 0)),
        pl.BlockSpec((bblk, Lk, d_model), lambda i: (i, 0, 0)),
    ]
    if has_mask:
        # Compact additive mask (no head dim): 0.0 keep / -1e9 masked, bf16.
        masked = jnp.asarray(attn_mask).astype(jnp.float32) > 0.5
        mask_add = jnp.where(masked, jnp.float32(NEG_INF), jnp.float32(0.0)).astype(jnp.bfloat16)
        w0T = params["w0"].T.astype(jnp.bfloat16)
        operands += [mask_add, w0T]
        in_specs += [
            pl.BlockSpec((bblk, Lq, Lk), lambda i: (i, 0, 0)),
            full2d((d_model, d_model)),
        ]
    operands += [wqT, wkT, wvT, woT, g, b]
    in_specs += [
        full2d((d_model, n_heads * d_k)),     # W_Q^T (scaled)
        full2d((d_model, n_heads * d_k)),     # W_K^T
        full2d((d_model, n_heads * d_v)),     # W_V^T
        full2d((n_heads * d_v, d_model)),     # fc^T
        full2d((1, d_model)),                 # LN gamma
        full2d((1, d_model)),                 # LN beta
    ]

    out_shapes = (
        jax.ShapeDtypeStruct((B, Lq, d_model), jnp.float32),
        # attn emitted lane-dense: [B, Lq, H*Lk] (reshaped to [B, H, Lq, Lk] below)
        jax.ShapeDtypeStruct((B, Lq, n_heads * Lk), jnp.float32),
    )
    out_specs = [
        pl.BlockSpec((bblk, Lq, d_model), lambda i: (i, 0, 0)),
        pl.BlockSpec((bblk, Lq, n_heads * Lk), lambda i: (i, 0, 0)),
    ]

    kernel = functools.partial(_mha_kernel, bblk=bblk, lq=Lq, lk=Lk, has_mask=has_mask)

    out, attn_dense = pl.pallas_call(
        kernel,
        out_shape=out_shapes,
        grid_spec=pltpu.PrefetchScalarGridSpec(
            num_scalar_prefetch=0,
            grid=(B // bblk,),
            in_specs=in_specs,
            out_specs=out_specs,
            scratch_shapes=[pltpu.VMEM((bblk, Lq, n_heads * d_v), jnp.float32)],
        ),
        compiler_params=pltpu.CompilerParams(dimension_semantics=("parallel",)),
    )(*operands)

    attn = attn_dense.reshape(B, Lq, n_heads, Lk).transpose(0, 2, 1, 3)
    return out, attn


# ----- plain-JAX f32 reference (mirrors the PyTorch forward exactly) -----
def reference(input_Q, input_K, input_V, attn_mask, params):
    B, Lq, D = input_Q.shape
    residual = input_Q @ params["w0"].T if attn_mask is not None else input_Q
    Q = (input_Q @ params["wq"].T).reshape(B, Lq, n_heads, d_k).transpose(0, 2, 1, 3)
    K = (input_K @ params["wk"].T).reshape(B, -1, n_heads, d_k).transpose(0, 2, 1, 3)
    V = (input_V @ params["wv"].T).reshape(B, -1, n_heads, d_v).transpose(0, 2, 1, 3)
    scores = Q @ K.transpose(0, 1, 3, 2) / np.sqrt(d_k)
    if attn_mask is not None:
        scores = jnp.where(attn_mask[:, None, :, :] > 0.5, -1e9, scores)
    attn = jax.nn.softmax(scores, axis=-1)
    ctx = (attn @ V).transpose(0, 2, 1, 3).reshape(B, Lq, n_heads * d_v)
    y = ctx @ params["wo"].T + residual
    mean = jnp.mean(y, axis=-1, keepdims=True)
    var = jnp.mean((y - mean) ** 2, axis=-1, keepdims=True)
    return (y - mean) / jnp.sqrt(var + LN_EPS) * params["g"] + params["b"], attn


if __name__ == "__main__":
    B, L = 4, 8
    key = jax.random.PRNGKey(0)
    ks = jax.random.split(key, 10)

    # deterministic parameters (PyTorch [out, in] weight convention)
    params = {
        "w0": 0.05 * jax.random.normal(ks[0], (d_model, d_model), jnp.float32),
        "wq": 0.05 * jax.random.normal(ks[1], (n_heads * d_k, d_model), jnp.float32),
        "wk": 0.05 * jax.random.normal(ks[2], (n_heads * d_k, d_model), jnp.float32),
        "wv": 0.05 * jax.random.normal(ks[3], (n_heads * d_v, d_model), jnp.float32),
        "wo": 0.05 * jax.random.normal(ks[4], (d_model, n_heads * d_v), jnp.float32),
        "g": 1.0 + 0.01 * jax.random.normal(ks[5], (d_model,), jnp.float32),
        "b": 0.01 * jax.random.normal(ks[6], (d_model,), jnp.float32),
    }

    input_Q = jax.random.normal(ks[7], (B, L, d_model), jnp.float32)
    input_K = jax.random.normal(ks[8], (B, L, d_model), jnp.float32)
    input_V = jax.random.normal(ks[9], (B, L, d_model), jnp.float32)

    # deterministic mask (1.0 = masked): mask the last key position
    j_idx = lax.broadcasted_iota(jnp.int32, (B, L, L), 2)
    attn_mask = (j_idx == (L - 1)).astype(jnp.float32)

    # masked path (fc0 residual)
    out, attn = multi_head_attention(input_Q, input_K, input_V, attn_mask, params)
    jax.block_until_ready((out, attn))
    ref_out, ref_attn = reference(input_Q, input_K, input_V, attn_mask, params)
    # tolerances account for bf16 MXU operands
    assert jnp.allclose(attn, ref_attn, rtol=1e-2, atol=1e-2), "attn mismatch (mask path)"
    assert jnp.allclose(out, ref_out, rtol=2e-2, atol=3e-2), "output mismatch (mask path)"

    # no-mask path (residual = input_Q, no fc0, no masking)
    out2, attn2 = multi_head_attention(input_Q, input_K, input_V, None, params)
    jax.block_until_ready((out2, attn2))
    ref_out2, ref_attn2 = reference(input_Q, input_K, input_V, None, params)
    assert jnp.allclose(attn2, ref_attn2, rtol=1e-2, atol=1e-2), "attn mismatch (no-mask path)"
    assert jnp.allclose(out2, ref_out2, rtol=2e-2, atol=3e-2), "output mismatch (no-mask path)"

    print("KERNEL_OK")
</pallas_src>

<mosaic_0001>
module attributes {stable_mosaic.version = 11 : i64} {
  func.func @_mha_kernel(%arg0: i32, %arg1: memref<2x8x128xbf16, #tpu.memory_space<vmem>>, %arg2: memref<2x8x128xbf16, #tpu.memory_space<vmem>>, %arg3: memref<2x8x128xbf16, #tpu.memory_space<vmem>>, %arg4: memref<2x8x8xbf16, #tpu.memory_space<vmem>>, %arg5: memref<128x128xbf16, #tpu.memory_space<vmem>>, %arg6: memref<128x128xbf16, #tpu.memory_space<vmem>>, %arg7: memref<128x128xbf16, #tpu.memory_space<vmem>>, %arg8: memref<128x128xbf16, #tpu.memory_space<vmem>>, %arg9: memref<128x128xbf16, #tpu.memory_space<vmem>>, %arg10: memref<1x128xf32, #tpu.memory_space<vmem>>, %arg11: memref<1x128xf32, #tpu.memory_space<vmem>>, %arg12: memref<2x8x128xf32, #tpu.memory_space<vmem>>, %arg13: memref<2x8x64xf32, #tpu.memory_space<vmem>>, %arg14: memref<2x8x128xf32, #tpu.memory_space<vmem>>) attributes {dimension_semantics = [#tpu.dimension_semantics<parallel>], iteration_bounds = array<i64: 2>, scalar_prefetch = 0 : i64, scratch_operands = 1 : i64, tpu.core_type = #tpu.core_type<tc>, window_params = [{transform_indices = @transform_0, window_bounds = array<i64: 2, 8, 128>}, {transform_indices = @transform_1, window_bounds = array<i64: 2, 8, 128>}, {transform_indices = @transform_2, window_bounds = array<i64: 2, 8, 128>}, {transform_indices = @transform_3, window_bounds = array<i64: 2, 8, 8>}, {pipeline_mode = #tpu.pipeline_mode<synchronous>, transform_indices = @transform_4, window_bounds = array<i64: 128, 128>}, {pipeline_mode = #tpu.pipeline_mode<synchronous>, transform_indices = @transform_5, window_bounds = array<i64: 128, 128>}, {pipeline_mode = #tpu.pipeline_mode<synchronous>, transform_indices = @transform_6, window_bounds = array<i64: 128, 128>}, {pipeline_mode = #tpu.pipeline_mode<synchronous>, transform_indices = @transform_7, window_bounds = array<i64: 128, 128>}, {pipeline_mode = #tpu.pipeline_mode<synchronous>, transform_indices = @transform_8, window_bounds = array<i64: 128, 128>}, {pipeline_mode = #tpu.pipeline_mode<synchronous>, transform_indices = @transform_9, window_bounds = array<i64: 1, 128>}, {pipeline_mode = #tpu.pipeline_mode<synchronous>, transform_indices = @transform_10, window_bounds = array<i64: 1, 128>}, {transform_indices = @transform_11, window_bounds = array<i64: 2, 8, 128>}, {transform_indices = @transform_12, window_bounds = array<i64: 2, 8, 64>}]} {
    %c0 = arith.constant 0 : index
    %c0_0 = arith.constant 0 : index
    %c0_1 = arith.constant 0 : index
    %0 = vector.load %arg1[%c0, %c0_0, %c0_1] : memref<2x8x128xbf16, #tpu.memory_space<vmem>>, vector<2x8x128xbf16>
    %1 = vector.shape_cast %0 : vector<2x8x128xbf16> to vector<16x128xbf16>
    %c0_2 = arith.constant 0 : index
    %c0_3 = arith.constant 0 : index
    %c0_4 = arith.constant 0 : index
    %2 = vector.load %arg2[%c0_2, %c0_3, %c0_4] : memref<2x8x128xbf16, #tpu.memory_space<vmem>>, vector<2x8x128xbf16>
    %3 = vector.shape_cast %2 : vector<2x8x128xbf16> to vector<16x128xbf16>
    %c0_5 = arith.constant 0 : index
    %c0_6 = arith.constant 0 : index
    %c0_7 = arith.constant 0 : index
    %4 = vector.load %arg3[%c0_5, %c0_6, %c0_7] : memref<2x8x128xbf16, #tpu.memory_space<vmem>>, vector<2x8x128xbf16>
    %5 = vector.shape_cast %4 : vector<2x8x128xbf16> to vector<16x128xbf16>
    %c0_8 = arith.constant 0 : index
    %c0_9 = arith.constant 0 : index
    %6 = vector.load %arg5[%c0_8, %c0_9] : memref<128x128xbf16, #tpu.memory_space<vmem>>, vector<128x128xbf16>
    %cst = arith.constant dense<0.000000e+00> : vector<16x128xf32>
    %7 = tpu.matmul %1, %6, %cst {dimension_numbers = #tpu.dot_dimension_numbers<[1], [0], [0], [1], [0, 0, 1, 1], [], []>} : vector<16x128xbf16>, vector<128x128xbf16>, vector<16x128xf32> -> vector<16x128xf32>
    %c0_10 = arith.constant 0 : index
    %c0_11 = arith.constant 0 : index
    %8 = vector.load %arg6[%c0_10, %c0_11] : memref<128x128xbf16, #tpu.memory_space<vmem>>, vector<128x128xbf16>
    %cst_12 = arith.constant dense<0.000000e+00> : vector<16x128xf32>
    %9 = tpu.matmul %1, %8, %cst_12 {dimension_numbers = #tpu.dot_dimension_numbers<[1], [0], [0], [1], [0, 0, 1, 1], [], []>} : vector<16x128xbf16>, vector<128x128xbf16>, vector<16x128xf32> -> vector<16x128xf32>
    %c0_13 = arith.constant 0 : index
    %c0_14 = arith.constant 0 : index
    %10 = vector.load %arg7[%c0_13, %c0_14] : memref<128x128xbf16, #tpu.memory_space<vmem>>, vector<128x128xbf16>
    %cst_15 = arith.constant dense<0.000000e+00> : vector<16x128xf32>
    %11 = tpu.matmul %3, %10, %cst_15 {dimension_numbers = #tpu.dot_dimension_numbers<[1], [0], [0], [1], [0, 0, 1, 1], [], []>} : vector<16x128xbf16>, vector<128x128xbf16>, vector<16x128xf32> -> vector<16x128xf32>
    %c0_16 = arith.constant 0 : index
    %c0_17 = arith.constant 0 : index
    %12 = vector.load %arg8[%c0_16, %c0_17] : memref<128x128xbf16, #tpu.memory_space<vmem>>, vector<128x128xbf16>
    %cst_18 = arith.constant dense<0.000000e+00> : vector<16x128xf32>
    %13 = tpu.matmul %5, %12, %cst_18 {dimension_numbers = #tpu.dot_dimension_numbers<[1], [0], [0], [1], [0, 0, 1, 1], [], []>} : vector<16x128xbf16>, vector<128x128xbf16>, vector<16x128xf32> -> vector<16x128xf32>
    %14 = arith.truncf %9 : vector<16x128xf32> to vector<16x128xbf16>
    %15 = vector.shape_cast %14 : vector<16x128xbf16> to vector<2x8x128xbf16>
    %16 = arith.truncf %11 : vector<16x128xf32> to vector<16x128xbf16>
    %17 = vector.shape_cast %16 : vector<16x128xbf16> to vector<2x8x128xbf16>
    %18 = arith.truncf %13 : vector<16x128xf32> to vector<16x128xbf16>
    %19 = vector.shape_cast %18 : vector<16x128xbf16> to vector<2x8x128xbf16>
    %c0_19 = arith.constant 0 : index
    %c0_20 = arith.constant 0 : index
    %c0_21 = arith.constant 0 : index
    %20 = vector.load %arg4[%c0_19, %c0_20, %c0_21] : memref<2x8x8xbf16, #tpu.memory_space<vmem>>, vector<2x8x8xbf16>
    %21 = arith.extf %20 : vector<2x8x8xbf16> to vector<2x8x8xf32>
    %22 = vector.extract_strided_slice %15 {offsets = [0, 0, 0], sizes = [2, 8, 16], strides = [1, 1, 1]} : vector<2x8x128xbf16> to vector<2x8x16xbf16>
    %23 = vector.extract_strided_slice %17 {offsets = [0, 0, 0], sizes = [2, 8, 16], strides = [1, 1, 1]} : vector<2x8x128xbf16> to vector<2x8x16xbf16>
    "tpu.trace_start"() <{level = 10 : i32, message = "bqd,bkd->bqk"}> : () -> ()
    %cst_22 = arith.constant dense<0.000000e+00> : vector<2x8x8xf32>
    %24 = tpu.matmul %22, %23, %cst_22 {dimension_numbers = #tpu.dot_dimension_numbers<[2], [2], [1], [1], [0, 0, 0, 1, 1, 1], [0], [0]>} : vector<2x8x16xbf16>, vector<2x8x16xbf16>, vector<2x8x8xf32> -> vector<2x8x8xf32>
    "tpu.trace_stop"() : () -> ()
    %25 = arith.addf %24, %21 : vector<2x8x8xf32>
    %cst_23 = arith.constant dense<0xFF800000> : vector<2x8xf32>
    %26 = vector.multi_reduction <maximumf>, %25, %cst_23 [2] : vector<2x8x8xf32> to vector<2x8xf32>
    %27 = vector.shape_cast %26 : vector<2x8xf32> to vector<2x8x1xf32>
    %28 = vector.broadcast %27 : vector<2x8x1xf32> to vector<2x8x8xf32>
    %29 = arith.subf %25, %28 : vector<2x8x8xf32>
    %30 = math.exp %29 : vector<2x8x8xf32>
    %cst_24 = arith.constant dense<0.000000e+00> : vector<2x8xf32>
    %31 = vector.multi_reduction <add>, %30, %cst_24 [2] : vector<2x8x8xf32> to vector<2x8xf32>
    %32 = vector.shape_cast %31 : vector<2x8xf32> to vector<2x8x1xf32>
    %33 = vector.broadcast %32 : vector<2x8x1xf32> to vector<2x8x8xf32>
    %34 = arith.divf %30, %33 : vector<2x8x8xf32>
    %c0_25 = arith.constant 0 : index
    %c0_26 = arith.constant 0 : index
    %c0_27 = arith.constant 0 : index
    %35 = vector.load %arg13[%c0_25, %c0_26, %c0_27] : memref<2x8x64xf32, #tpu.memory_space<vmem>>, vector<2x8x8xf32>
    tpu.vector_store %arg13[%c0_25, %c0_26, %c0_27], %34 {strides = array<i32>} : memref<2x8x64xf32, #tpu.memory_space<vmem>>, vector<2x8x8xf32>,
    %36 = arith.truncf %34 : vector<2x8x8xf32> to vector<2x8x8xbf16>
    %37 = vector.extract_strided_slice %19 {offsets = [0, 0, 0], sizes = [2, 8, 16], strides = [1, 1, 1]} : vector<2x8x128xbf16> to vector<2x8x16xbf16>
    "tpu.trace_start"() <{level = 10 : i32, message = "bqk,bkd->bqd"}> : () -> ()
    %cst_28 = arith.constant dense<0.000000e+00> : vector<2x8x16xf32>
    %38 = tpu.matmul %36, %37, %cst_28 {dimension_numbers = #tpu.dot_dimension_numbers<[2], [1], [1], [2], [0, 0, 0, 1, 1, 2], [0], [0]>} : vector<2x8x8xbf16>, vector<2x8x16xbf16>, vector<2x8x16xf32> -> vector<2x8x16xf32>
    "tpu.trace_stop"() : () -> ()
    %c0_29 = arith.constant 0 : index
    %c0_30 = arith.constant 0 : index
    %c0_31 = arith.constant 0 : index
    %39 = vector.load %arg14[%c0_29, %c0_30, %c0_31] : memref<2x8x128xf32, #tpu.memory_space<vmem>>, vector<2x8x16xf32>
    tpu.vector_store %arg14[%c0_29, %c0_30, %c0_31], %38 {strides = array<i32>} : memref<2x8x128xf32, #tpu.memory_space<vmem>>, vector<2x8x16xf32>,
    %40 = vector.extract_strided_slice %15 {offsets = [0, 0, 16], sizes = [2, 8, 16], strides = [1, 1, 1]} : vector<2x8x128xbf16> to vector<2x8x16xbf16>
    %41 = vector.extract_strided_slice %17 {offsets = [0, 0, 16], sizes = [2, 8, 16], strides = [1, 1, 1]} : vector<2x8x128xbf16> to vector<2x8x16xbf16>
    "tpu.trace_start"() <{level = 10 : i32, message = "bqd,bkd->bqk"}> : () -> ()
    %cst_32 = arith.constant dense<0.000000e+00> : vector<2x8x8xf32>
    %42 = tpu.matmul %40, %41, %cst_32 {dimension_numbers = #tpu.dot_dimension_numbers<[2], [2], [1], [1], [0, 0, 0, 1, 1, 1], [0], [0]>} : vector<2x8x16xbf16>, vector<2x8x16xbf16>, vector<2x8x8xf32> -> vector<2x8x8xf32>
    "tpu.trace_stop"() : () -> ()
    %43 = arith.addf %42, %21 : vector<2x8x8xf32>
    %cst_33 = arith.constant dense<0xFF800000> : vector<2x8xf32>
    %44 = vector.multi_reduction <maximumf>, %43, %cst_33 [2] : vector<2x8x8xf32> to vector<2x8xf32>
    %45 = vector.shape_cast %44 : vector<2x8xf32> to vector<2x8x1xf32>
    %46 = vector.broadcast %45 : vector<2x8x1xf32> to vector<2x8x8xf32>
    %47 = arith.subf %43, %46 : vector<2x8x8xf32>
    %48 = math.exp %47 : vector<2x8x8xf32>
    %cst_34 = arith.constant dense<0.000000e+00> : vector<2x8xf32>
    %49 = vector.multi_reduction <add>, %48, %cst_34 [2] : vector<2x8x8xf32> to vector<2x8xf32>
    %50 = vector.shape_cast %49 : vector<2x8xf32> to vector<2x8x1xf32>
    %51 = vector.broadcast %50 : vector<2x8x1xf32> to vector<2x8x8xf32>
    %52 = arith.divf %48, %51 : vector<2x8x8xf32>
    %c0_35 = arith.constant 0 : index
    %c0_36 = arith.constant 0 : index
    %c8 = arith.constant 8 : index
    %53 = vector.load %arg13[%c0_35, %c0_36, %c8] : memref<2x8x64xf32, #tpu.memory_space<vmem>>, vector<2x8x8xf32>
    tpu.vector_store %arg13[%c0_35, %c0_36, %c8], %52 {strides = array<i32>} : memref<2x8x64xf32, #tpu.memory_space<vmem>>, vector<2x8x8xf32>,
    %54 = arith.truncf %52 : vector<2x8x8xf32> to vector<2x8x8xbf16>
    %55 = vector.extract_strided_slice %19 {offsets = [0, 0, 16], sizes = [2, 8, 16], strides = [1, 1, 1]} : vector<2x8x128xbf16> to vector<2x8x16xbf16>
    "tpu.trace_start"() <{level = 10 : i32, message = "bqk,bkd->bqd"}> : () -> ()
    %cst_37 = arith.constant dense<0.000000e+00> : vector<2x8x16xf32>
    %56 = tpu.matmul %54, %55, %cst_37 {dimension_numbers = #tpu.dot_dimension_numbers<[2], [1], [1], [2], [0, 0, 0, 1, 1, 2], [0], [0]>} : vector<2x8x8xbf16>, vector<2x8x16xbf16>, vector<2x8x16xf32> -> vector<2x8x16xf32>
    "tpu.trace_stop"() : () -> ()
    %c0_38 = arith.constant 0 : index
    %c0_39 = arith.constant 0 : index
    %c16 = arith.constant 16 : index
    %57 = vector.load %arg14[%c0_38, %c0_39, %c16] : memref<2x8x128xf32, #tpu.memory_space<vmem>>, vector<2x8x16xf32>
    tpu.vector_store %arg14[%c0_38, %c0_39, %c16], %56 {strides = array<i32>} : memref<2x8x128xf32, #tpu.memory_space<vmem>>, vector<2x8x16xf32>,
    %58 = vector.extract_strided_slice %15 {offsets = [0, 0, 32], sizes = [2, 8, 16], strides = [1, 1, 1]} : vector<2x8x128xbf16> to vector<2x8x16xbf16>
    %59 = vector.extract_strided_slice %17 {offsets = [0, 0, 32], sizes = [2, 8, 16], strides = [1, 1, 1]} : vector<2x8x128xbf16> to vector<2x8x16xbf16>
    "tpu.trace_start"() <{level = 10 : i32, message = "bqd,bkd->bqk"}> : () -> ()
    %cst_40 = arith.constant dense<0.000000e+00> : vector<2x8x8xf32>
    %60 = tpu.matmul %58, %59, %cst_40 {dimension_numbers = #tpu.dot_dimension_numbers<[2], [2], [1], [1], [0, 0, 0, 1, 1, 1], [0], [0]>} : vector<2x8x16xbf16>, vector<2x8x16xbf16>, vector<2x8x8xf32> -> vector<2x8x8xf32>
    "tpu.trace_stop"() : () -> ()
    %61 = arith.addf %60, %21 : vector<2x8x8xf32>
    %cst_41 = arith.constant dense<0xFF800000> : vector<2x8xf32>
    %62 = vector.multi_reduction <maximumf>, %61, %cst_41 [2] : vector<2x8x8xf32> to vector<2x8xf32>
    %63 = vector.shape_cast %62 : vector<2x8xf32> to vector<2x8x1xf32>
    %64 = vector.broadcast %63 : vector<2x8x1xf32> to vector<2x8x8xf32>
    %65 = arith.subf %61, %64 : vector<2x8x8xf32>
    %66 = math.exp %65 : vector<2x8x8xf32>
    %cst_42 = arith.constant dense<0.000000e+00> : vector<2x8xf32>
    %67 = vector.multi_reduction <add>, %66, %cst_42 [2] : vector<2x8x8xf32> to vector<2x8xf32>
    %68 = vector.shape_cast %67 : vector<2x8xf32> to vector<2x8x1xf32>
    %69 = vector.broadcast %68 : vector<2x8x1xf32> to vector<2x8x8xf32>
    %70 = arith.divf %66, %69 : vector<2x8x8xf32>
    %c0_43 = arith.constant 0 : index
    %c0_44 = arith.constant 0 : index
    %c16_45 = arith.constant 16 : index
    %71 = vector.load %arg13[%c0_43, %c0_44, %c16_45] : memref<2x8x64xf32, #tpu.memory_space<vmem>>, vector<2x8x8xf32>
    tpu.vector_store %arg13[%c0_43, %c0_44, %c16_45], %70 {strides = array<i32>} : memref<2x8x64xf32, #tpu.memory_space<vmem>>, vector<2x8x8xf32>,
    %72 = arith.truncf %70 : vector<2x8x8xf32> to vector<2x8x8xbf16>
    %73 = vector.extract_strided_slice %19 {offsets = [0, 0, 32], sizes = [2, 8, 16], strides = [1, 1, 1]} : vector<2x8x128xbf16> to vector<2x8x16xbf16>
    "tpu.trace_start"() <{level = 10 : i32, message = "bqk,bkd->bqd"}> : () -> ()
    %cst_46 = arith.constant dense<0.000000e+00> : vector<2x8x16xf32>
    %74 = tpu.matmul %72, %73, %cst_46 {dimension_numbers = #tpu.dot_dimension_numbers<[2], [1], [1], [2], [0, 0, 0, 1, 1, 2], [0], [0]>} : vector<2x8x8xbf16>, vector<2x8x16xbf16>, vector<2x8x16xf32> -> vector<2x8x16xf32>
    "tpu.trace_stop"() : () -> ()
    %c0_47 = arith.constant 0 : index
    %c0_48 = arith.constant 0 : index
    %c32 = arith.constant 32 : index
    %75 = vector.load %arg14[%c0_47, %c0_48, %c32] : memref<2x8x128xf32, #tpu.memory_space<vmem>>, vector<2x8x16xf32>
    tpu.vector_store %arg14[%c0_47, %c0_48, %c32], %74 {strides = array<i32>} : memref<2x8x128xf32, #tpu.memory_space<vmem>>, vector<2x8x16xf32>,
    %76 = vector.extract_strided_slice %15 {offsets = [0, 0, 48], sizes = [2, 8, 16], strides = [1, 1, 1]} : vector<2x8x128xbf16> to vector<2x8x16xbf16>
    %77 = vector.extract_strided_slice %17 {offsets = [0, 0, 48], sizes = [2, 8, 16], strides = [1, 1, 1]} : vector<2x8x128xbf16> to vector<2x8x16xbf16>
    "tpu.trace_start"() <{level = 10 : i32, message = "bqd,bkd->bqk"}> : () -> ()
    %cst_49 = arith.constant dense<0.000000e+00> : vector<2x8x8xf32>
    %78 = tpu.matmul %76, %77, %cst_49 {dimension_numbers = #tpu.dot_dimension_numbers<[2], [2], [1], [1], [0, 0, 0, 1, 1, 1], [0], [0]>} : vector<2x8x16xbf16>, vector<2x8x16xbf16>, vector<2x8x8xf32> -> vector<2x8x8xf32>
    "tpu.trace_stop"() : () -> ()
    %79 = arith.addf %78, %21 : vector<2x8x8xf32>
    %cst_50 = arith.constant dense<0xFF800000> : vector<2x8xf32>
    %80 = vector.multi_reduction <maximumf>, %79, %cst_50 [2] : vector<2x8x8xf32> to vector<2x8xf32>
    %81 = vector.shape_cast %80 : vector<2x8xf32> to vector<2x8x1xf32>
    %82 = vector.broadcast %81 : vector<2x8x1xf32> to vector<2x8x8xf32>
    %83 = arith.subf %79, %82 : vector<2x8x8xf32>
    %84 = math.exp %83 : vector<2x8x8xf32>
    %cst_51 = arith.constant dense<0.000000e+00> : vector<2x8xf32>
    %85 = vector.multi_reduction <add>, %84, %cst_51 [2] : vector<2x8x8xf32> to vector<2x8xf32>
    %86 = vector.shape_cast %85 : vector<2x8xf32> to vector<2x8x1xf32>
    %87 = vector.broadcast %86 : vector<2x8x1xf32> to vector<2x8x8xf32>
    %88 = arith.divf %84, %87 : vector<2x8x8xf32>
    %c0_52 = arith.constant 0 : index
    %c0_53 = arith.constant 0 : index
    %c24 = arith.constant 24 : index
    %89 = vector.load %arg13[%c0_52, %c0_53, %c24] : memref<2x8x64xf32, #tpu.memory_space<vmem>>, vector<2x8x8xf32>
    tpu.vector_store %arg13[%c0_52, %c0_53, %c24], %88 {strides = array<i32>} : memref<2x8x64xf32, #tpu.memory_space<vmem>>, vector<2x8x8xf32>,
    %90 = arith.truncf %88 : vector<2x8x8xf32> to vector<2x8x8xbf16>
    %91 = vector.extract_strided_slice %19 {offsets = [0, 0, 48], sizes = [2, 8, 16], strides = [1, 1, 1]} : vector<2x8x128xbf16> to vector<2x8x16xbf16>
    "tpu.trace_start"() <{level = 10 : i32, message = "bqk,bkd->bqd"}> : () -> ()
    %cst_54 = arith.constant dense<0.000000e+00> : vector<2x8x16xf32>
    %92 = tpu.matmul %90, %91, %cst_54 {dimension_numbers = #tpu.dot_dimension_numbers<[2], [1], [1], [2], [0, 0, 0, 1, 1, 2], [0], [0]>} : vector<2x8x8xbf16>, vector<2x8x16xbf16>, vector<2x8x16xf32> -> vector<2x8x16xf32>
    "tpu.trace_stop"() : () -> ()
    %c0_55 = arith.constant 0 : index
    %c0_56 = arith.constant 0 : index
    %c48 = arith.constant 48 : index
    %93 = vector.load %arg14[%c0_55, %c0_56, %c48] : memref<2x8x128xf32, #tpu.memory_space<vmem>>, vector<2x8x16xf32>
    tpu.vector_store %arg14[%c0_55, %c0_56, %c48], %92 {strides = array<i32>} : memref<2x8x128xf32, #tpu.memory_space<vmem>>, vector<2x8x16xf32>,
    %94 = vector.extract_strided_slice %15 {offsets = [0, 0, 64], sizes = [2, 8, 16], strides = [1, 1, 1]} : vector<2x8x128xbf16> to vector<2x8x16xbf16>
    %95 = vector.extract_strided_slice %17 {offsets = [0, 0, 64], sizes = [2, 8, 16], strides = [1, 1, 1]} : vector<2x8x128xbf16> to vector<2x8x16xbf16>
    "tpu.trace_start"() <{level = 10 : i32, message = "bqd,bkd->bqk"}> : () -> ()
    %cst_57 = arith.constant dense<0.000000e+00> : vector<2x8x8xf32>
    %96 = tpu.matmul %94, %95, %cst_57 {dimension_numbers = #tpu.dot_dimension_numbers<[2], [2], [1], [1], [0, 0, 0, 1, 1, 1], [0], [0]>} : vector<2x8x16xbf16>, vector<2x8x16xbf16>, vector<2x8x8xf32> -> vector<2x8x8xf32>
    "tpu.trace_stop"() : () -> ()
    %97 = arith.addf %96, %21 : vector<2x8x8xf32>
    %cst_58 = arith.constant dense<0xFF800000> : vector<2x8xf32>
    %98 = vector.multi_reduction <maximumf>, %97, %cst_58 [2] : vector<2x8x8xf32> to vector<2x8xf32>
    %99 = vector.shape_cast %98 : vector<2x8xf32> to vector<2x8x1xf32>
    %100 = vector.broadcast %99 : vector<2x8x1xf32> to vector<2x8x8xf32>
    %101 = arith.subf %97, %100 : vector<2x8x8xf32>
    %102 = math.exp %101 : vector<2x8x8xf32>
    %cst_59 = arith.constant dense<0.000000e+00> : vector<2x8xf32>
    %103 = vector.multi_reduction <add>, %102, %cst_59 [2] : vector<2x8x8xf32> to vector<2x8xf32>
    %104 = vector.shape_cast %103 : vector<2x8xf32> to vector<2x8x1xf32>
    %105 = vector.broadcast %104 : vector<2x8x1xf32> to vector<2x8x8xf32>
    %106 = arith.divf %102, %105 : vector<2x8x8xf32>
    %c0_60 = arith.constant 0 : index
    %c0_61 = arith.constant 0 : index
    %c32_62 = arith.constant 32 : index
    %107 = vector.load %arg13[%c0_60, %c0_61, %c32_62] : memref<2x8x64xf32, #tpu.memory_space<vmem>>, vector<2x8x8xf32>
    tpu.vector_store %arg13[%c0_60, %c0_61, %c32_62], %106 {strides = array<i32>} : memref<2x8x64xf32, #tpu.memory_space<vmem>>, vector<2x8x8xf32>,
    %108 = arith.truncf %106 : vector<2x8x8xf32> to vector<2x8x8xbf16>
    %109 = vector.extract_strided_slice %19 {offsets = [0, 0, 64], sizes = [2, 8, 16], strides = [1, 1, 1]} : vector<2x8x128xbf16> to vector<2x8x16xbf16>
    "tpu.trace_start"() <{level = 10 : i32, message = "bqk,bkd->bqd"}> : () -> ()
    %cst_63 = arith.constant dense<0.000000e+00> : vector<2x8x16xf32>
    %110 = tpu.matmul %108, %109, %cst_63 {dimension_numbers = #tpu.dot_dimension_numbers<[2], [1], [1], [2], [0, 0, 0, 1, 1, 2], [0], [0]>} : vector<2x8x8xbf16>, vector<2x8x16xbf16>, vector<2x8x16xf32> -> vector<2x8x16xf32>
    "tpu.trace_stop"() : () -> ()
    %c0_64 = arith.constant 0 : index
    %c0_65 = arith.constant 0 : index
    %c64 = arith.constant 64 : index
    %111 = vector.load %arg14[%c0_64, %c0_65, %c64] : memref<2x8x128xf32, #tpu.memory_space<vmem>>, vector<2x8x16xf32>
    tpu.vector_store %arg14[%c0_64, %c0_65, %c64], %110 {strides = array<i32>} : memref<2x8x128xf32, #tpu.memory_space<vmem>>, vector<2x8x16xf32>,
    %112 = vector.extract_strided_slice %15 {offsets = [0, 0, 80], sizes = [2, 8, 16], strides = [1, 1, 1]} : vector<2x8x128xbf16> to vector<2x8x16xbf16>
    %113 = vector.extract_strided_slice %17 {offsets = [0, 0, 80], sizes = [2, 8, 16], strides = [1, 1, 1]} : vector<2x8x128xbf16> to vector<2x8x16xbf16>
    "tpu.trace_start"() <{level = 10 : i32, message = "bqd,bkd->bqk"}> : () -> ()
    %cst_66 = arith.constant dense<0.000000e+00> : vector<2x8x8xf32>
    %114 = tpu.matmul %112, %113, %cst_66 {dimension_numbers = #tpu.dot_dimension_numbers<[2], [2], [1], [1], [0, 0, 0, 1, 1, 1], [0], [0]>} : vector<2x8x16xbf16>, vector<2x8x16xbf16>, vector<2x8x8xf32> -> vector<2x8x8xf32>
    "tpu.trace_stop"() : () -> ()
    %115 = arith.addf %114, %21 : vector<2x8x8xf32>
    %cst_67 = arith.constant dense<0xFF800000> : vector<2x8xf32>
    %116 = vector.multi_reduction <maximumf>, %115, %cst_67 [2] : vector<2x8x8xf32> to vector<2x8xf32>
    %117 = vector.shape_cast %116 : vector<2x8xf32> to vector<2x8x1xf32>
    %118 = vector.broadcast %117 : vector<2x8x1xf32> to vector<2x8x8xf32>
    %119 = arith.subf %115, %118 : vector<2x8x8xf32>
    %120 = math.exp %119 : vector<2x8x8xf32>
    %cst_68 = arith.constant dense<0.000000e+00> : vector<2x8xf32>
    %121 = vector.multi_reduction <add>, %120, %cst_68 [2] : vector<2x8x8xf32> to vector<2x8xf32>
    %122 = vector.shape_cast %121 : vector<2x8xf32> to vector<2x8x1xf32>
    %123 = vector.broadcast %122 : vector<2x8x1xf32> to vector<2x8x8xf32>
    %124 = arith.divf %120, %123 : vector<2x8x8xf32>
    %c0_69 = arith.constant 0 : index
    %c0_70 = arith.constant 0 : index
    %c40 = arith.constant 40 : index
    %125 = vector.load %arg13[%c0_69, %c0_70, %c40] : memref<2x8x64xf32, #tpu.memory_space<vmem>>, vector<2x8x8xf32>
    tpu.vector_store %arg13[%c0_69, %c0_70, %c40], %124 {strides = array<i32>} : memref<2x8x64xf32, #tpu.memory_space<vmem>>, vector<2x8x8xf32>,
    %126 = arith.truncf %124 : vector<2x8x8xf32> to vector<2x8x8xbf16>
    %127 = vector.extract_strided_slice %19 {offsets = [0, 0, 80], sizes = [2, 8, 16], strides = [1, 1, 1]} : vector<2x8x128xbf16> to vector<2x8x16xbf16>
    "tpu.trace_start"() <{level = 10 : i32, message = "bqk,bkd->bqd"}> : () -> ()
    %cst_71 = arith.constant dense<0.000000e+00> : vector<2x8x16xf32>
    %128 = tpu.matmul %126, %127, %cst_71 {dimension_numbers = #tpu.dot_dimension_numbers<[2], [1], [1], [2], [0, 0, 0, 1, 1, 2], [0], [0]>} : vector<2x8x8xbf16>, vector<2x8x16xbf16>, vector<2x8x16xf32> -> vector<2x8x16xf32>
    "tpu.trace_stop"() : () -> ()
    %c0_72 = arith.constant 0 : index
    %c0_73 = arith.constant 0 : index
    %c80 = arith.constant 80 : index
    %129 = vector.load %arg14[%c0_72, %c0_73, %c80] : memref<2x8x128xf32, #tpu.memory_space<vmem>>, vector<2x8x16xf32>
    tpu.vector_store %arg14[%c0_72, %c0_73, %c80], %128 {strides = array<i32>} : memref<2x8x128xf32, #tpu.memory_space<vmem>>, vector<2x8x16xf32>,
    %130 = vector.extract_strided_slice %15 {offsets = [0, 0, 96], sizes = [2, 8, 16], strides = [1, 1, 1]} : vector<2x8x128xbf16> to vector<2x8x16xbf16>
    %131 = vector.extract_strided_slice %17 {offsets = [0, 0, 96], sizes = [2, 8, 16], strides = [1, 1, 1]} : vector<2x8x128xbf16> to vector<2x8x16xbf16>
    "tpu.trace_start"() <{level = 10 : i32, message = "bqd,bkd->bqk"}> : () -> ()
    %cst_74 = arith.constant dense<0.000000e+00> : vector<2x8x8xf32>
    %132 = tpu.matmul %130, %131, %cst_74 {dimension_numbers = #tpu.dot_dimension_numbers<[2], [2], [1], [1], [0, 0, 0, 1, 1, 1], [0], [0]>} : vector<2x8x16xbf16>, vector<2x8x16xbf16>, vector<2x8x8xf32> -> vector<2x8x8xf32>
    "tpu.trace_stop"() : () -> ()
    %133 = arith.addf %132, %21 : vector<2x8x8xf32>
    %cst_75 = arith.constant dense<0xFF800000> : vector<2x8xf32>
    %134 = vector.multi_reduction <maximumf>, %133, %cst_75 [2] : vector<2x8x8xf32> to vector<2x8xf32>
    %135 = vector.shape_cast %134 : vector<2x8xf32> to vector<2x8x1xf32>
    %136 = vector.broadcast %135 : vector<2x8x1xf32> to vector<2x8x8xf32>
    %137 = arith.subf %133, %136 : vector<2x8x8xf32>
    %138 = math.exp %137 : vector<2x8x8xf32>
    %cst_76 = arith.constant dense<0.000000e+00> : vector<2x8xf32>
    %139 = vector.multi_reduction <add>, %138, %cst_76 [2] : vector<2x8x8xf32> to vector<2x8xf32>
    %140 = vector.shape_cast %139 : vector<2x8xf32> to vector<2x8x1xf32>
    %141 = vector.broadcast %140 : vector<2x8x1xf32> to vector<2x8x8xf32>
    %142 = arith.divf %138, %141 : vector<2x8x8xf32>
    %c0_77 = arith.constant 0 : index
    %c0_78 = arith.constant 0 : index
    %c48_79 = arith.constant 48 : index
    %143 = vector.load %arg13[%c0_77, %c0_78, %c48_79] : memref<2x8x64xf32, #tpu.memory_space<vmem>>, vector<2x8x8xf32>
    tpu.vector_store %arg13[%c0_77, %c0_78, %c48_79], %142 {strides = array<i32>} : memref<2x8x64xf32, #tpu.memory_space<vmem>>, vector<2x8x8xf32>,
    %144 = arith.truncf %142 : vector<2x8x8xf32> to vector<2x8x8xbf16>
    %145 = vector.extract_strided_slice %19 {offsets = [0, 0, 96], sizes = [2, 8, 16], strides = [1, 1, 1]} : vector<2x8x128xbf16> to vector<2x8x16xbf16>
    "tpu.trace_start"() <{level = 10 : i32, message = "bqk,bkd->bqd"}> : () -> ()
    %cst_80 = arith.constant dense<0.000000e+00> : vector<2x8x16xf32>
    %146 = tpu.matmul %144, %145, %cst_80 {dimension_numbers = #tpu.dot_dimension_numbers<[2], [1], [1], [2], [0, 0, 0, 1, 1, 2], [0], [0]>} : vector<2x8x8xbf16>, vector<2x8x16xbf16>, vector<2x8x16xf32> -> vector<2x8x16xf32>
    "tpu.trace_stop"() : () -> ()
    %c0_81 = arith.constant 0 : index
    %c0_82 = arith.constant 0 : index
    %c96 = arith.constant 96 : index
    %147 = vector.load %arg14[%c0_81, %c0_82, %c96] : memref<2x8x128xf32, #tpu.memory_space<vmem>>, vector<2x8x16xf32>
    tpu.vector_store %arg14[%c0_81, %c0_82, %c96], %146 {strides = array<i32>} : memref<2x8x128xf32, #tpu.memory_space<vmem>>, vector<2x8x16xf32>,
    %148 = vector.extract_strided_slice %15 {offsets = [0, 0, 112], sizes = [2, 8, 16], strides = [1, 1, 1]} : vector<2x8x128xbf16> to vector<2x8x16xbf16>
    %149 = vector.extract_strided_slice %17 {offsets = [0, 0, 112], sizes = [2, 8, 16], strides = [1, 1, 1]} : vector<2x8x128xbf16> to vector<2x8x16xbf16>
    "tpu.trace_start"() <{level = 10 : i32, message = "bqd,bkd->bqk"}> : () -> ()
    %cst_83 = arith.constant dense<0.000000e+00> : vector<2x8x8xf32>
    %150 = tpu.matmul %148, %149, %cst_83 {dimension_numbers = #tpu.dot_dimension_numbers<[2], [2], [1], [1], [0, 0, 0, 1, 1, 1], [0], [0]>} : vector<2x8x16xbf16>, vector<2x8x16xbf16>, vector<2x8x8xf32> -> vector<2x8x8xf32>
    "tpu.trace_stop"() : () -> ()
    %151 = arith.addf %150, %21 : vector<2x8x8xf32>
    %cst_84 = arith.constant dense<0xFF800000> : vector<2x8xf32>
    %152 = vector.multi_reduction <maximumf>, %151, %cst_84 [2] : vector<2x8x8xf32> to vector<2x8xf32>
    %153 = vector.shape_cast %152 : vector<2x8xf32> to vector<2x8x1xf32>
    %154 = vector.broadcast %153 : vector<2x8x1xf32> to vector<2x8x8xf32>
    %155 = arith.subf %151, %154 : vector<2x8x8xf32>
    %156 = math.exp %155 : vector<2x8x8xf32>
    %cst_85 = arith.constant dense<0.000000e+00> : vector<2x8xf32>
    %157 = vector.multi_reduction <add>, %156, %cst_85 [2] : vector<2x8x8xf32> to vector<2x8xf32>
    %158 = vector.shape_cast %157 : vector<2x8xf32> to vector<2x8x1xf32>
    %159 = vector.broadcast %158 : vector<2x8x1xf32> to vector<2x8x8xf32>
    %160 = arith.divf %156, %159 : vector<2x8x8xf32>
    %c0_86 = arith.constant 0 : index
    %c0_87 = arith.constant 0 : index
    %c56 = arith.constant 56 : index
    %161 = vector.load %arg13[%c0_86, %c0_87, %c56] : memref<2x8x64xf32, #tpu.memory_space<vmem>>, vector<2x8x8xf32>
    tpu.vector_store %arg13[%c0_86, %c0_87, %c56], %160 {strides = array<i32>} : memref<2x8x64xf32, #tpu.memory_space<vmem>>, vector<2x8x8xf32>,
    %162 = arith.truncf %160 : vector<2x8x8xf32> to vector<2x8x8xbf16>
    %163 = vector.extract_strided_slice %19 {offsets = [0, 0, 112], sizes = [2, 8, 16], strides = [1, 1, 1]} : vector<2x8x128xbf16> to vector<2x8x16xbf16>
    "tpu.trace_start"() <{level = 10 : i32, message = "bqk,bkd->bqd"}> : () -> ()
    %cst_88 = arith.constant dense<0.000000e+00> : vector<2x8x16xf32>
    %164 = tpu.matmul %162, %163, %cst_88 {dimension_numbers = #tpu.dot_dimension_numbers<[2], [1], [1], [2], [0, 0, 0, 1, 1, 2], [0], [0]>} : vector<2x8x8xbf16>, vector<2x8x16xbf16>, vector<2x8x16xf32> -> vector<2x8x16xf32>
    "tpu.trace_stop"() : () -> ()
    %c0_89 = arith.constant 0 : index
    %c0_90 = arith.constant 0 : index
    %c112 = arith.constant 112 : index
    %165 = vector.load %arg14[%c0_89, %c0_90, %c112] : memref<2x8x128xf32, #tpu.memory_space<vmem>>, vector<2x8x16xf32>
    tpu.vector_store %arg14[%c0_89, %c0_90, %c112], %164 {strides = array<i32>} : memref<2x8x128xf32, #tpu.memory_space<vmem>>, vector<2x8x16xf32>,
    %c0_91 = arith.constant 0 : index
    %c0_92 = arith.constant 0 : index
    %c0_93 = arith.constant 0 : index
    %166 = vector.load %arg14[%c0_91, %c0_92, %c0_93] : memref<2x8x128xf32, #tpu.memory_space<vmem>>, vector<2x8x128xf32>
    %167 = arith.truncf %166 : vector<2x8x128xf32> to vector<2x8x128xbf16>
    %168 = vector.shape_cast %167 : vector<2x8x128xbf16> to vector<16x128xbf16>
    %c0_94 = arith.constant 0 : index
    %c0_95 = arith.constant 0 : index
    %169 = vector.load %arg9[%c0_94, %c0_95] : memref<128x128xbf16, #tpu.memory_space<vmem>>, vector<128x128xbf16>
    %cst_96 = arith.constant dense<0.000000e+00> : vector<16x128xf32>
    %170 = tpu.matmul %168, %169, %cst_96 {dimension_numbers = #tpu.dot_dimension_numbers<[1], [0], [0], [1], [0, 0, 1, 1], [], []>} : vector<16x128xbf16>, vector<128x128xbf16>, vector<16x128xf32> -> vector<16x128xf32>
    %171 = arith.addf %7, %170 : vector<16x128xf32>
    %cst_97 = arith.constant dense<0.000000e+00> : vector<16xf32>
    %172 = vector.multi_reduction <add>, %171, %cst_97 [1] : vector<16x128xf32> to vector<16xf32>
    %173 = vector.shape_cast %172 : vector<16xf32> to vector<16x1xf32>
    %cst_98 = arith.constant 1.280000e+02 : f32
    %174 = vector.broadcast %cst_98 : f32 to vector<16x1xf32>
    %175 = arith.divf %173, %174 : vector<16x1xf32>
    %176 = vector.broadcast %175 : vector<16x1xf32> to vector<16x128xf32>
    %177 = arith.subf %171, %176 : vector<16x128xf32>
    %178 = arith.mulf %177, %177 : vector<16x128xf32>
    %cst_99 = arith.constant dense<0.000000e+00> : vector<16xf32>
    %179 = vector.multi_reduction <add>, %178, %cst_99 [1] : vector<16x128xf32> to vector<16xf32>
    %180 = vector.shape_cast %179 : vector<16xf32> to vector<16x1xf32>
    %cst_100 = arith.constant 1.280000e+02 : f32
    %181 = vector.broadcast %cst_100 : f32 to vector<16x1xf32>
    %182 = arith.divf %180, %181 : vector<16x1xf32>
    %183 = vector.broadcast %175 : vector<16x1xf32> to vector<16x128xf32>
    %184 = arith.subf %171, %183 : vector<16x128xf32>
    %cst_101 = arith.constant 9.99999974E-6 : f32
    %185 = vector.broadcast %cst_101 : f32 to vector<16x1xf32>
    %186 = arith.addf %182, %185 : vector<16x1xf32>
    %187 = math.rsqrt %186 : vector<16x1xf32>
    %188 = vector.broadcast %187 : vector<16x1xf32> to vector<16x128xf32>
    %189 = arith.mulf %184, %188 : vector<16x128xf32>
    %c0_102 = arith.constant 0 : index
    %c0_103 = arith.constant 0 : index
    %190 = vector.load %arg10[%c0_102, %c0_103] : memref<1x128xf32, #tpu.memory_space<vmem>>, vector<1x128xf32>
    %191 = vector.broadcast %190 : vector<1x128xf32> to vector<16x128xf32>
    %192 = arith.mulf %189, %191 : vector<16x128xf32>
    %c0_104 = arith.constant 0 : index
    %c0_105 = arith.constant 0 : index
    %193 = vector.load %arg11[%c0_104, %c0_105] : memref<1x128xf32, #tpu.memory_space<vmem>>, vector<1x128xf32>
    %194 = vector.broadcast %193 : vector<1x128xf32> to vector<16x128xf32>
    %195 = arith.addf %192, %194 : vector<16x128xf32>
    %196 = vector.shape_cast %195 : vector<16x128xf32> to vector<2x8x128xf32>
    %c0_106 = arith.constant 0 : index
    %c0_107 = arith.constant 0 : index
    %c0_108 = arith.constant 0 : index
    %197 = vector.load %arg12[%c0_106, %c0_107, %c0_108] : memref<2x8x128xf32, #tpu.memory_space<vmem>>, vector<2x8x128xf32>
    tpu.vector_store %arg12[%c0_106, %c0_107, %c0_108], %196 {strides = array<i32>} : memref<2x8x128xf32, #tpu.memory_space<vmem>>, vector<2x8x128xf32>,
    return
  }
  func.func @transform_0(%arg0: i32) -> (i32, i32, i32) {
    %c0_i32 = arith.constant 0 : i32
    %c0_i32_0 = arith.constant 0 : i32
    %c0_i32_1 = arith.constant 0 : i32
    return %arg0, %c0_i32, %c0_i32_0 : i32, i32, i32
  }
  func.func @transform_1(%arg0: i32) -> (i32, i32, i32) {
    %c0_i32 = arith.constant 0 : i32
    %c0_i32_0 = arith.constant 0 : i32
    %c0_i32_1 = arith.constant 0 : i32
    return %arg0, %c0_i32, %c0_i32_0 : i32, i32, i32
  }
  func.func @transform_2(%arg0: i32) -> (i32, i32, i32) {
    %c0_i32 = arith.constant 0 : i32
    %c0_i32_0 = arith.constant 0 : i32
    %c0_i32_1 = arith.constant 0 : i32
    return %arg0, %c0_i32, %c0_i32_0 : i32, i32, i32
  }
  func.func @transform_3(%arg0: i32) -> (i32, i32, i32) {
    %c0_i32 = arith.constant 0 : i32
    %c0_i32_0 = arith.constant 0 : i32
    %c0_i32_1 = arith.constant 0 : i32
    return %arg0, %c0_i32, %c0_i32_0 : i32, i32, i32
  }
  func.func @transform_4(%arg0: i32) -> (i32, i32) {
    %c0_i32 = arith.constant 0 : i32
    %c0_i32_0 = arith.constant 0 : i32
    %c0_i32_1 = arith.constant 0 : i32
    return %c0_i32, %c0_i32_0 : i32, i32
  }
  func.func @transform_5(%arg0: i32) -> (i32, i32) {
    %c0_i32 = arith.constant 0 : i32
    %c0_i32_0 = arith.constant 0 : i32
    %c0_i32_1 = arith.constant 0 : i32
    return %c0_i32, %c0_i32_0 : i32, i32
  }
  func.func @transform_6(%arg0: i32) -> (i32, i32) {
    %c0_i32 = arith.constant 0 : i32
    %c0_i32_0 = arith.constant 0 : i32
    %c0_i32_1 = arith.constant 0 : i32
    return %c0_i32, %c0_i32_0 : i32, i32
  }
  func.func @transform_7(%arg0: i32) -> (i32, i32) {
    %c0_i32 = arith.constant 0 : i32
    %c0_i32_0 = arith.constant 0 : i32
    %c0_i32_1 = arith.constant 0 : i32
    return %c0_i32, %c0_i32_0 : i32, i32
  }
  func.func @transform_8(%arg0: i32) -> (i32, i32) {
    %c0_i32 = arith.constant 0 : i32
    %c0_i32_0 = arith.constant 0 : i32
    %c0_i32_1 = arith.constant 0 : i32
    return %c0_i32, %c0_i32_0 : i32, i32
  }
  func.func @transform_9(%arg0: i32) -> (i32, i32) {
    %c0_i32 = arith.constant 0 : i32
    %c0_i32_0 = arith.constant 0 : i32
    %c0_i32_1 = arith.constant 0 : i32
    return %c0_i32, %c0_i32_0 : i32, i32
  }
  func.func @transform_10(%arg0: i32) -> (i32, i32) {
    %c0_i32 = arith.constant 0 : i32
    %c0_i32_0 = arith.constant 0 : i32
    %c0_i32_1 = arith.constant 0 : i32
    return %c0_i32, %c0_i32_0 : i32, i32
  }
  func.func @transform_11(%arg0: i32) -> (i32, i32, i32) {
    %c0_i32 = arith.constant 0 : i32
    %c0_i32_0 = arith.constant 0 : i32
    %c0_i32_1 = arith.constant 0 : i32
    return %arg0, %c0_i32, %c0_i32_0 : i32, i32, i32
  }
  func.func @transform_12(%arg0: i32) -> (i32, i32, i32) {
    %c0_i32 = arith.constant 0 : i32
    %c0_i32_0 = arith.constant 0 : i32
    %c0_i32_1 = arith.constant 0 : i32
    return %arg0, %c0_i32, %c0_i32_0 : i32, i32, i32
  }
}

</mosaic_0001>

<llo_original>
// kernel: tpu_custom_call.1
$region0: #{tpu_custom_call.1}
  #allocation0 [shape = 'u32[]', space=smem, size = 0x4, offset = 0x4, fixed_abs, tag = 'smem constant byte address 0x4 - core index']
  #allocation1 [shape = 'u32[144,128]{1,0:T(1,128)}', space=vmem, size = 0x12000, scoped, tag = 'internal scratch']
  #allocation2 [shape = 'f32[2,8,128]{2,1,0:T(8,128)}', space=vmem, size = 0x2000, scoped, tag = 'scratch operand']
  %s0 = inlined_call_operand.hbm [shape: bf16[4,8,128], index: 0, kind: input, shape index: {}]
  %s1 = inlined_call_operand.hbm [shape: bf16[4,8,128], index: 1, kind: input, shape index: {}]
  %s2 = inlined_call_operand.hbm [shape: bf16[4,8,128], index: 2, kind: input, shape index: {}]
  %s3 = inlined_call_operand.hbm [shape: bf16[4,8,8], index: 3, kind: input, shape index: {}]
  %s4 = inlined_call_operand.hbm [shape: bf16[128,128], index: 4, kind: input, shape index: {}]
  %s5 = inlined_call_operand.hbm [shape: bf16[128,128], index: 5, kind: input, shape index: {}]
  %s6 = inlined_call_operand.hbm [shape: bf16[128,128], index: 6, kind: input, shape index: {}]
  %s7 = inlined_call_operand.hbm [shape: bf16[128,128], index: 7, kind: input, shape index: {}]
  %s8 = inlined_call_operand.hbm [shape: bf16[128,128], index: 8, kind: input, shape index: {}]
  %s9 = inlined_call_operand.vmem [shape: f32[1,128], index: 9, kind: input, shape index: {}]
  %s10 = inlined_call_operand.vmem [shape: f32[1,128], index: 10, kind: input, shape index: {}]
  %s11 = inlined_call_operand.hbm [shape: f32[4,8,128], index: 11, kind: output, shape index: {0}]
  %s12 = inlined_call_operand.hbm [shape: f32[4,8,64], index: 12, kind: output, shape index: {1}]
  %13 = xla_tuple %s11, %s12
  %s14 = sld [smem:[#allocation0]]
  $region121: #{tpu_custom_call.1} parent=0
    _
  %s16 = ssub.s32 1, %s14
  %s17 = scalar_select 0, %s16, %s14
  $region1: #{tpu_custom_call.1} parent=0
    #allocation3 [shape = 'u8[8192]{0}', space=vmem, size = 0x2000, scoped, tag = 'input window, operand 0']
    #allocation4 [shape = 's32[2]{0}', space=sflag, size = 0x8, scoped, tag = 'scoped memory for tpu_custom_call.1']
    #allocation5 [shape = 's32[2]{0}', space=sflag, size = 0x8, scoped, tag = 'scoped memory for tpu_custom_call.1']
    #allocation6 [shape = 'u8[8192]{0}', space=vmem, size = 0x2000, scoped, tag = 'input window, operand 1']
    #allocation7 [shape = 's32[2]{0}', space=sflag, size = 0x8, scoped, tag = 'scoped memory for tpu_custom_call.1']
    #allocation8 [shape = 'u8[8192]{0}', space=vmem, size = 0x2000, scoped, tag = 'input window, operand 2']
    #allocation9 [shape = 'u8[8192]{0}', space=vmem, size = 0x2000, scoped, tag = 'input window, operand 3']
    #allocation10 [shape = 's32[2]{0}', space=sflag, size = 0x8, scoped, tag = 'scoped memory for tpu_custom_call.1']
    #allocation11 [shape = 'u8[32768]{0}', space=vmem, size = 0x8000, scoped, tag = 'input window, operand 4, single buffered']
    #allocation12 [shape = 'u8[32768]{0}', space=vmem, size = 0x8000, scoped, tag = 'input window, operand 5, single buffered']
    #allocation13 [shape = 's32[1]{0}', space=sflag, size = 0x4, scoped, tag = 'scoped memory for tpu_custom_call.1']
    #allocation14 [shape = 'u8[32768]{0}', space=vmem, size = 0x8000, scoped, tag = 'input window, operand 6, single buffered']
    #allocation15 [shape = 'u8[32768]{0}', space=vmem, size = 0x8000, scoped, tag = 'input window, operand 7, single buffered']
    #allocation16 [shape = 's32[1]{0}', space=sflag, size = 0x4, scoped, tag = 'scoped memory for tpu_custom_call.1']
    #allocation17 [shape = 'u8[32768]{0}', space=vmem, size = 0x8000, scoped, tag = 'input window, operand 8, single buffered']
    #allocation18 [shape = 'u8[16384]{0}', space=vmem, size = 0x4000, scoped, tag = 'output window, operand 0']
    #allocation19 [shape = 'u8[16384]{0}', space=vmem, size = 0x4000, scoped, tag = 'output window, operand 1']
    #allocation20 [shape = 's32[2]{0}', space=sflag, size = 0x8, scoped, tag = 'scoped memory for tpu_custom_call.1']
    %18 = vsyncpa [#allocation4], 0
    %s19 = scalar_lea.sflag [#allocation4], 1
    %20 = vsyncpa %s19, 0
    %21 = vsyncpa [#allocation7], 0
    %s22 = scalar_lea.sflag [#allocation7], 1
    %23 = vsyncpa %s22, 0
    %24 = vsyncpa [#allocation10], 0
    %s25 = scalar_lea.sflag [#allocation10], 1
    %26 = vsyncpa %s25, 0
    %27 = vsyncpa [#allocation13], 0
    %28 = vsyncpa [#allocation16], 0
    %29 = vsyncpa [#allocation5], 0
    %s30 = scalar_lea.sflag [#allocation5], 1
    %31 = vsyncpa %s30, 0
    %32 = vsyncpa [#allocation20], 0
    %s33 = scalar_lea.sflag [#allocation20], 1
    %34 = vsyncpa %s33, 0
    loop: start=0, step=1, limit=4
    $region2: #{tpu_custom_call.1} parent=1 // loop_pre_header
      _
    $region3: #{tpu_custom_call.1} parent=1 // loop_header
      %s36 = sphi 0, %s40
      %p37 = scmp.ge.s32.totalorder %s36, 4
      %s46 = sphi 0, %s48
      %s49 = sphi 0, %s46
      %s50 = sphi 0, %s49
      %s66 = sphi 0, %s50
      %s72 = sphi 0, %s74
      %s75 = sphi 0, %s72
      %s76 = sphi 0, %s75
      %s92 = sphi 0, %s76
      %s98 = sphi 0, %s100
      %s101 = sphi 0, %s98
      %s102 = sphi 0, %s101
      %s118 = sphi 0, %s102
      %s124 = sphi 0, %s126
      %s127 = sphi 0, %s124
      %s128 = sphi 0, %s127
      %s144 = sphi 0, %s128
      %s148 = sphi 0, %s148
      %s150 = sphi 0, %s148
      %s151 = sphi 0, %s150
      %s165 = sphi 0, %s151
      %s169 = sphi 0, %s169
      %s171 = sphi 0, %s169
      %s172 = sphi 0, %s171
      %s186 = sphi 0, %s172
      %s190 = sphi 0, %s190
      %s192 = sphi 0, %s190
      %s193 = sphi 0, %s192
      %s207 = sphi 0, %s193
      %s211 = sphi 0, %s211
      %s213 = sphi 0, %s211
      %s214 = sphi 0, %s213
      %s228 = sphi 0, %s214
      %s232 = sphi 0, %s232
      %s234 = sphi 0, %s232
      %s235 = sphi 0, %s234
      %s249 = sphi 0, %s235
      %s253 = sphi 0, %s253
      %s255 = sphi 0, %s253
      %s256 = sphi 0, %s255
      %s270 = sphi 0, %s256
      %s274 = sphi 0, %s274
      %s276 = sphi 0, %s274
      %s277 = sphi 0, %s276
      %s291 = sphi 0, %s277
      %s297 = sphi 0, %s299
      %s300 = sphi 0, %s297
      %s301 = sphi 0, %s300
      %s317 = sphi 0, %s301
      %s323 = sphi 0, %s325
      %s326 = sphi 0, %s323
      %s327 = sphi 0, %s326
      %s343 = sphi 0, %s327
    $region4: #{tpu_custom_call.1} parent=1 // loop_header_branch
      %39 = sbr.rel (%p37) target = $region8
    $region5: #{tpu_custom_call.1} parent=1 // loop_body
      %s41 = ssub.s32 %s36, 1
      %s42 = ssub.s32 %s36, 2
      %s43 = sadd.s32 %s36, 1
      %s44 = ssub.s32 %s36, %s43
      %p45 = scmp.eq.s32.totalorder %s44, 0
      %s47 = sadd.s32 %s46, 1
      %s48 = scalar_select %p45, %s46, %s47
      %p51 = pneg %p45
      %p52 = scmp.eq.s32.totalorder %s36, 1
      %p53 = por %p51, %p52
      %p54 = scmp.ne.s32.totalorder %s46, %s49
      %p55 = scmp.eq.s32.totalorder %s36, 0
      %p56 = por %p54, %p55
      %p57 = scmp.ne.s32.totalorder %s46, %s49
      %p58 = scmp.eq.s32.totalorder %s41, 1
      %p59 = por %p57, %p58
      %p60 = scmp.ne.s32.totalorder %s49, %s50
      %p61 = scmp.eq.s32.totalorder %s41, 0
      %p62 = por %p60, %p61
      %p63 = scmp.ne.s32.totalorder %s49, %s50
      %p64 = scmp.eq.s32.totalorder %s42, 1
      %p65 = por %p63, %p64
      %p67 = scmp.ne.s32.totalorder %s50, %s66
      %p68 = scmp.eq.s32.totalorder %s42, 0
      %p69 = por %p67, %p68
      %s70 = ssub.s32 %s36, %s43
      %p71 = scmp.eq.s32.totalorder %s70, 0
      %s73 = sadd.s32 %s72, 1
      %s74 = scalar_select %p71, %s72, %s73
      %p77 = pneg %p71
      %p78 = scmp.eq.s32.totalorder %s36, 1
      %p79 = por %p77, %p78
      %p80 = scmp.ne.s32.totalorder %s72, %s75
      %p81 = scmp.eq.s32.totalorder %s36, 0
      %p82 = por %p80, %p81
      %p83 = scmp.ne.s32.totalorder %s72, %s75
      %p84 = scmp.eq.s32.totalorder %s41, 1
      %p85 = por %p83, %p84
      %p86 = scmp.ne.s32.totalorder %s75, %s76
      %p87 = scmp.eq.s32.totalorder %s41, 0
      %p88 = por %p86, %p87
      %p89 = scmp.ne.s32.totalorder %s75, %s76
      %p90 = scmp.eq.s32.totalorder %s42, 1
      %p91 = por %p89, %p90
      %p93 = scmp.ne.s32.totalorder %s76, %s92
      %p94 = scmp.eq.s32.totalorder %s42, 0
      %p95 = por %p93, %p94
      %s96 = ssub.s32 %s36, %s43
      %p97 = scmp.eq.s32.totalorder %s96, 0
      %s99 = sadd.s32 %s98, 1
      %s100 = scalar_select %p97, %s98, %s99
      %p103 = pneg %p97
      %p104 = scmp.eq.s32.totalorder %s36, 1
      %p105 = por %p103, %p104
      %p106 = scmp.ne.s32.totalorder %s98, %s101
      %p107 = scmp.eq.s32.totalorder %s36, 0
      %p108 = por %p106, %p107
      %p109 = scmp.ne.s32.totalorder %s98, %s101
      %p110 = scmp.eq.s32.totalorder %s41, 1
      %p111 = por %p109, %p110
      %p112 = scmp.ne.s32.totalorder %s101, %s102
      %p113 = scmp.eq.s32.totalorder %s41, 0
      %p114 = por %p112, %p113
      %p115 = scmp.ne.s32.totalorder %s101, %s102
      %p116 = scmp.eq.s32.totalorder %s42, 1
      %p117 = por %p115, %p116
      %p119 = scmp.ne.s32.totalorder %s102, %s118
      %p120 = scmp.eq.s32.totalorder %s42, 0
      %p121 = por %p119, %p120
      %s122 = ssub.s32 %s36, %s43
      %p123 = scmp.eq.s32.totalorder %s122, 0
      %s125 = sadd.s32 %s124, 1
      %s126 = scalar_select %p123, %s124, %s125
      %p129 = pneg %p123
      %p130 = scmp.eq.s32.totalorder %s36, 1
      %p131 = por %p129, %p130
      %p132 = scmp.ne.s32.totalorder %s124, %s127
      %p133 = scmp.eq.s32.totalorder %s36, 0
      %p134 = por %p132, %p133
      %p135 = scmp.ne.s32.totalorder %s124, %s127
      %p136 = scmp.eq.s32.totalorder %s41, 1
      %p137 = por %p135, %p136
      %p138 = scmp.ne.s32.totalorder %s127, %s128
      %p139 = scmp.eq.s32.totalorder %s41, 0
      %p140 = por %p138, %p139
      %p141 = scmp.ne.s32.totalorder %s127, %s128
      %p142 = scmp.eq.s32.totalorder %s42, 1
      %p143 = por %p141, %p142
      %p145 = scmp.ne.s32.totalorder %s128, %s144
      %p146 = scmp.eq.s32.totalorder %s42, 0
      %p147 = por %p145, %p146
      %s149 = sadd.s32 %s148, 1
      %p152 = scmp.eq.s32.totalorder %s36, 1
      %p153 = scmp.ne.s32.totalorder %s148, %s150
      %p154 = scmp.eq.s32.totalorder %s36, 0
      %p155 = por %p153, %p154
      %p156 = scmp.ne.s32.totalorder %s148, %s150
      %p157 = scmp.eq.s32.totalorder %s41, 1
      %p158 = por %p156, %p157
      %p159 = scmp.ne.s32.totalorder %s150, %s151
      %p160 = scmp.eq.s32.totalorder %s41, 0
      %p161 = por %p159, %p160
      %p162 = scmp.ne.s32.totalorder %s150, %s151
      %p163 = scmp.eq.s32.totalorder %s42, 1
      %p164 = por %p162, %p163
      %p166 = scmp.ne.s32.totalorder %s151, %s165
      %p167 = scmp.eq.s32.totalorder %s42, 0
      %p168 = por %p166, %p167
      %s170 = sadd.s32 %s169, 1
      %p173 = scmp.eq.s32.totalorder %s36, 1
      %p174 = scmp.ne.s32.totalorder %s169, %s171
      %p175 = scmp.eq.s32.totalorder %s36, 0
      %p176 = por %p174, %p175
      %p177 = scmp.ne.s32.totalorder %s169, %s171
      %p178 = scmp.eq.s32.totalorder %s41, 1
      %p179 = por %p177, %p178
      %p180 = scmp.ne.s32.totalorder %s171, %s172
      %p181 = scmp.eq.s32.totalorder %s41, 0
      %p182 = por %p180, %p181
      %p183 = scmp.ne.s32.totalorder %s171, %s172
      %p184 = scmp.eq.s32.totalorder %s42, 1
      %p185 = por %p183, %p184
      %p187 = scmp.ne.s32.totalorder %s172, %s186
      %p188 = scmp.eq.s32.totalorder %s42, 0
      %p189 = por %p187, %p188
      %s191 = sadd.s32 %s190, 1
      %p194 = scmp.eq.s32.totalorder %s36, 1
      %p195 = scmp.ne.s32.totalorder %s190, %s192
      %p196 = scmp.eq.s32.totalorder %s36, 0
      %p197 = por %p195, %p196
      %p198 = scmp.ne.s32.totalorder %s190, %s192
      %p199 = scmp.eq.s32.totalorder %s41, 1
      %p200 = por %p198, %p199
      %p201 = scmp.ne.s32.totalorder %s192, %s193
      %p202 = scmp.eq.s32.totalorder %s41, 0
      %p203 = por %p201, %p202
      %p204 = scmp.ne.s32.totalorder %s192, %s193
      %p205 = scmp.eq.s32.totalorder %s42, 1
      %p206 = por %p204, %p205
      %p208 = scmp.ne.s32.totalorder %s193, %s207
      %p209 = scmp.eq.s32.totalorder %s42, 0
      %p210 = por %p208, %p209
      %s212 = sadd.s32 %s211, 1
      %p215 = scmp.eq.s32.totalorder %s36, 1
      %p216 = scmp.ne.s32.totalorder %s211, %s213
      %p217 = scmp.eq.s32.totalorder %s36, 0
      %p218 = por %p216, %p217
      %p219 = scmp.ne.s32.totalorder %s211, %s213
      %p220 = scmp.eq.s32.totalorder %s41, 1
      %p221 = por %p219, %p220
      %p222 = scmp.ne.s32.totalorder %s213, %s214
      %p223 = scmp.eq.s32.totalorder %s41, 0
      %p224 = por %p222, %p223
      %p225 = scmp.ne.s32.totalorder %s213, %s214
      %p226 = scmp.eq.s32.totalorder %s42, 1
      %p227 = por %p225, %p226
      %p229 = scmp.ne.s32.totalorder %s214, %s228
      %p230 = scmp.eq.s32.totalorder %s42, 0
      %p231 = por %p229, %p230
      %s233 = sadd.s32 %s232, 1
      %p236 = scmp.eq.s32.totalorder %s36, 1
      %p237 = scmp.ne.s32.totalorder %s232, %s234
      %p238 = scmp.eq.s32.totalorder %s36, 0
      %p239 = por %p237, %p238
      %p240 = scmp.ne.s32.totalorder %s232, %s234
      %p241 = scmp.eq.s32.totalorder %s41, 1
      %p242 = por %p240, %p241
      %p243 = scmp.ne.s32.totalorder %s234, %s235
      %p244 = scmp.eq.s32.totalorder %s41, 0
      %p245 = por %p243, %p244
      %p246 = scmp.ne.s32.totalorder %s234, %s235
      %p247 = scmp.eq.s32.totalorder %s42, 1
      %p248 = por %p246, %p247
      %p250 = scmp.ne.s32.totalorder %s235, %s249
      %p251 = scmp.eq.s32.totalorder %s42, 0
      %p252 = por %p250, %p251
      %s254 = sadd.s32 %s253, 1
      %p257 = scmp.eq.s32.totalorder %s36, 1
      %p258 = scmp.ne.s32.totalorder %s253, %s255
      %p259 = scmp.eq.s32.totalorder %s36, 0
      %p260 = por %p258, %p259
      %p261 = scmp.ne.s32.totalorder %s253, %s255
      %p262 = scmp.eq.s32.totalorder %s41, 1
      %p263 = por %p261, %p262
      %p264 = scmp.ne.s32.totalorder %s255, %s256
      %p265 = scmp.eq.s32.totalorder %s41, 0
      %p266 = por %p264, %p265
      %p267 = scmp.ne.s32.totalorder %s255, %s256
      %p268 = scmp.eq.s32.totalorder %s42, 1
      %p269 = por %p267, %p268
      %p271 = scmp.ne.s32.totalorder %s256, %s270
      %p272 = scmp.eq.s32.totalorder %s42, 0
      %p273 = por %p271, %p272
      %s275 = sadd.s32 %s274, 1
      %p278 = scmp.eq.s32.totalorder %s36, 1
      %p279 = scmp.ne.s32.totalorder %s274, %s276
      %p280 = scmp.eq.s32.totalorder %s36, 0
      %p281 = por %p279, %p280
      %p282 = scmp.ne.s32.totalorder %s274, %s276
      %p283 = scmp.eq.s32.totalorder %s41, 1
      %p284 = por %p282, %p283
      %p285 = scmp.ne.s32.totalorder %s276, %s277
      %p286 = scmp.eq.s32.totalorder %s41, 0
      %p287 = por %p285, %p286
      %p288 = scmp.ne.s32.totalorder %s276, %s277
      %p289 = scmp.eq.s32.totalorder %s42, 1
      %p290 = por %p288, %p289
      %p292 = scmp.ne.s32.totalorder %s277, %s291
      %p293 = scmp.eq.s32.totalorder %s42, 0
      %p294 = por %p292, %p293
      %s295 = ssub.s32 %s36, %s43
      %p296 = scmp.eq.s32.totalorder %s295, 0
      %s298 = sadd.s32 %s297, 1
      %s299 = scalar_select %p296, %s297, %s298
      %p302 = pneg %p296
      %p303 = scmp.eq.s32.totalorder %s36, 1
      %p304 = por %p302, %p303
      %p305 = scmp.ne.s32.totalorder %s297, %s300
      %p306 = scmp.eq.s32.totalorder %s36, 0
      %p307 = por %p305, %p306
      %p308 = scmp.ne.s32.totalorder %s297, %s300
      %p309 = scmp.eq.s32.totalorder %s41, 1
      %p310 = por %p308, %p309
      %p311 = scmp.ne.s32.totalorder %s300, %s301
      %p312 = scmp.eq.s32.totalorder %s41, 0
      %p313 = por %p311, %p312
      %p314 = scmp.ne.s32.totalorder %s300, %s301
      %p315 = scmp.eq.s32.totalorder %s42, 1
      %p316 = por %p314, %p315
      %p318 = scmp.ne.s32.totalorder %s301, %s317
      %p319 = scmp.eq.s32.totalorder %s42, 0
      %p320 = por %p318, %p319
      %s321 = ssub.s32 %s36, %s43
      %p322 = scmp.eq.s32.totalorder %s321, 0
      %s324 = sadd.s32 %s323, 1
      %s325 = scalar_select %p322, %s323, %s324
      %p328 = pneg %p322
      %p329 = scmp.eq.s32.totalorder %s36, 1
      %p330 = por %p328, %p329
      %p331 = scmp.ne.s32.totalorder %s323, %s326
      %p332 = scmp.eq.s32.totalorder %s36, 0
      %p333 = por %p331, %p332
      %p334 = scmp.ne.s32.totalorder %s323, %s326
      %p335 = scmp.eq.s32.totalorder %s41, 1
      %p336 = por %p334, %p335
      %p337 = scmp.ne.s32.totalorder %s326, %s327
      %p338 = scmp.eq.s32.totalorder %s41, 0
      %p339 = por %p337, %p338
      %p340 = scmp.ne.s32.totalorder %s326, %s327
      %p341 = scmp.eq.s32.totalorder %s42, 1
      %p342 = por %p340, %p341
      %p344 = scmp.ne.s32.totalorder %s327, %s343
      %p345 = scmp.eq.s32.totalorder %s42, 0
      %p346 = por %p344, %p345
      %p347 = scmp.le.s32.totalorder 1, %s36
      %p348 = scmp.lt.s32.totalorder %s36, 3
      %p349 = pnand %p347, %p348
      %p350 = pneg %p349
      // Predicated region
      $region9: #{tpu_custom_call.1} parent=5 // pred_check
        _
      $region10: #{tpu_custom_call.1} parent=5 // pred_check_branch
        %352 = sbr.rel (%p349) target = $region12
      $region11: #{tpu_custom_call.1} parent=5 // pred_region
        %s353 = ssub.s32 %s36, 1
        // Predicated region
        $region13: #{tpu_custom_call.1} parent=11 // pred_check
          %p354 = pneg %p161
        $region14: #{tpu_custom_call.1} parent=11 // pred_check_branch
          %356 = sbr.rel (%p354) target = $region16
        $region15: #{tpu_custom_call.1} parent=11 // pred_region
          %s358 = ssub.s32 1024, 1024
          %359 = vsyncadd [#allocation10], %s358
          %s360 = sshll.u32 [#allocation11], 4
          %s361 = int_to_ptr.vmem [resolvable:$true] %s360
          %366 = dma.hbm_to_vmem [thread:$0]  %s4, 1024, %s361, [#allocation10], 64, 64, 4
        $region16: #{tpu_custom_call.1} parent=11 // pred_fallthru
          _
        // Predicated region
        $region17: #{tpu_custom_call.1} parent=11 // pred_check
          %p367 = pneg %p182
        $region18: #{tpu_custom_call.1} parent=11 // pred_check_branch
          %369 = sbr.rel (%p367) target = $region20
        $region19: #{tpu_custom_call.1} parent=11 // pred_region
          %s371 = ssub.s32 1024, 1024
          %372 = vsyncadd [#allocation13], %s371
          %s373 = sshll.u32 [#allocation12], 4
          %s374 = int_to_ptr.vmem [resolvable:$true] %s373
          %379 = dma.hbm_to_vmem [thread:$0]  %s5, 1024, %s374, [#allocation13], 64, 64, 4
        $region20: #{tpu_custom_call.1} parent=11 // pred_fallthru
          _
        // Predicated region
        $region21: #{tpu_custom_call.1} parent=11 // pred_check
          %p380 = pneg %p203
        $region22: #{tpu_custom_call.1} parent=11 // pred_check_branch
          %382 = sbr.rel (%p380) target = $region24
        $region23: #{tpu_custom_call.1} parent=11 // pred_region
          %s384 = ssub.s32 1024, 1024
          %385 = vsyncadd [#allocation13], %s384
          %s386 = sshll.u32 [#allocation14], 4
          %s387 = int_to_ptr.vmem [resolvable:$true] %s386
          %392 = dma.hbm_to_vmem [thread:$0]  %s6, 1024, %s387, [#allocation13], 64, 64, 4
        $region24: #{tpu_custom_call.1} parent=11 // pred_fallthru
          _
        // Predicated region
        $region25: #{tpu_custom_call.1} parent=11 // pred_check
          %p393 = pneg %p224
        $region26: #{tpu_custom_call.1} parent=11 // pred_check_branch
          %395 = sbr.rel (%p393) target = $region28
        $region27: #{tpu_custom_call.1} parent=11 // pred_region
          %s397 = ssub.s32 1024, 1024
          %398 = vsyncadd [#allocation16], %s397
          %s399 = sshll.u32 [#allocation15], 4
          %s400 = int_to_ptr.vmem [resolvable:$true] %s399
          %405 = dma.hbm_to_vmem [thread:$0]  %s7, 1024, %s400, [#allocation16], 64, 64, 4
        $region28: #{tpu_custom_call.1} parent=11 // pred_fallthru
          _
        // Predicated region
        $region29: #{tpu_custom_call.1} parent=11 // pred_check
          %p406 = pneg %p245
        $region30: #{tpu_custom_call.1} parent=11 // pred_check_branch
          %408 = sbr.rel (%p406) target = $region32
        $region31: #{tpu_custom_call.1} parent=11 // pred_region
          %s410 = ssub.s32 1024, 1024
          %411 = vsyncadd [#allocation16], %s410
          %s412 = sshll.u32 [#allocation17], 4
          %s413 = int_to_ptr.vmem [resolvable:$true] %s412
          %418 = dma.hbm_to_vmem [thread:$0]  %s8, 1024, %s413, [#allocation16], 64, 64, 4
        $region32: #{tpu_custom_call.1} parent=11 // pred_fallthru
          _
        // Predicated region
        $region33: #{tpu_custom_call.1} parent=11 // pred_check
          %p419 = pneg %p266
        $region34: #{tpu_custom_call.1} parent=11 // pred_check_branch
          %421 = sbr.rel (%p419) target = $region36
        $region35: #{tpu_custom_call.1} parent=11 // pred_region
          _
        $region36: #{tpu_custom_call.1} parent=11 // pred_fallthru
          _
        // Predicated region
        $region37: #{tpu_custom_call.1} parent=11 // pred_check
          %p422 = pneg %p287
        $region38: #{tpu_custom_call.1} parent=11 // pred_check_branch
          %424 = sbr.rel (%p422) target = $region40
        $region39: #{tpu_custom_call.1} parent=11 // pred_region
          _
        $region40: #{tpu_custom_call.1} parent=11 // pred_fallthru
          _
      $region12: #{tpu_custom_call.1} parent=5 // pred_fallthru
        _
      %p425 = scmp.lt.s32.totalorder %s36, 2
      // Predicated region
      $region41: #{tpu_custom_call.1} parent=5 // pred_check
        %p426 = pneg %p425
      $region42: #{tpu_custom_call.1} parent=5 // pred_check_branch
        %428 = sbr.rel (%p426) target = $region44
      $region43: #{tpu_custom_call.1} parent=5 // pred_region
        // Predicated region
        $region45: #{tpu_custom_call.1} parent=43 // pred_check
          %p429 = pneg %p56
        $region46: #{tpu_custom_call.1} parent=43 // pred_check_branch
          %431 = sbr.rel (%p429) target = $region48
        $region47: #{tpu_custom_call.1} parent=43 // pred_region
          %s432 = sand.u32 %s46, 1
          %s433 = scalar_lea.sflag [#allocation4], %s432
          %s434 = sand.u32 %s46, 1
          %s435 = smul.addr %s434, 8
          %s436 = scalar_lea.vmem [#allocation3], %s435
          %s437 = smul.u32 2, %s36
          %s439 = ssub.s32 128, 128
          %440 = vsyncadd %s433, %s439
          %s441 = smul.addr %s437, 64
          %s442 = scalar_lea.hbm %s0, %s441
          %s443 = sshll.u32 %s436, 4
          %s444 = int_to_ptr.vmem [resolvable:$true] %s443
          %449 = dma.hbm_to_vmem [thread:$0]  %s442, 128, %s444, %s433, 64, 64, 4
        $region48: #{tpu_custom_call.1} parent=43 // pred_fallthru
          _
        // Predicated region
        $region49: #{tpu_custom_call.1} parent=43 // pred_check
          %p450 = pneg %p82
        $region50: #{tpu_custom_call.1} parent=43 // pred_check_branch
          %452 = sbr.rel (%p450) target = $region52
        $region51: #{tpu_custom_call.1} parent=43 // pred_region
          %s453 = sand.u32 %s36, 1
          %s454 = scalar_lea.sflag [#allocation7], %s453
          %s455 = sand.u32 %s72, 1
          %s456 = smul.addr %s455, 8
          %s457 = scalar_lea.vmem [#allocation6], %s456
          %s458 = smul.u32 2, %s36
          %s460 = ssub.s32 128, 128
          %461 = vsyncadd %s454, %s460
          %s462 = smul.addr %s458, 64
          %s463 = scalar_lea.hbm %s1, %s462
          %s464 = sshll.u32 %s457, 4
          %s465 = int_to_ptr.vmem [resolvable:$true] %s464
          %470 = dma.hbm_to_vmem [thread:$0]  %s463, 128, %s465, %s454, 64, 64, 4
        $region52: #{tpu_custom_call.1} parent=43 // pred_fallthru
          _
        // Predicated region
        $region53: #{tpu_custom_call.1} parent=43 // pred_check
          %p471 = pneg %p108
        $region54: #{tpu_custom_call.1} parent=43 // pred_check_branch
          %473 = sbr.rel (%p471) target = $region56
        $region55: #{tpu_custom_call.1} parent=43 // pred_region
          %s474 = sand.u32 %s36, 1
          %s475 = scalar_lea.sflag [#allocation7], %s474
          %s476 = sand.u32 %s98, 1
          %s477 = smul.addr %s476, 8
          %s478 = scalar_lea.vmem [#allocation8], %s477
          %s479 = smul.u32 2, %s36
          %s481 = ssub.s32 128, 128
          %482 = vsyncadd %s475, %s481
          %s483 = smul.addr %s479, 64
          %s484 = scalar_lea.hbm %s2, %s483
          %s485 = sshll.u32 %s478, 4
          %s486 = int_to_ptr.vmem [resolvable:$true] %s485
          %491 = dma.hbm_to_vmem [thread:$0]  %s484, 128, %s486, %s475, 64, 64, 4
        $region56: #{tpu_custom_call.1} parent=43 // pred_fallthru
          _
        // Predicated region
        $region57: #{tpu_custom_call.1} parent=43 // pred_check
          %p492 = pneg %p134
        $region58: #{tpu_custom_call.1} parent=43 // pred_check_branch
          %494 = sbr.rel (%p492) target = $region60
        $region59: #{tpu_custom_call.1} parent=43 // pred_region
          %s495 = sand.u32 %s36, 1
          %s496 = scalar_lea.sflag [#allocation10], %s495
          %s497 = sand.u32 %s124, 1
          %s498 = smul.addr %s497, 8
          %s499 = scalar_lea.vmem [#allocation9], %s498
          %s500 = smul.u32 2, %s36
          %s502 = ssub.s32 128, 128
          %503 = vsyncadd %s496, %s502
          %s504 = smul.addr %s500, 64
          %s505 = scalar_lea.hbm %s3, %s504
          %s506 = sshll.u32 %s499, 4
          %s507 = int_to_ptr.vmem [resolvable:$true] %s506
          %512 = dma.hbm_to_vmem [thread:$0]  %s505, 128, %s507, %s496, 64, 64, 4
        $region60: #{tpu_custom_call.1} parent=43 // pred_fallthru
          _
      $region44: #{tpu_custom_call.1} parent=5 // pred_fallthru
        _
      %p513 = scmp.le.s32.totalorder 1, %s36
      %p514 = scmp.lt.s32.totalorder %s36, 3
      %p515 = pnand %p513, %p514
      %p516 = pneg %p515
      // Predicated region
      $region61: #{tpu_custom_call.1} parent=5 // pred_check
        _
      $region62: #{tpu_custom_call.1} parent=5 // pred_check_branch
        %518 = sbr.rel (%p515) target = $region64
      $region63: #{tpu_custom_call.1} parent=5 // pred_region
        %s519 = ssub.s32 %s36, 1
        %s520 = sand.u32 %s49, 1
        %s521 = scalar_lea.sflag [#allocation4], %s520
        %s522 = sand.u32 %s49, 1
        %s523 = smul.addr %s522, 8
        %s524 = scalar_lea.vmem [#allocation3], %s523
        // Predicated region
        $region65: #{tpu_custom_call.1} parent=63 // pred_check
          %p525 = pneg %p62
        $region66: #{tpu_custom_call.1} parent=63 // pred_check_branch
          %527 = sbr.rel (%p525) target = $region68
        $region67: #{tpu_custom_call.1} parent=63 // pred_region
          %528 = dma.done %s521, 128
        $region68: #{tpu_custom_call.1} parent=63 // pred_fallthru
          _
        %s529 = sand.u32 %s41, 1
        %s530 = scalar_lea.sflag [#allocation7], %s529
        %s531 = sand.u32 %s75, 1
        %s532 = smul.addr %s531, 8
        %s533 = scalar_lea.vmem [#allocation6], %s532
        // Predicated region
        $region69: #{tpu_custom_call.1} parent=63 // pred_check
          %p534 = pneg %p88
        $region70: #{tpu_custom_call.1} parent=63 // pred_check_branch
          %536 = sbr.rel (%p534) target = $region72
        $region71: #{tpu_custom_call.1} parent=63 // pred_region
          %537 = dma.done %s530, 128
        $region72: #{tpu_custom_call.1} parent=63 // pred_fallthru
          _
        %s538 = sand.u32 %s41, 1
        %s539 = scalar_lea.sflag [#allocation7], %s538
        %s540 = sand.u32 %s101, 1
        %s541 = smul.addr %s540, 8
        %s542 = scalar_lea.vmem [#allocation8], %s541
        // Predicated region
        $region73: #{tpu_custom_call.1} parent=63 // pred_check
          %p543 = pneg %p114
        $region74: #{tpu_custom_call.1} parent=63 // pred_check_branch
          %545 = sbr.rel (%p543) target = $region76
        $region75: #{tpu_custom_call.1} parent=63 // pred_region
          %546 = dma.done %s539, 128
        $region76: #{tpu_custom_call.1} parent=63 // pred_fallthru
          _
        %s547 = sand.u32 %s41, 1
        %s548 = scalar_lea.sflag [#allocation10], %s547
        %s549 = sand.u32 %s127, 1
        %s550 = smul.addr %s549, 8
        %s551 = scalar_lea.vmem [#allocation9], %s550
        // Predicated region
        $region77: #{tpu_custom_call.1} parent=63 // pred_check
          %p552 = pneg %p140
        $region78: #{tpu_custom_call.1} parent=63 // pred_check_branch
          %554 = sbr.rel (%p552) target = $region80
        $region79: #{tpu_custom_call.1} parent=63 // pred_region
          %555 = dma.done %s548, 128
        $region80: #{tpu_custom_call.1} parent=63 // pred_fallthru
          _
        // Predicated region
        $region81: #{tpu_custom_call.1} parent=63 // pred_check
          %p556 = pneg %p161
        $region82: #{tpu_custom_call.1} parent=63 // pred_check_branch
          %558 = sbr.rel (%p556) target = $region84
        $region83: #{tpu_custom_call.1} parent=63 // pred_region
          %559 = dma.done [#allocation10], 1024
        $region84: #{tpu_custom_call.1} parent=63 // pred_fallthru
          _
        // Predicated region
        $region85: #{tpu_custom_call.1} parent=63 // pred_check
          %p560 = pneg %p182
        $region86: #{tpu_custom_call.1} parent=63 // pred_check_branch
          %562 = sbr.rel (%p560) target = $region88
        $region87: #{tpu_custom_call.1} parent=63 // pred_region
          %563 = dma.done [#allocation13], 1024
        $region88: #{tpu_custom_call.1} parent=63 // pred_fallthru
          _
        // Predicated region
        $region89: #{tpu_custom_call.1} parent=63 // pred_check
          %p564 = pneg %p203
        $region90: #{tpu_custom_call.1} parent=63 // pred_check_branch
          %566 = sbr.rel (%p564) target = $region92
        $region91: #{tpu_custom_call.1} parent=63 // pred_region
          %567 = dma.done [#allocation13], 1024
        $region92: #{tpu_custom_call.1} parent=63 // pred_fallthru
          _
        // Predicated region
        $region93: #{tpu_custom_call.1} parent=63 // pred_check
          %p568 = pneg %p224
        $region94: #{tpu_custom_call.1} parent=63 // pred_check_branch
          %570 = sbr.rel (%p568) target = $region96
        $region95: #{tpu_custom_call.1} parent=63 // pred_region
          %571 = dma.done [#allocation16], 1024
        $region96: #{tpu_custom_call.1} parent=63 // pred_fallthru
          _
        // Predicated region
        $region97: #{tpu_custom_call.1} parent=63 // pred_check
          %p572 = pneg %p245
        $region98: #{tpu_custom_call.1} parent=63 // pred_check_branch
          %574 = sbr.rel (%p572) target = $region100
        $region99: #{tpu_custom_call.1} parent=63 // pred_region
          %575 = dma.done [#allocation16], 1024
        $region100: #{tpu_custom_call.1} parent=63 // pred_fallthru
          _
        %s576 = sand.u32 %s49, 1
        %s577 = scalar_lea.sflag [#allocation4], %s576
        %s578 = sand.u32 %s49, 1
        %s579 = smul.addr %s578, 8
        %s580 = scalar_lea.vmem [#allocation3], %s579
        %p581 = pneg %p62
        %p582 = pneg %p59
        %s583 = sand.u32 %s41, 1
        %s584 = scalar_lea.sflag [#allocation7], %s583
        %s585 = sand.u32 %s75, 1
        %s586 = smul.addr %s585, 8
        %s587 = scalar_lea.vmem [#allocation6], %s586
        %p588 = pneg %p88
        %p589 = pneg %p85
        %s590 = sand.u32 %s41, 1
        %s591 = scalar_lea.sflag [#allocation7], %s590
        %s592 = sand.u32 %s101, 1
        %s593 = smul.addr %s592, 8
        %s594 = scalar_lea.vmem [#allocation8], %s593
        %p595 = pneg %p114
        %p596 = pneg %p111
        %s597 = sand.u32 %s41, 1
        %s598 = scalar_lea.sflag [#allocation10], %s597
        %s599 = sand.u32 %s127, 1
        %s600 = smul.addr %s599, 8
        %s601 = scalar_lea.vmem [#allocation9], %s600
        %p602 = pneg %p140
        %p603 = pneg %p137
        %p604 = pneg %p161
        %p605 = pneg %p158
        %p606 = pneg %p182
        %p607 = pneg %p179
        %p608 = pneg %p203
        %p609 = pneg %p200
        %p610 = pneg %p224
        %p611 = pneg %p221
        %p612 = pneg %p245
        %p613 = pneg %p242
        %p614 = pneg %p266
        %p615 = pneg %p263
        %p616 = pneg %p287
        %p617 = pneg %p284
        %p618 = pneg %p313
        %p619 = pneg %p310
        %s620 = sand.u32 %s300, 1
        %s621 = scalar_lea.sflag [#allocation5], %s620
        %s622 = sand.u32 %s300, 1
        %s623 = smul.addr %s622, 16
        %s624 = scalar_lea.vmem [#allocation18], %s623
        %p625 = pneg %p339
        %p626 = pneg %p336
        %s627 = sand.u32 %s326, 1
        %s628 = scalar_lea.sflag [#allocation20], %s627
        %s629 = sand.u32 %s326, 1
        %s630 = smul.addr %s629, 16
        %s631 = scalar_lea.vmem [#allocation19], %s630
        %s632 = smul.u32 2, %s41
        %s633 = smul.u32 2, %s41
        %s634 = smul.u32 2, %s41
        %s635 = smul.u32 2, %s41
        %s636 = smul.u32 2, %s41
        %s637 = smul.u32 2, %s41
        %v639 = vld [vmem:[%s524] sm:$0xf]
        %v640 = vld [vmem:[%s524 + $0x4] sm:$0xf]
        %v641 = vld [vmem:[%s533] sm:$0xf]
        %v642 = vld [vmem:[%s533 + $0x4] sm:$0xf]
        %v643 = vld [vmem:[%s542] sm:$0xf]
        %v644 = vld [vmem:[%s542 + $0x4] sm:$0xf]
        %v645 = vld [vmem:[#allocation11] sm:$0xf]
        %v646 = vld [vmem:[#allocation11 + $0x4] sm:$0xf]
        %v647 = vld [vmem:[#allocation11 + $0x8] sm:$0xf]
        %v648 = vld [vmem:[#allocation11 + $0xc] sm:$0xf]
        %v649 = vld [vmem:[#allocation11 + $0x10] sm:$0xf]
        %v650 = vld [vmem:[#allocation11 + $0x14] sm:$0xf]
        %v651 = vld [vmem:[#allocation11 + $0x18] sm:$0xf]
        %v652 = vld [vmem:[#allocation11 + $0x1c] sm:$0xf]
        %v653 = vld [vmem:[#allocation11 + $0x20] sm:$0xf]
        %v654 = vld [vmem:[#allocation11 + $0x24] sm:$0xf]
        %v655 = vld [vmem:[#allocation11 + $0x28] sm:$0xf]
        %v656 = vld [vmem:[#allocation11 + $0x2c] sm:$0xf]
        %v657 = vld [vmem:[#allocation11 + $0x30] sm:$0xf]
        %v658 = vld [vmem:[#allocation11 + $0x34] sm:$0xf]
        %v659 = vld [vmem:[#allocation11 + $0x38] sm:$0xf]
        %v660 = vld [vmem:[#allocation11 + $0x3c] sm:$0xf]
        %v661 = vld [vmem:[#allocation12] sm:$0xf]
        %v662 = vld [vmem:[#allocation12 + $0x4] sm:$0xf]
        %v663 = vld [vmem:[#allocation12 + $0x8] sm:$0xf]
        %v664 = vld [vmem:[#allocation12 + $0xc] sm:$0xf]
        %v665 = vld [vmem:[#allocation12 + $0x10] sm:$0xf]
        %v666 = vld [vmem:[#allocation12 + $0x14] sm:$0xf]
        %v667 = vld [vmem:[#allocation12 + $0x18] sm:$0xf]
        %v668 = vld [vmem:[#allocation12 + $0x1c] sm:$0xf]
        %v669 = vld [vmem:[#allocation12 + $0x20] sm:$0xf]
        %v670 = vld [vmem:[#allocation12 + $0x24] sm:$0xf]
        %v671 = vld [vmem:[#allocation12 + $0x28] sm:$0xf]
        %v672 = vld [vmem:[#allocation12 + $0x2c] sm:$0xf]
        %v673 = vld [vmem:[#allocation12 + $0x30] sm:$0xf]
        %v674 = vld [vmem:[#allocation12 + $0x34] sm:$0xf]
        %v675 = vld [vmem:[#allocation12 + $0x38] sm:$0xf]
        %v676 = vld [vmem:[#allocation12 + $0x3c] sm:$0xf]
        %v679 = vunpack.c.l.b16 %v639
        %v680 = vunpack.c.l.b16 %v640
        %v681 = vpack.c.b16 %v680, %v679
        %v699 = vunpack.c.l.b16 %v661
        %v700 = vunpack.c.l.b16 %v662
        %v701 = vunpack.c.l.b16 %v663
        %v702 = vunpack.c.l.b16 %v664
        %v703 = vunpack.c.l.b16 %v665
        %v704 = vunpack.c.l.b16 %v666
        %v705 = vunpack.c.l.b16 %v667
        %v706 = vunpack.c.l.b16 %v668
        %v707 = vunpack.c.l.b16 %v669
        %v708 = vunpack.c.l.b16 %v670
        %v709 = vunpack.c.l.b16 %v671
        %v710 = vunpack.c.l.b16 %v672
        %v711 = vunpack.c.l.b16 %v673
        %v712 = vunpack.c.l.b16 %v674
        %v713 = vunpack.c.l.b16 %v675
        %v714 = vunpack.c.l.b16 %v676
        %v715 = vpack.c.b16 %v700, %v699
        %v716 = vpack.c.b16 %v702, %v701
        %v717 = vpack.c.b16 %v704, %v703
        %v718 = vpack.c.b16 %v706, %v705
        %v719 = vpack.c.b16 %v708, %v707
        %v720 = vpack.c.b16 %v710, %v709
        %v721 = vpack.c.b16 %v712, %v711
        %v722 = vpack.c.b16 %v714, %v713
        %731 = vmatprep.subr.bf16.mxu0 0
        %732 = vmatpush1.bf16.msra.mxu0 %v715
        %733 = vmatprep.subr.bf16.mxu0 0
        %734 = vmatpush1.bf16.msra.mxu0 %v716
        %735 = vmatprep.subr.bf16.mxu0 0
        %736 = vmatpush1.bf16.msra.mxu0 %v717
        %737 = vmatprep.subr.bf16.mxu0 0
        %738 = vmatpush1.bf16.msra.mxu0 %v718
        %739 = vmatprep.subr.bf16.mxu0 0
        %740 = vmatpush1.bf16.msra.mxu0 %v719
        %741 = vmatprep.subr.bf16.mxu0 0
        %742 = vmatpush1.bf16.msra.mxu0 %v720
        %743 = vmatprep.subr.bf16.mxu0 0
        %744 = vmatpush1.bf16.msra.mxu0 %v721
        %745 = vmatprep.subr.bf16.mxu0 0
        %746 = vmatpush1.bf16.msra.mxu0 %v722
        %747 = vmatprep.subr.bf16.mxu0 0
        %748 = vmatpush1.bf16.msra.mxu0 0
        %749 = vmatprep.subr.bf16.mxu0 0
        %750 = vmatpush1.bf16.msra.mxu0 0
        %751 = vmatprep.subr.bf16.mxu0 0
        %752 = vmatpush1.bf16.msra.mxu0 0
        %753 = vmatprep.subr.bf16.mxu0 0
        %754 = vmatpush1.bf16.msra.mxu0 0
        %755 = vmatprep.subr.bf16.mxu0 0
        %756 = vmatpush1.bf16.msra.mxu0 0
        %757 = vmatprep.subr.bf16.mxu0 0
        %758 = vmatpush1.bf16.msra.mxu0 0
        %759 = vmatprep.subr.bf16.mxu0 0
        %760 = vmatpush1.bf16.msra.mxu0 0
        %761 = vmatprep.subr.bf16.mxu0 0
        %762 = vmatpush1.bf16.msra.mxu0 0
        %763 = vmatprep.mubr.bf16.mxu0 0
        %764 = vmatmul.mubr.bf16.gmra.mrb[0].mxu0 %v681
        %v765 = vpop.f32.mrb[0].mxu0
        %v766 = vadd.f32 0.0, %v765
        %v767 = vpop.f32.mrb[0].mxu0
        %v768 = vpop.f32.mrb[0].mxu0
        %v769 = vadd.f32 0.0, %v768
        %v770 = vpop.f32.mrb[0].mxu0
        %771 = vdwg.mxu0
        %v772 = vld [vmem:[#allocation14] sm:$0xf]
        %v773 = vld [vmem:[#allocation14 + $0x4] sm:$0xf]
        %v774 = vld [vmem:[#allocation14 + $0x8] sm:$0xf]
        %v775 = vld [vmem:[#allocation14 + $0xc] sm:$0xf]
        %v776 = vld [vmem:[#allocation14 + $0x10] sm:$0xf]
        %v777 = vld [vmem:[#allocation14 + $0x14] sm:$0xf]
        %v778 = vld [vmem:[#allocation14 + $0x18] sm:$0xf]
        %v779 = vld [vmem:[#allocation14 + $0x1c] sm:$0xf]
        %v780 = vld [vmem:[#allocation14 + $0x20] sm:$0xf]
        %v781 = vld [vmem:[#allocation14 + $0x24] sm:$0xf]
        %v782 = vld [vmem:[#allocation14 + $0x28] sm:$0xf]
        %v783 = vld [vmem:[#allocation14 + $0x2c] sm:$0xf]
        %v784 = vld [vmem:[#allocation14 + $0x30] sm:$0xf]
        %v785 = vld [vmem:[#allocation14 + $0x34] sm:$0xf]
        %v786 = vld [vmem:[#allocation14 + $0x38] sm:$0xf]
        %v787 = vld [vmem:[#allocation14 + $0x3c] sm:$0xf]
        %v790 = vunpack.c.l.b16 %v641
        %v791 = vunpack.c.l.b16 %v642
        %v792 = vpack.c.b16 %v791, %v790
        %v810 = vunpack.c.l.b16 %v772
        %v811 = vunpack.c.l.b16 %v773
        %v812 = vunpack.c.l.b16 %v774
        %v813 = vunpack.c.l.b16 %v775
        %v814 = vunpack.c.l.b16 %v776
        %v815 = vunpack.c.l.b16 %v777
        %v816 = vunpack.c.l.b16 %v778
        %v817 = vunpack.c.l.b16 %v779
        %v818 = vunpack.c.l.b16 %v780
        %v819 = vunpack.c.l.b16 %v781
        %v820 = vunpack.c.l.b16 %v782
        %v821 = vunpack.c.l.b16 %v783
        %v822 = vunpack.c.l.b16 %v784
        %v823 = vunpack.c.l.b16 %v785
        %v824 = vunpack.c.l.b16 %v786
        %v825 = vunpack.c.l.b16 %v787
        %v826 = vpack.c.b16 %v811, %v810
        %v827 = vpack.c.b16 %v813, %v812
        %v828 = vpack.c.b16 %v815, %v814
        %v829 = vpack.c.b16 %v817, %v816
        %v830 = vpack.c.b16 %v819, %v818
        %v831 = vpack.c.b16 %v821, %v820
        %v832 = vpack.c.b16 %v823, %v822
        %v833 = vpack.c.b16 %v825, %v824
        %842 = vmatprep.subr.bf16.mxu0 0
        %843 = vmatpush1.bf16.msra.mxu0 %v826
        %844 = vmatprep.subr.bf16.mxu0 0
        %845 = vmatpush1.bf16.msra.mxu0 %v827
        %846 = vmatprep.subr.bf16.mxu0 0
        %847 = vmatpush1.bf16.msra.mxu0 %v828
        %848 = vmatprep.subr.bf16.mxu0 0
        %849 = vmatpush1.bf16.msra.mxu0 %v829
        %850 = vmatprep.subr.bf16.mxu0 0
        %851 = vmatpush1.bf16.msra.mxu0 %v830
        %852 = vmatprep.subr.bf16.mxu0 0
        %853 = vmatpush1.bf16.msra.mxu0 %v831
        %854 = vmatprep.subr.bf16.mxu0 0
        %855 = vmatpush1.bf16.msra.mxu0 %v832
        %856 = vmatprep.subr.bf16.mxu0 0
        %857 = vmatpush1.bf16.msra.mxu0 %v833
        %858 = vmatprep.subr.bf16.mxu0 0
        %859 = vmatpush1.bf16.msra.mxu0 0
        %860 = vmatprep.subr.bf16.mxu0 0
        %861 = vmatpush1.bf16.msra.mxu0 0
        %862 = vmatprep.subr.bf16.mxu0 0
        %863 = vmatpush1.bf16.msra.mxu0 0
        %864 = vmatprep.subr.bf16.mxu0 0
        %865 = vmatpush1.bf16.msra.mxu0 0
        %866 = vmatprep.subr.bf16.mxu0 0
        %867 = vmatpush1.bf16.msra.mxu0 0
        %868 = vmatprep.subr.bf16.mxu0 0
        %869 = vmatpush1.bf16.msra.mxu0 0
        %870 = vmatprep.subr.bf16.mxu0 0
        %871 = vmatpush1.bf16.msra.mxu0 0
        %872 = vmatprep.subr.bf16.mxu0 0
        %873 = vmatpush1.bf16.msra.mxu0 0
        %874 = vmatprep.mubr.bf16.mxu0 0
        %875 = vmatmul.mubr.bf16.gmra.mrb[0].mxu0 %v792
        %v876 = vpop.f32.mrb[0].mxu0
        %v877 = vadd.f32 0.0, %v876
        %v878 = vpop.f32.mrb[0].mxu0
        %v879 = vpop.f32.mrb[0].mxu0
        %v880 = vadd.f32 0.0, %v879
        %v881 = vpop.f32.mrb[0].mxu0
        %882 = vdwg.mxu0
        %v883 = vld [vmem:[#allocation15] sm:$0xf]
        %v884 = vld [vmem:[#allocation15 + $0x4] sm:$0xf]
        %v885 = vld [vmem:[#allocation15 + $0x8] sm:$0xf]
        %v886 = vld [vmem:[#allocation15 + $0xc] sm:$0xf]
        %v887 = vld [vmem:[#allocation15 + $0x10] sm:$0xf]
        %v888 = vld [vmem:[#allocation15 + $0x14] sm:$0xf]
        %v889 = vld [vmem:[#allocation15 + $0x18] sm:$0xf]
        %v890 = vld [vmem:[#allocation15 + $0x1c] sm:$0xf]
        %v891 = vld [vmem:[#allocation15 + $0x20] sm:$0xf]
        %v892 = vld [vmem:[#allocation15 + $0x24] sm:$0xf]
        %v893 = vld [vmem:[#allocation15 + $0x28] sm:$0xf]
        %v894 = vld [vmem:[#allocation15 + $0x2c] sm:$0xf]
        %v895 = vld [vmem:[#allocation15 + $0x30] sm:$0xf]
        %v896 = vld [vmem:[#allocation15 + $0x34] sm:$0xf]
        %v897 = vld [vmem:[#allocation15 + $0x38] sm:$0xf]
        %v898 = vld [vmem:[#allocation15 + $0x3c] sm:$0xf]
        %v901 = vunpack.c.l.b16 %v643
        %v902 = vunpack.c.l.b16 %v644
        %v903 = vpack.c.b16 %v902, %v901
        %v921 = vunpack.c.l.b16 %v883
        %v922 = vunpack.c.l.b16 %v884
        %v923 = vunpack.c.l.b16 %v885
        %v924 = vunpack.c.l.b16 %v886
        %v925 = vunpack.c.l.b16 %v887
        %v926 = vunpack.c.l.b16 %v888
        %v927 = vunpack.c.l.b16 %v889
        %v928 = vunpack.c.l.b16 %v890
        %v929 = vunpack.c.l.b16 %v891
        %v930 = vunpack.c.l.b16 %v892
        %v931 = vunpack.c.l.b16 %v893
        %v932 = vunpack.c.l.b16 %v894
        %v933 = vunpack.c.l.b16 %v895
        %v934 = vunpack.c.l.b16 %v896
        %v935 = vunpack.c.l.b16 %v897
        %v936 = vunpack.c.l.b16 %v898
        %v937 = vpack.c.b16 %v922, %v921
        %v938 = vpack.c.b16 %v924, %v923
        %v939 = vpack.c.b16 %v926, %v925
        %v940 = vpack.c.b16 %v928, %v927
        %v941 = vpack.c.b16 %v930, %v929
        %v942 = vpack.c.b16 %v932, %v931
        %v943 = vpack.c.b16 %v934, %v933
        %v944 = vpack.c.b16 %v936, %v935
        %953 = vmatprep.subr.bf16.mxu0 0
        %954 = vmatpush1.bf16.msra.mxu0 %v937
        %955 = vmatprep.subr.bf16.mxu0 0
        %956 = vmatpush1.bf16.msra.mxu0 %v938
        %957 = vmatprep.subr.bf16.mxu0 0
        %958 = vmatpush1.bf16.msra.mxu0 %v939
        %959 = vmatprep.subr.bf16.mxu0 0
        %960 = vmatpush1.bf16.msra.mxu0 %v940
        %961 = vmatprep.subr.bf16.mxu0 0
        %962 = vmatpush1.bf16.msra.mxu0 %v941
        %963 = vmatprep.subr.bf16.mxu0 0
        %964 = vmatpush1.bf16.msra.mxu0 %v942
        %965 = vmatprep.subr.bf16.mxu0 0
        %966 = vmatpush1.bf16.msra.mxu0 %v943
        %967 = vmatprep.subr.bf16.mxu0 0
        %968 = vmatpush1.bf16.msra.mxu0 %v944
        %969 = vmatprep.subr.bf16.mxu0 0
        %970 = vmatpush1.bf16.msra.mxu0 0
        %971 = vmatprep.subr.bf16.mxu0 0
        %972 = vmatpush1.bf16.msra.mxu0 0
        %973 = vmatprep.subr.bf16.mxu0 0
        %974 = vmatpush1.bf16.msra.mxu0 0
        %975 = vmatprep.subr.bf16.mxu0 0
        %976 = vmatpush1.bf16.msra.mxu0 0
        %977 = vmatprep.subr.bf16.mxu0 0
        %978 = vmatpush1.bf16.msra.mxu0 0
        %979 = vmatprep.subr.bf16.mxu0 0
        %980 = vmatpush1.bf16.msra.mxu0 0
        %981 = vmatprep.subr.bf16.mxu0 0
        %982 = vmatpush1.bf16.msra.mxu0 0
        %983 = vmatprep.subr.bf16.mxu0 0
        %984 = vmatpush1.bf16.msra.mxu0 0
        %985 = vmatprep.mubr.bf16.mxu0 0
        %986 = vmatmul.mubr.bf16.gmra.mrb[0].mxu0 %v903
        %v987 = vpop.f32.mrb[0].mxu0
        %v988 = vadd.f32 0.0, %v987
        %v989 = vpop.f32.mrb[0].mxu0
        %v990 = vpop.f32.mrb[0].mxu0
        %v991 = vadd.f32 0.0, %v990
        %v992 = vpop.f32.mrb[0].mxu0
        %993 = vdwg.mxu0
        %v994 = vpack.c.bf16 %v769, %v766
        %v996 = vunpack.c.l.b16 %v994
        %v997 = vunpack.c.h.b16 %v994
        %v998 = vpack.c.b16 %v996, %v996
        %v999 = vpack.c.b16 %v997, %v997
        %v1000 = vpack.c.bf16 %v880, %v877
        %v1002 = vunpack.c.l.b16 %v1000
        %v1003 = vunpack.c.h.b16 %v1000
        %v1004 = vpack.c.b16 %v1002, %v1002
        %v1005 = vpack.c.b16 %v1003, %v1003
        %v1006 = vpack.c.bf16 %v991, %v988
        %v1008 = vunpack.c.l.b16 %v1006
        %v1009 = vunpack.c.h.b16 %v1006
        %v1010 = vpack.c.b16 %v1008, %v1008
        %v1011 = vpack.c.b16 %v1009, %v1009
        %v1012 = vld [vmem:[%s551] sm:$0xf]
        %v1013 = vld [vmem:[%s551 + $0x4] sm:$0xf]
        %v1014 = vunpack.c.l.bf16 %v1012
        %v1015 = vunpack.c.l.bf16 %v1013
        %vm1016 = vcmask 130048
        %v1018 = vsel %vm1016, %v998, 0
        %v1021 = vsel %vm1016, %v1004, 0
        %1023 = vmatprep.subr.bf16.mxu0 0
        %1024 = vmatpush1.bf16.xpose.msra.mxu0 %v1021
        %1025 = vmatprep.subr.bf16.mxu0 0
        %1026 = vmatpush1.bf16.xpose.msra.mxu0 0
        %1027 = vmatprep.subr.bf16.mxu0 0
        %1028 = vmatpush1.bf16.xpose.msra.mxu0 0
        %1029 = vmatprep.subr.bf16.mxu0 0
        %1030 = vmatpush1.bf16.xpose.msra.mxu0 0
        %1031 = vmatprep.subr.bf16.mxu0 0
        %1032 = vmatpush1.bf16.xpose.msra.mxu0 0
        %1033 = vmatprep.subr.bf16.mxu0 0
        %1034 = vmatpush1.bf16.xpose.msra.mxu0 0
        %1035 = vmatprep.subr.bf16.mxu0 0
        %1036 = vmatpush1.bf16.xpose.msra.mxu0 0
        %1037 = vmatprep.subr.bf16.mxu0 0
        %1038 = vmatpush1.bf16.xpose.msra.mxu0 0
        %1039 = vmatprep.subr.bf16.mxu0 0
        %1040 = vmatpush1.bf16.xpose.msra.mxu0 0
        %1041 = vmatprep.subr.bf16.mxu0 0
        %1042 = vmatpush1.bf16.xpose.msra.mxu0 0
        %1043 = vmatprep.subr.bf16.mxu0 0
        %1044 = vmatpush1.bf16.xpose.msra.mxu0 0
        %1045 = vmatprep.subr.bf16.mxu0 0
        %1046 = vmatpush1.bf16.xpose.msra.mxu0 0
        %1047 = vmatprep.subr.bf16.mxu0 0
        %1048 = vmatpush1.bf16.xpose.msra.mxu0 0
        %1049 = vmatprep.subr.bf16.mxu0 0
        %1050 = vmatpush1.bf16.xpose.msra.mxu0 0
        %1051 = vmatprep.subr.bf16.mxu0 0
        %1052 = vmatpush1.bf16.xpose.msra.mxu0 0
        %1053 = vmatprep.subr.bf16.mxu0 0
        %1054 = vmatpush1.bf16.xpose.msra.mxu0 0
        %1055 = vmatprep.mubr.bf16.mxu0 0
        %1056 = vmatmul.mubr.bf16.gmra.mrb[0].mxu0 %v1018
        %v1057 = vpop.f32.mrb[0].mxu0
        %v1058 = vadd.f32 %v1014, %v1057
        %v1059 = vpop.f32.mrb[0].mxu0
        %v1060 = vpop.f32.mrb[0].mxu0
        %v1061 = vpop.f32.mrb[0].mxu0
        %1062 = vdwg.mxu0
        %v1064 = vsel %vm1016, %v999, 0
        %v1067 = vsel %vm1016, %v1005, 0
        %1069 = vmatprep.subr.bf16.mxu0 0
        %1070 = vmatpush1.bf16.xpose.msra.mxu0 %v1067
        %1071 = vmatprep.subr.bf16.mxu0 0
        %1072 = vmatpush1.bf16.xpose.msra.mxu0 0
        %1073 = vmatprep.subr.bf16.mxu0 0
        %1074 = vmatpush1.bf16.xpose.msra.mxu0 0
        %1075 = vmatprep.subr.bf16.mxu0 0
        %1076 = vmatpush1.bf16.xpose.msra.mxu0 0
        %1077 = vmatprep.subr.bf16.mxu0 0
        %1078 = vmatpush1.bf16.xpose.msra.mxu0 0
        %1079 = vmatprep.subr.bf16.mxu0 0
        %1080 = vmatpush1.bf16.xpose.msra.mxu0 0
        %1081 = vmatprep.subr.bf16.mxu0 0
        %1082 = vmatpush1.bf16.xpose.msra.mxu0 0
        %1083 = vmatprep.subr.bf16.mxu0 0
        %1084 = vmatpush1.bf16.xpose.msra.mxu0 0
        %1085 = vmatprep.subr.bf16.mxu0 0
        %1086 = vmatpush1.bf16.xpose.msra.mxu0 0
        %1087 = vmatprep.subr.bf16.mxu0 0
        %1088 = vmatpush1.bf16.xpose.msra.mxu0 0
        %1089 = vmatprep.subr.bf16.mxu0 0
        %1090 = vmatpush1.bf16.xpose.msra.mxu0 0
        %1091 = vmatprep.subr.bf16.mxu0 0
        %1092 = vmatpush1.bf16.xpose.msra.mxu0 0
        %1093 = vmatprep.subr.bf16.mxu0 0
        %1094 = vmatpush1.bf16.xpose.msra.mxu0 0
        %1095 = vmatprep.subr.bf16.mxu0 0
        %1096 = vmatpush1.bf16.xpose.msra.mxu0 0
        %1097 = vmatprep.subr.bf16.mxu0 0
        %1098 = vmatpush1.bf16.xpose.msra.mxu0 0
        %1099 = vmatprep.subr.bf16.mxu0 0
        %1100 = vmatpush1.bf16.xpose.msra.mxu0 0
        %1101 = vmatprep.mubr.bf16.mxu0 0
        %1102 = vmatmul.mubr.bf16.gmra.mrb[0].mxu0 %v1064
        %v1103 = vpop.f32.mrb[0].mxu0
        %v1104 = vadd.f32 %v1015, %v1103
        %v1105 = vpop.f32.mrb[0].mxu0
        %v1106 = vpop.f32.mrb[0].mxu0
        %v1107 = vpop.f32.mrb[0].mxu0
        %1108 = vdwg.mxu0
        %vm1109 = vcmask 64512
        %v1110 = vsel %vm1109, %v1058, -inf
        %1111 = vmax.xlane.f32.xlu0 %v1110
        %v1112 = vpop.xlane.xlu0 %1111
        %v1113 = vsel %vm1109, %v1104, -inf
        %1114 = vmax.xlane.f32.xlu0 %v1113
        %v1115 = vpop.xlane.xlu0 %1114
        %v1116 = vsub.f32 %v1058, %v1112
        %v1117 = vsub.f32 %v1104, %v1115
        %v1118 = vmul.f32 %v1116, 1.442695
        %v1119 = vpow.pop %v1118
        %v1120 = vmul.f32 %v1117, 1.442695
        %v1121 = vpow.pop %v1120
        %v1122 = vsel %vm1109, %v1119, 0.0
        %1123 = vadd.xlane.f32.xlu0 %v1122
        %v1124 = vpop.xlane.xlu0 %1123
        %v1125 = vsel %vm1109, %v1121, 0.0
        %1126 = vadd.xlane.f32.xlu0 %v1125
        %v1127 = vpop.xlane.xlu0 %1126
        %v1128 = vrcp.pop %v1124
        %v1129 = vmul.f32 %v1119, %v1128
        %v1130 = vrcp.pop %v1127
        %v1131 = vmul.f32 %v1121, %v1130
        %1132 = vst.msk [vmem:[%s631] sm:$0xff] %vm1109, %v1129
        %1133 = vst.msk [vmem:[%s631 + $0x8] sm:$0xff] %vm1109, %v1131
        %v1134 = vpack.c.bf16 %v1129, %v1129
        %v1135 = vpack.c.bf16 %v1131, %v1131
        %v1137 = vsel %vm1109, %v1134, 0
        %vm1139 = vcmask 1043456
        %v1141 = vsel %vm1139, %v1010, 0
        %1143 = vmatprep.subr.bf16.mxu0 0
        %1144 = vmatpush1.bf16.msra.mxu0 %v1141
        %1145 = vmatprep.subr.bf16.mxu0 0
        %1146 = vmatpush1.bf16.msra.mxu0 0
        %1147 = vmatprep.subr.bf16.mxu0 0
        %1148 = vmatpush1.bf16.msra.mxu0 0
        %1149 = vmatprep.subr.bf16.mxu0 0
        %1150 = vmatpush1.bf16.msra.mxu0 0
        %1151 = vmatprep.subr.bf16.mxu0 0
        %1152 = vmatpush1.bf16.msra.mxu0 0
        %1153 = vmatprep.subr.bf16.mxu0 0
        %1154 = vmatpush1.bf16.msra.mxu0 0
        %1155 = vmatprep.subr.bf16.mxu0 0
        %1156 = vmatpush1.bf16.msra.mxu0 0
        %1157 = vmatprep.subr.bf16.mxu0 0
        %1158 = vmatpush1.bf16.msra.mxu0 0
        %1159 = vmatprep.subr.bf16.mxu0 0
        %1160 = vmatpush1.bf16.msra.mxu0 0
        %1161 = vmatprep.subr.bf16.mxu0 0
        %1162 = vmatpush1.bf16.msra.mxu0 0
        %1163 = vmatprep.subr.bf16.mxu0 0
        %1164 = vmatpush1.bf16.msra.mxu0 0
        %1165 = vmatprep.subr.bf16.mxu0 0
        %1166 = vmatpush1.bf16.msra.mxu0 0
        %1167 = vmatprep.subr.bf16.mxu0 0
        %1168 = vmatpush1.bf16.msra.mxu0 0
        %1169 = vmatprep.subr.bf16.mxu0 0
        %1170 = vmatpush1.bf16.msra.mxu0 0
        %1171 = vmatprep.subr.bf16.mxu0 0
        %1172 = vmatpush1.bf16.msra.mxu0 0
        %1173 = vmatprep.subr.bf16.mxu0 0
        %1174 = vmatpush1.bf16.msra.mxu0 0
        %1175 = vmatprep.mubr.bf16.mxu0 0
        %1176 = vmatmul.mubr.bf16.gmra.mrb[0].mxu0 %v1137
        %v1177 = vpop.f32.mrb[0].mxu0
        %v1178 = vadd.f32 0.0, %v1177
        %v1179 = vpop.f32.mrb[0].mxu0
        %v1180 = vpop.f32.mrb[0].mxu0
        %v1181 = vpop.f32.mrb[0].mxu0
        %1182 = vdwg.mxu0
        %v1184 = vsel %vm1109, %v1135, 0
        %v1187 = vsel %vm1139, %v1011, 0
        %1189 = vmatprep.subr.bf16.mxu0 0
        %1190 = vmatpush1.bf16.msra.mxu0 %v1187
        %1191 = vmatprep.subr.bf16.mxu0 0
        %1192 = vmatpush1.bf16.msra.mxu0 0
        %1193 = vmatprep.subr.bf16.mxu0 0
        %1194 = vmatpush1.bf16.msra.mxu0 0
        %1195 = vmatprep.subr.bf16.mxu0 0
        %1196 = vmatpush1.bf16.msra.mxu0 0
        %1197 = vmatprep.subr.bf16.mxu0 0
        %1198 = vmatpush1.bf16.msra.mxu0 0
        %1199 = vmatprep.subr.bf16.mxu0 0
        %1200 = vmatpush1.bf16.msra.mxu0 0
        %1201 = vmatprep.subr.bf16.mxu0 0
        %1202 = vmatpush1.bf16.msra.mxu0 0
        %1203 = vmatprep.subr.bf16.mxu0 0
        %1204 = vmatpush1.bf16.msra.mxu0 0
        %1205 = vmatprep.subr.bf16.mxu0 0
        %1206 = vmatpush1.bf16.msra.mxu0 0
        %1207 = vmatprep.subr.bf16.mxu0 0
        %1208 = vmatpush1.bf16.msra.mxu0 0
        %1209 = vmatprep.subr.bf16.mxu0 0
        %1210 = vmatpush1.bf16.msra.mxu0 0
        %1211 = vmatprep.subr.bf16.mxu0 0
        %1212 = vmatpush1.bf16.msra.mxu0 0
        %1213 = vmatprep.subr.bf16.mxu0 0
        %1214 = vmatpush1.bf16.msra.mxu0 0
        %1215 = vmatprep.subr.bf16.mxu0 0
        %1216 = vmatpush1.bf16.msra.mxu0 0
        %1217 = vmatprep.subr.bf16.mxu0 0
        %1218 = vmatpush1.bf16.msra.mxu0 0
        %1219 = vmatprep.subr.bf16.mxu0 0
        %1220 = vmatpush1.bf16.msra.mxu0 0
        %1221 = vmatprep.mubr.bf16.mxu0 0
        %1222 = vmatmul.mubr.bf16.gmra.mrb[0].mxu0 %v1184
        %v1223 = vpop.f32.mrb[0].mxu0
        %v1224 = vadd.f32 0.0, %v1223
        %v1225 = vpop.f32.mrb[0].mxu0
        %v1226 = vpop.f32.mrb[0].mxu0
        %v1227 = vpop.f32.mrb[0].mxu0
        %1228 = vdwg.mxu0
        %1229 = vst.msk [vmem:[#allocation2] sm:$0xff] %vm1016, %v1178
        %1230 = vst.msk [vmem:[#allocation2 + $0x8] sm:$0xff] %vm1016, %v1224
        %1231 = vrot.lane.b32.xlu0 %v998, 112
        %v1232 = vpop.permute.xlu0 %1231
        %1233 = vrot.lane.b32.xlu0 %v1004, 112
        %v1234 = vpop.permute.xlu0 %1233
        %v1236 = vsel %vm1016, %v1232, 0
        %v1239 = vsel %vm1016, %v1234, 0
        %1241 = vmatprep.subr.bf16.mxu0 0
        %1242 = vmatpush1.bf16.xpose.msra.mxu0 %v1239
        %1243 = vmatprep.subr.bf16.mxu0 0
        %1244 = vmatpush1.bf16.xpose.msra.mxu0 0
        %1245 = vmatprep.subr.bf16.mxu0 0
        %1246 = vmatpush1.bf16.xpose.msra.mxu0 0
        %1247 = vmatprep.subr.bf16.mxu0 0
        %1248 = vmatpush1.bf16.xpose.msra.mxu0 0
        %1249 = vmatprep.subr.bf16.mxu0 0
        %1250 = vmatpush1.bf16.xpose.msra.mxu0 0
        %1251 = vmatprep.subr.bf16.mxu0 0
        %1252 = vmatpush1.bf16.xpose.msra.mxu0 0
        %1253 = vmatprep.subr.bf16.mxu0 0
        %1254 = vmatpush1.bf16.xpose.msra.mxu0 0
        %1255 = vmatprep.subr.bf16.mxu0 0
        %1256 = vmatpush1.bf16.xpose.msra.mxu0 0
        %1257 = vmatprep.subr.bf16.mxu0 0
        %1258 = vmatpush1.bf16.xpose.msra.mxu0 0
        %1259 = vmatprep.subr.bf16.mxu0 0
        %1260 = vmatpush1.bf16.xpose.msra.mxu0 0
        %1261 = vmatprep.subr.bf16.mxu0 0
        %1262 = vmatpush1.bf16.xpose.msra.mxu0 0
        %1263 = vmatprep.subr.bf16.mxu0 0
        %1264 = vmatpush1.bf16.xpose.msra.mxu0 0
        %1265 = vmatprep.subr.bf16.mxu0 0
        %1266 = vmatpush1.bf16.xpose.msra.mxu0 0
        %1267 = vmatprep.subr.bf16.mxu0 0
        %1268 = vmatpush1.bf16.xpose.msra.mxu0 0
        %1269 = vmatprep.subr.bf16.mxu0 0
        %1270 = vmatpush1.bf16.xpose.msra.mxu0 0
        %1271 = vmatprep.subr.bf16.mxu0 0
        %1272 = vmatpush1.bf16.xpose.msra.mxu0 0
        %1273 = vmatprep.mubr.bf16.mxu0 0
        %1274 = vmatmul.mubr.bf16.gmra.mrb[0].mxu0 %v1236
        %v1275 = vpop.f32.mrb[0].mxu0
        %v1276 = vadd.f32 %v1014, %v1275
        %v1277 = vpop.f32.mrb[0].mxu0
        %v1278 = vpop.f32.mrb[0].mxu0
        %v1279 = vpop.f32.mrb[0].mxu0
        %1280 = vdwg.mxu0
        %1281 = vrot.lane.b32.xlu0 %v999, 112
        %v1282 = vpop.permute.xlu0 %1281
        %1283 = vrot.lane.b32.xlu0 %v1005, 112
        %v1284 = vpop.permute.xlu0 %1283
        %v1286 = vsel %vm1016, %v1282, 0
        %v1289 = vsel %vm1016, %v1284, 0
        %1291 = vmatprep.subr.bf16.mxu0 0
        %1292 = vmatpush1.bf16.xpose.msra.mxu0 %v1289
        %1293 = vmatprep.subr.bf16.mxu0 0
        %1294 = vmatpush1.bf16.xpose.msra.mxu0 0
        %1295 = vmatprep.subr.bf16.mxu0 0
        %1296 = vmatpush1.bf16.xpose.msra.mxu0 0
        %1297 = vmatprep.subr.bf16.mxu0 0
        %1298 = vmatpush1.bf16.xpose.msra.mxu0 0
        %1299 = vmatprep.subr.bf16.mxu0 0
        %1300 = vmatpush1.bf16.xpose.msra.mxu0 0
        %1301 = vmatprep.subr.bf16.mxu0 0
        %1302 = vmatpush1.bf16.xpose.msra.mxu0 0
        %1303 = vmatprep.subr.bf16.mxu0 0
        %1304 = vmatpush1.bf16.xpose.msra.mxu0 0
        %1305 = vmatprep.subr.bf16.mxu0 0
        %1306 = vmatpush1.bf16.xpose.msra.mxu0 0
        %1307 = vmatprep.subr.bf16.mxu0 0
        %1308 = vmatpush1.bf16.xpose.msra.mxu0 0
        %1309 = vmatprep.subr.bf16.mxu0 0
        %1310 = vmatpush1.bf16.xpose.msra.mxu0 0
        %1311 = vmatprep.subr.bf16.mxu0 0
        %1312 = vmatpush1.bf16.xpose.msra.mxu0 0
        %1313 = vmatprep.subr.bf16.mxu0 0
        %1314 = vmatpush1.bf16.xpose.msra.mxu0 0
        %1315 = vmatprep.subr.bf16.mxu0 0
        %1316 = vmatpush1.bf16.xpose.msra.mxu0 0
        %1317 = vmatprep.subr.bf16.mxu0 0
        %1318 = vmatpush1.bf16.xpose.msra.mxu0 0
        %1319 = vmatprep.subr.bf16.mxu0 0
        %1320 = vmatpush1.bf16.xpose.msra.mxu0 0
        %1321 = vmatprep.subr.bf16.mxu0 0
        %1322 = vmatpush1.bf16.xpose.msra.mxu0 0
        %1323 = vmatprep.mubr.bf16.mxu0 0
        %1324 = vmatmul.mubr.bf16.gmra.mrb[0].mxu0 %v1286
        %v1325 = vpop.f32.mrb[0].mxu0
        %v1326 = vadd.f32 %v1015, %v1325
        %v1327 = vpop.f32.mrb[0].mxu0
        %v1328 = vpop.f32.mrb[0].mxu0
        %v1329 = vpop.f32.mrb[0].mxu0
        %1330 = vdwg.mxu0
        %v1331 = vsel %vm1109, %v1276, -inf
        %1332 = vmax.xlane.f32.xlu0 %v1331
        %v1333 = vpop.xlane.xlu0 %1332
        %v1334 = vsel %vm1109, %v1326, -inf
        %1335 = vmax.xlane.f32.xlu0 %v1334
        %v1336 = vpop.xlane.xlu0 %1335
        %v1337 = vsub.f32 %v1276, %v1333
        %v1338 = vsub.f32 %v1326, %v1336
        %v1339 = vmul.f32 %v1337, 1.442695
        %v1340 = vpow.pop %v1339
        %v1341 = vmul.f32 %v1338, 1.442695
        %v1342 = vpow.pop %v1341
        %v1343 = vsel %vm1109, %v1340, 0.0
        %1344 = vadd.xlane.f32.xlu0 %v1343
        %v1345 = vpop.xlane.xlu0 %1344
        %v1346 = vsel %vm1109, %v1342, 0.0
        %1347 = vadd.xlane.f32.xlu0 %v1346
        %v1348 = vpop.xlane.xlu0 %1347
        %v1349 = vrcp.pop %v1345
        %v1350 = vmul.f32 %v1340, %v1349
        %v1351 = vrcp.pop %v1348
        %v1352 = vmul.f32 %v1342, %v1351
        %1355 = vrot.lane.b32.xlu0 %v1350, 8
        %v1356 = vpop.permute.xlu0 %1355
        %1357 = vrot.lane.b32.xlu0 %v1352, 8
        %v1358 = vpop.permute.xlu0 %1357
        %vm1361 = vcmask 130112
        %1362 = vst.msk [vmem:[%s631] sm:$0xff] %vm1361, %v1356
        %1363 = vst.msk [vmem:[%s631 + $0x8] sm:$0xff] %vm1361, %v1358
        %v1364 = vpack.c.bf16 %v1350, %v1350
        %v1365 = vpack.c.bf16 %v1352, %v1352
        %1366 = vrot.lane.b32.xlu0 %v1010, 112
        %v1367 = vpop.permute.xlu0 %1366
        %v1369 = vsel %vm1109, %v1364, 0
        %v1372 = vsel %vm1139, %v1367, 0
        %1374 = vmatprep.subr.bf16.mxu0 0
        %1375 = vmatpush1.bf16.msra.mxu0 %v1372
        %1376 = vmatprep.subr.bf16.mxu0 0
        %1377 = vmatpush1.bf16.msra.mxu0 0
        %1378 = vmatprep.subr.bf16.mxu0 0
        %1379 = vmatpush1.bf16.msra.mxu0 0
        %1380 = vmatprep.subr.bf16.mxu0 0
        %1381 = vmatpush1.bf16.msra.mxu0 0
        %1382 = vmatprep.subr.bf16.mxu0 0
        %1383 = vmatpush1.bf16.msra.mxu0 0
        %1384 = vmatprep.subr.bf16.mxu0 0
        %1385 = vmatpush1.bf16.msra.mxu0 0
        %1386 = vmatprep.subr.bf16.mxu0 0
        %1387 = vmatpush1.bf16.msra.mxu0 0
        %1388 = vmatprep.subr.bf16.mxu0 0
        %1389 = vmatpush1.bf16.msra.mxu0 0
        %1390 = vmatprep.subr.bf16.mxu0 0
        %1391 = vmatpush1.bf16.msra.mxu0 0
        %1392 = vmatprep.subr.bf16.mxu0 0
        %1393 = vmatpush1.bf16.msra.mxu0 0
        %1394 = vmatprep.subr.bf16.mxu0 0
        %1395 = vmatpush1.bf16.msra.mxu0 0
        %1396 = vmatprep.subr.bf16.mxu0 0
        %1397 = vmatpush1.bf16.msra.mxu0 0
        %1398 = vmatprep.subr.bf16.mxu0 0
        %1399 = vmatpush1.bf16.msra.mxu0 0
        %1400 = vmatprep.subr.bf16.mxu0 0
        %1401 = vmatpush1.bf16.msra.mxu0 0
        %1402 = vmatprep.subr.bf16.mxu0 0
        %1403 = vmatpush1.bf16.msra.mxu0 0
        %1404 = vmatprep.subr.bf16.mxu0 0
        %1405 = vmatpush1.bf16.msra.mxu0 0
        %1406 = vmatprep.mubr.bf16.mxu0 0
        %1407 = vmatmul.mubr.bf16.gmra.mrb[0].mxu0 %v1369
        %v1408 = vpop.f32.mrb[0].mxu0
        %v1409 = vadd.f32 0.0, %v1408
        %v1410 = vpop.f32.mrb[0].mxu0
        %v1411 = vpop.f32.mrb[0].mxu0
        %v1412 = vpop.f32.mrb[0].mxu0
        %1413 = vdwg.mxu0
        %1414 = vrot.lane.b32.xlu0 %v1011, 112
        %v1415 = vpop.permute.xlu0 %1414
        %v1417 = vsel %vm1109, %v1365, 0
        %v1420 = vsel %vm1139, %v1415, 0
        %1422 = vmatprep.subr.bf16.mxu0 0
        %1423 = vmatpush1.bf16.msra.mxu0 %v1420
        %1424 = vmatprep.subr.bf16.mxu0 0
        %1425 = vmatpush1.bf16.msra.mxu0 0
        %1426 = vmatprep.subr.bf16.mxu0 0
        %1427 = vmatpush1.bf16.msra.mxu0 0
        %1428 = vmatprep.subr.bf16.mxu0 0
        %1429 = vmatpush1.bf16.msra.mxu0 0
        %1430 = vmatprep.subr.bf16.mxu0 0
        %1431 = vmatpush1.bf16.msra.mxu0 0
        %1432 = vmatprep.subr.bf16.mxu0 0
        %1433 = vmatpush1.bf16.msra.mxu0 0
        %1434 = vmatprep.subr.bf16.mxu0 0
        %1435 = vmatpush1.bf16.msra.mxu0 0
        %1436 = vmatprep.subr.bf16.mxu0 0
        %1437 = vmatpush1.bf16.msra.mxu0 0
        %1438 = vmatprep.subr.bf16.mxu0 0
        %1439 = vmatpush1.bf16.msra.mxu0 0
        %1440 = vmatprep.subr.bf16.mxu0 0
        %1441 = vmatpush1.bf16.msra.mxu0 0
        %1442 = vmatprep.subr.bf16.mxu0 0
        %1443 = vmatpush1.bf16.msra.mxu0 0
        %1444 = vmatprep.subr.bf16.mxu0 0
        %1445 = vmatpush1.bf16.msra.mxu0 0
        %1446 = vmatprep.subr.bf16.mxu0 0
        %1447 = vmatpush1.bf16.msra.mxu0 0
        %1448 = vmatprep.subr.bf16.mxu0 0
        %1449 = vmatpush1.bf16.msra.mxu0 0
        %1450 = vmatprep.subr.bf16.mxu0 0
        %1451 = vmatpush1.bf16.msra.mxu0 0
        %1452 = vmatprep.subr.bf16.mxu0 0
        %1453 = vmatpush1.bf16.msra.mxu0 0
        %1454 = vmatprep.mubr.bf16.mxu0 0
        %1455 = vmatmul.mubr.bf16.gmra.mrb[0].mxu0 %v1417
        %v1456 = vpop.f32.mrb[0].mxu0
        %v1457 = vadd.f32 0.0, %v1456
        %v1458 = vpop.f32.mrb[0].mxu0
        %v1459 = vpop.f32.mrb[0].mxu0
        %v1460 = vpop.f32.mrb[0].mxu0
        %1461 = vdwg.mxu0
        %1464 = vrot.lane.b32.xlu0 %v1409, 16
        %v1465 = vpop.permute.xlu0 %1464
        %1466 = vrot.lane.b32.xlu0 %v1457, 16
        %v1467 = vpop.permute.xlu0 %1466
        %vm1470 = vcmask 261248
        %1471 = vst.msk [vmem:[#allocation2] sm:$0xff] %vm1470, %v1465
        %1472 = vst.msk [vmem:[#allocation2 + $0x8] sm:$0xff] %vm1470, %v1467
        %1473 = vrot.lane.b32.xlu0 %v998, 96
        %v1474 = vpop.permute.xlu0 %1473
        %1475 = vrot.lane.b32.xlu0 %v1004, 96
        %v1476 = vpop.permute.xlu0 %1475
        %v1478 = vsel %vm1016, %v1474, 0
        %v1481 = vsel %vm1016, %v1476, 0
        %1483 = vmatprep.subr.bf16.mxu0 0
        %1484 = vmatpush1.bf16.xpose.msra.mxu0 %v1481
        %1485 = vmatprep.subr.bf16.mxu0 0
        %1486 = vmatpush1.bf16.xpose.msra.mxu0 0
        %1487 = vmatprep.subr.bf16.mxu0 0
        %1488 = vmatpush1.bf16.xpose.msra.mxu0 0
        %1489 = vmatprep.subr.bf16.mxu0 0
        %1490 = vmatpush1.bf16.xpose.msra.mxu0 0
        %1491 = vmatprep.subr.bf16.mxu0 0
        %1492 = vmatpush1.bf16.xpose.msra.mxu0 0
        %1493 = vmatprep.subr.bf16.mxu0 0
        %1494 = vmatpush1.bf16.xpose.msra.mxu0 0
        %1495 = vmatprep.subr.bf16.mxu0 0
        %1496 = vmatpush1.bf16.xpose.msra.mxu0 0
        %1497 = vmatprep.subr.bf16.mxu0 0
        %1498 = vmatpush1.bf16.xpose.msra.mxu0 0
        %1499 = vmatprep.subr.bf16.mxu0 0
        %1500 = vmatpush1.bf16.xpose.msra.mxu0 0
        %1501 = vmatprep.subr.bf16.mxu0 0
        %1502 = vmatpush1.bf16.xpose.msra.mxu0 0
        %1503 = vmatprep.subr.bf16.mxu0 0
        %1504 = vmatpush1.bf16.xpose.msra.mxu0 0
        %1505 = vmatprep.subr.bf16.mxu0 0
        %1506 = vmatpush1.bf16.xpose.msra.mxu0 0
        %1507 = vmatprep.subr.bf16.mxu0 0
        %1508 = vmatpush1.bf16.xpose.msra.mxu0 0
        %1509 = vmatprep.subr.bf16.mxu0 0
        %1510 = vmatpush1.bf16.xpose.msra.mxu0 0
        %1511 = vmatprep.subr.bf16.mxu0 0
        %1512 = vmatpush1.bf16.xpose.msra.mxu0 0
        %1513 = vmatprep.subr.bf16.mxu0 0
        %1514 = vmatpush1.bf16.xpose.msra.mxu0 0
        %1515 = vmatprep.mubr.bf16.mxu0 0
        %1516 = vmatmul.mubr.bf16.gmra.mrb[0].mxu0 %v1478
        %v1517 = vpop.f32.mrb[0].mxu0
        %v1518 = vadd.f32 %v1014, %v1517
        %v1519 = vpop.f32.mrb[0].mxu0
        %v1520 = vpop.f32.mrb[0].mxu0
        %v1521 = vpop.f32.mrb[0].mxu0
        %1522 = vdwg.mxu0
        %1523 = vrot.lane.b32.xlu0 %v999, 96
        %v1524 = vpop.permute.xlu0 %1523
        %1525 = vrot.lane.b32.xlu0 %v1005, 96
        %v1526 = vpop.permute.xlu0 %1525
        %v1528 = vsel %vm1016, %v1524, 0
        %v1531 = vsel %vm1016, %v1526, 0
        %1533 = vmatprep.subr.bf16.mxu0 0
        %1534 = vmatpush1.bf16.xpose.msra.mxu0 %v1531
        %1535 = vmatprep.subr.bf16.mxu0 0
        %1536 = vmatpush1.bf16.xpose.msra.mxu0 0
        %1537 = vmatprep.subr.bf16.mxu0 0
        %1538 = vmatpush1.bf16.xpose.msra.mxu0 0
        %1539 = vmatprep.subr.bf16.mxu0 0
        %1540 = vmatpush1.bf16.xpose.msra.mxu0 0
        %1541 = vmatprep.subr.bf16.mxu0 0
        %1542 = vmatpush1.bf16.xpose.msra.mxu0 0
        %1543 = vmatprep.subr.bf16.mxu0 0
        %1544 = vmatpush1.bf16.xpose.msra.mxu0 0
        %1545 = vmatprep.subr.bf16.mxu0 0
        %1546 = vmatpush1.bf16.xpose.msra.mxu0 0
        %1547 = vmatprep.subr.bf16.mxu0 0
        %1548 = vmatpush1.bf16.xpose.msra.mxu0 0
        %1549 = vmatprep.subr.bf16.mxu0 0
        %1550 = vmatpush1.bf16.xpose.msra.mxu0 0
        %1551 = vmatprep.subr.bf16.mxu0 0
        %1552 = vmatpush1.bf16.xpose.msra.mxu0 0
        %1553 = vmatprep.subr.bf16.mxu0 0
        %1554 = vmatpush1.bf16.xpose.msra.mxu0 0
        %1555 = vmatprep.subr.bf16.mxu0 0
        %1556 = vmatpush1.bf16.xpose.msra.mxu0 0
        %1557 = vmatprep.subr.bf16.mxu0 0
        %1558 = vmatpush1.bf16.xpose.msra.mxu0 0
        %1559 = vmatprep.subr.bf16.mxu0 0
        %1560 = vmatpush1.bf16.xpose.msra.mxu0 0
        %1561 = vmatprep.subr.bf16.mxu0 0
        %1562 = vmatpush1.bf16.xpose.msra.mxu0 0
        %1563 = vmatprep.subr.bf16.mxu0 0
        %1564 = vmatpush1.bf16.xpose.msra.mxu0 0
        %1565 = vmatprep.mubr.bf16.mxu0 0
        %1566 = vmatmul.mubr.bf16.gmra.mrb[0].mxu0 %v1528
        %v1567 = vpop.f32.mrb[0].mxu0
        %v1568 = vadd.f32 %v1015, %v1567
        %v1569 = vpop.f32.mrb[0].mxu0
        %v1570 = vpop.f32.mrb[0].mxu0
        %v1571 = vpop.f32.mrb[0].mxu0
        %1572 = vdwg.mxu0
        %v1573 = vsel %vm1109, %v1518, -inf
        %1574 = vmax.xlane.f32.xlu0 %v1573
        %v1575 = vpop.xlane.xlu0 %1574
        %v1576 = vsel %vm1109, %v1568, -inf
        %1577 = vmax.xlane.f32.xlu0 %v1576
        %v1578 = vpop.xlane.xlu0 %1577
        %v1579 = vsub.f32 %v1518, %v1575
        %v1580 = vsub.f32 %v1568, %v1578
        %v1581 = vmul.f32 %v1579, 1.442695
        %v1582 = vpow.pop %v1581
        %v1583 = vmul.f32 %v1580, 1.442695
        %v1584 = vpow.pop %v1583
        %v1585 = vsel %vm1109, %v1582, 0.0
        %1586 = vadd.xlane.f32.xlu0 %v1585
        %v1587 = vpop.xlane.xlu0 %1586
        %v1588 = vsel %vm1109, %v1584, 0.0
        %1589 = vadd.xlane.f32.xlu0 %v1588
        %v1590 = vpop.xlane.xlu0 %1589
        %v1591 = vrcp.pop %v1587
        %v1592 = vmul.f32 %v1582, %v1591
        %v1593 = vrcp.pop %v1590
        %v1594 = vmul.f32 %v1584, %v1593
        %1597 = vrot.lane.b32.xlu0 %v1592, 16
        %v1598 = vpop.permute.xlu0 %1597
        %1599 = vrot.lane.b32.xlu0 %v1594, 16
        %v1600 = vpop.permute.xlu0 %1599
        %vm1603 = vcmask 195712
        %1604 = vst.msk [vmem:[%s631] sm:$0xff] %vm1603, %v1598
        %1605 = vst.msk [vmem:[%s631 + $0x8] sm:$0xff] %vm1603, %v1600
        %v1606 = vpack.c.bf16 %v1592, %v1592
        %v1607 = vpack.c.bf16 %v1594, %v1594
        %1608 = vrot.lane.b32.xlu0 %v1010, 96
        %v1609 = vpop.permute.xlu0 %1608
        %v1611 = vsel %vm1109, %v1606, 0
        %v1614 = vsel %vm1139, %v1609, 0
        %1616 = vmatprep.subr.bf16.mxu0 0
        %1617 = vmatpush1.bf16.msra.mxu0 %v1614
        %1618 = vmatprep.subr.bf16.mxu0 0
        %1619 = vmatpush1.bf16.msra.mxu0 0
        %1620 = vmatprep.subr.bf16.mxu0 0
        %1621 = vmatpush1.bf16.msra.mxu0 0
        %1622 = vmatprep.subr.bf16.mxu0 0
        %1623 = vmatpush1.bf16.msra.mxu0 0
        %1624 = vmatprep.subr.bf16.mxu0 0
        %1625 = vmatpush1.bf16.msra.mxu0 0
        %1626 = vmatprep.subr.bf16.mxu0 0
        %1627 = vmatpush1.bf16.msra.mxu0 0
        %1628 = vmatprep.subr.bf16.mxu0 0
        %1629 = vmatpush1.bf16.msra.mxu0 0
        %1630 = vmatprep.subr.bf16.mxu0 0
        %1631 = vmatpush1.bf16.msra.mxu0 0
        %1632 = vmatprep.subr.bf16.mxu0 0
        %1633 = vmatpush1.bf16.msra.mxu0 0
        %1634 = vmatprep.subr.bf16.mxu0 0
        %1635 = vmatpush1.bf16.msra.mxu0 0
        %1636 = vmatprep.subr.bf16.mxu0 0
        %1637 = vmatpush1.bf16.msra.mxu0 0
        %1638 = vmatprep.subr.bf16.mxu0 0
        %1639 = vmatpush1.bf16.msra.mxu0 0
        %1640 = vmatprep.subr.bf16.mxu0 0
        %1641 = vmatpush1.bf16.msra.mxu0 0
        %1642 = vmatprep.subr.bf16.mxu0 0
        %1643 = vmatpush1.bf16.msra.mxu0 0
        %1644 = vmatprep.subr.bf16.mxu0 0
        %1645 = vmatpush1.bf16.msra.mxu0 0
        %1646 = vmatprep.subr.bf16.mxu0 0
        %1647 = vmatpush1.bf16.msra.mxu0 0
        %1648 = vmatprep.mubr.bf16.mxu0 0
        %1649 = vmatmul.mubr.bf16.gmra.mrb[0].mxu0 %v1611
        %v1650 = vpop.f32.mrb[0].mxu0
        %v1651 = vadd.f32 0.0, %v1650
        %v1652 = vpop.f32.mrb[0].mxu0
        %v1653 = vpop.f32.mrb[0].mxu0
        %v1654 = vpop.f32.mrb[0].mxu0
        %1655 = vdwg.mxu0
        %1656 = vrot.lane.b32.xlu0 %v1011, 96
        %v1657 = vpop.permute.xlu0 %1656
        %v1659 = vsel %vm1109, %v1607, 0
        %v1662 = vsel %vm1139, %v1657, 0
        %1664 = vmatprep.subr.bf16.mxu0 0
        %1665 = vmatpush1.bf16.msra.mxu0 %v1662
        %1666 = vmatprep.subr.bf16.mxu0 0
        %1667 = vmatpush1.bf16.msra.mxu0 0
        %1668 = vmatprep.subr.bf16.mxu0 0
        %1669 = vmatpush1.bf16.msra.mxu0 0
        %1670 = vmatprep.subr.bf16.mxu0 0
        %1671 = vmatpush1.bf16.msra.mxu0 0
        %1672 = vmatprep.subr.bf16.mxu0 0
        %1673 = vmatpush1.bf16.msra.mxu0 0
        %1674 = vmatprep.subr.bf16.mxu0 0
        %1675 = vmatpush1.bf16.msra.mxu0 0
        %1676 = vmatprep.subr.bf16.mxu0 0
        %1677 = vmatpush1.bf16.msra.mxu0 0
        %1678 = vmatprep.subr.bf16.mxu0 0
        %1679 = vmatpush1.bf16.msra.mxu0 0
        %1680 = vmatprep.subr.bf16.mxu0 0
        %1681 = vmatpush1.bf16.msra.mxu0 0
        %1682 = vmatprep.subr.bf16.mxu0 0
        %1683 = vmatpush1.bf16.msra.mxu0 0
        %1684 = vmatprep.subr.bf16.mxu0 0
        %1685 = vmatpush1.bf16.msra.mxu0 0
        %1686 = vmatprep.subr.bf16.mxu0 0
        %1687 = vmatpush1.bf16.msra.mxu0 0
        %1688 = vmatprep.subr.bf16.mxu0 0
        %1689 = vmatpush1.bf16.msra.mxu0 0
        %1690 = vmatprep.subr.bf16.mxu0 0
        %1691 = vmatpush1.bf16.msra.mxu0 0
        %1692 = vmatprep.subr.bf16.mxu0 0
        %1693 = vmatpush1.bf16.msra.mxu0 0
        %1694 = vmatprep.subr.bf16.mxu0 0
        %1695 = vmatpush1.bf16.msra.mxu0 0
        %1696 = vmatprep.mubr.bf16.mxu0 0
        %1697 = vmatmul.mubr.bf16.gmra.mrb[0].mxu0 %v1659
        %v1698 = vpop.f32.mrb[0].mxu0
        %v1699 = vadd.f32 0.0, %v1698
        %v1700 = vpop.f32.mrb[0].mxu0
        %v1701 = vpop.f32.mrb[0].mxu0
        %v1702 = vpop.f32.mrb[0].mxu0
        %1703 = vdwg.mxu0
        %1706 = vrot.lane.b32.xlu0 %v1651, 32
        %v1707 = vpop.permute.xlu0 %1706
        %1708 = vrot.lane.b32.xlu0 %v1699, 32
        %v1709 = vpop.permute.xlu0 %1708
        %vm1712 = vcmask 392448
        %1713 = vst.msk [vmem:[#allocation2] sm:$0xff] %vm1712, %v1707
        %1714 = vst.msk [vmem:[#allocation2 + $0x8] sm:$0xff] %vm1712, %v1709
        %1715 = vrot.lane.b32.xlu0 %v998, 80
        %v1716 = vpop.permute.xlu0 %1715
        %1717 = vrot.lane.b32.xlu0 %v1004, 80
        %v1718 = vpop.permute.xlu0 %1717
        %v1720 = vsel %vm1016, %v1716, 0
        %v1723 = vsel %vm1016, %v1718, 0
        %1725 = vmatprep.subr.bf16.mxu0 0
        %1726 = vmatpush1.bf16.xpose.msra.mxu0 %v1723
        %1727 = vmatprep.subr.bf16.mxu0 0
        %1728 = vmatpush1.bf16.xpose.msra.mxu0 0
        %1729 = vmatprep.subr.bf16.mxu0 0
        %1730 = vmatpush1.bf16.xpose.msra.mxu0 0
        %1731 = vmatprep.subr.bf16.mxu0 0
        %1732 = vmatpush1.bf16.xpose.msra.mxu0 0
        %1733 = vmatprep.subr.bf16.mxu0 0
        %1734 = vmatpush1.bf16.xpose.msra.mxu0 0
        %1735 = vmatprep.subr.bf16.mxu0 0
        %1736 = vmatpush1.bf16.xpose.msra.mxu0 0
        %1737 = vmatprep.subr.bf16.mxu0 0
        %1738 = vmatpush1.bf16.xpose.msra.mxu0 0
        %1739 = vmatprep.subr.bf16.mxu0 0
        %1740 = vmatpush1.bf16.xpose.msra.mxu0 0
        %1741 = vmatprep.subr.bf16.mxu0 0
        %1742 = vmatpush1.bf16.xpose.msra.mxu0 0
        %1743 = vmatprep.subr.bf16.mxu0 0
        %1744 = vmatpush1.bf16.xpose.msra.mxu0 0
        %1745 = vmatprep.subr.bf16.mxu0 0
        %1746 = vmatpush1.bf16.xpose.msra.mxu0 0
        %1747 = vmatprep.subr.bf16.mxu0 0
        %1748 = vmatpush1.bf16.xpose.msra.mxu0 0
        %1749 = vmatprep.subr.bf16.mxu0 0
        %1750 = vmatpush1.bf16.xpose.msra.mxu0 0
        %1751 = vmatprep.subr.bf16.mxu0 0
        %1752 = vmatpush1.bf16.xpose.msra.mxu0 0
        %1753 = vmatprep.subr.bf16.mxu0 0
        %1754 = vmatpush1.bf16.xpose.msra.mxu0 0
        %1755 = vmatprep.subr.bf16.mxu0 0
        %1756 = vmatpush1.bf16.xpose.msra.mxu0 0
        %1757 = vmatprep.mubr.bf16.mxu0 0
        %1758 = vmatmul.mubr.bf16.gmra.mrb[0].mxu0 %v1720
        %v1759 = vpop.f32.mrb[0].mxu0
        %v1760 = vadd.f32 %v1014, %v1759
        %v1761 = vpop.f32.mrb[0].mxu0
        %v1762 = vpop.f32.mrb[0].mxu0
        %v1763 = vpop.f32.mrb[0].mxu0
        %1764 = vdwg.mxu0
        %1765 = vrot.lane.b32.xlu0 %v999, 80
        %v1766 = vpop.permute.xlu0 %1765
        %1767 = vrot.lane.b32.xlu0 %v1005, 80
        %v1768 = vpop.permute.xlu0 %1767
        %v1770 = vsel %vm1016, %v1766, 0
        %v1773 = vsel %vm1016, %v1768, 0
        %1775 = vmatprep.subr.bf16.mxu0 0
        %1776 = vmatpush1.bf16.xpose.msra.mxu0 %v1773
        %1777 = vmatprep.subr.bf16.mxu0 0
        %1778 = vmatpush1.bf16.xpose.msra.mxu0 0
        %1779 = vmatprep.subr.bf16.mxu0 0
        %1780 = vmatpush1.bf16.xpose.msra.mxu0 0
        %1781 = vmatprep.subr.bf16.mxu0 0
        %1782 = vmatpush1.bf16.xpose.msra.mxu0 0
        %1783 = vmatprep.subr.bf16.mxu0 0
        %1784 = vmatpush1.bf16.xpose.msra.mxu0 0
        %1785 = vmatprep.subr.bf16.mxu0 0
        %1786 = vmatpush1.bf16.xpose.msra.mxu0 0
        %1787 = vmatprep.subr.bf16.mxu0 0
        %1788 = vmatpush1.bf16.xpose.msra.mxu0 0
        %1789 = vmatprep.subr.bf16.mxu0 0
        %1790 = vmatpush1.bf16.xpose.msra.mxu0 0
        %1791 = vmatprep.subr.bf16.mxu0 0
        %1792 = vmatpush1.bf16.xpose.msra.mxu0 0
        %1793 = vmatprep.subr.bf16.mxu0 0
        %1794 = vmatpush1.bf16.xpose.msra.mxu0 0
        %1795 = vmatprep.subr.bf16.mxu0 0
        %1796 = vmatpush1.bf16.xpose.msra.mxu0 0
        %1797 = vmatprep.subr.bf16.mxu0 0
        %1798 = vmatpush1.bf16.xpose.msra.mxu0 0
        %1799 = vmatprep.subr.bf16.mxu0 0
        %1800 = vmatpush1.bf16.xpose.msra.mxu0 0
        %1801 = vmatprep.subr.bf16.mxu0 0
        %1802 = vmatpush1.bf16.xpose.msra.mxu0 0
        %1803 = vmatprep.subr.bf16.mxu0 0
        %1804 = vmatpush1.bf16.xpose.msra.mxu0 0
        %1805 = vmatprep.subr.bf16.mxu0 0
        %1806 = vmatpush1.bf16.xpose.msra.mxu0 0
        %1807 = vmatprep.mubr.bf16.mxu0 0
        %1808 = vmatmul.mubr.bf16.gmra.mrb[0].mxu0 %v1770
        %v1809 = vpop.f32.mrb[0].mxu0
        %v1810 = vadd.f32 %v1015, %v1809
        %v1811 = vpop.f32.mrb[0].mxu0
        %v1812 = vpop.f32.mrb[0].mxu0
        %v1813 = vpop.f32.mrb[0].mxu0
        %1814 = vdwg.mxu0
        %v1815 = vsel %vm1109, %v1760, -inf
        %1816 = vmax.xlane.f32.xlu0 %v1815
        %v1817 = vpop.xlane.xlu0 %1816
        %v1818 = vsel %vm1109, %v1810, -inf
        %1819 = vmax.xlane.f32.xlu0 %v1818
        %v1820 = vpop.xlane.xlu0 %1819
        %v1821 = vsub.f32 %v1760, %v1817
        %v1822 = vsub.f32 %v1810, %v1820
        %v1823 = vmul.f32 %v1821, 1.442695
        %v1824 = vpow.pop %v1823
        %v1825 = vmul.f32 %v1822, 1.442695
        %v1826 = vpow.pop %v1825
        %v1827 = vsel %vm1109, %v1824, 0.0
        %1828 = vadd.xlane.f32.xlu0 %v1827
        %v1829 = vpop.xlane.xlu0 %1828
        %v1830 = vsel %vm1109, %v1826, 0.0
        %1831 = vadd.xlane.f32.xlu0 %v1830
        %v1832 = vpop.xlane.xlu0 %1831
        %v1833 = vrcp.pop %v1829
        %v1834 = vmul.f32 %v1824, %v1833
        %v1835 = vrcp.pop %v1832
        %v1836 = vmul.f32 %v1826, %v1835
        %1839 = vrot.lane.b32.xlu0 %v1834, 24
        %v1840 = vpop.permute.xlu0 %1839
        %1841 = vrot.lane.b32.xlu0 %v1836, 24
        %v1842 = vpop.permute.xlu0 %1841
        %vm1845 = vcmask 261312
        %1846 = vst.msk [vmem:[%s631] sm:$0xff] %vm1845, %v1840
        %1847 = vst.msk [vmem:[%s631 + $0x8] sm:$0xff] %vm1845, %v1842
        %v1848 = vpack.c.bf16 %v1834, %v1834
        %v1849 = vpack.c.bf16 %v1836, %v1836
        %1850 = vrot.lane.b32.xlu0 %v1010, 80
        %v1851 = vpop.permute.xlu0 %1850
        %v1853 = vsel %vm1109, %v1848, 0
        %v1856 = vsel %vm1139, %v1851, 0
        %1858 = vmatprep.subr.bf16.mxu0 0
        %1859 = vmatpush1.bf16.msra.mxu0 %v1856
        %1860 = vmatprep.subr.bf16.mxu0 0
        %1861 = vmatpush1.bf16.msra.mxu0 0
        %1862 = vmatprep.subr.bf16.mxu0 0
        %1863 = vmatpush1.bf16.msra.mxu0 0
        %1864 = vmatprep.subr.bf16.mxu0 0
        %1865 = vmatpush1.bf16.msra.mxu0 0
        %1866 = vmatprep.subr.bf16.mxu0 0
        %1867 = vmatpush1.bf16.msra.mxu0 0
        %1868 = vmatprep.subr.bf16.mxu0 0
        %1869 = vmatpush1.bf16.msra.mxu0 0
        %1870 = vmatprep.subr.bf16.mxu0 0
        %1871 = vmatpush1.bf16.msra.mxu0 0
        %1872 = vmatprep.subr.bf16.mxu0 0
        %1873 = vmatpush1.bf16.msra.mxu0 0
        %1874 = vmatprep.subr.bf16.mxu0 0
        %1875 = vmatpush1.bf16.msra.mxu0 0
        %1876 = vmatprep.subr.bf16.mxu0 0
        %1877 = vmatpush1.bf16.msra.mxu0 0
        %1878 = vmatprep.subr.bf16.mxu0 0
        %1879 = vmatpush1.bf16.msra.mxu0 0
        %1880 = vmatprep.subr.bf16.mxu0 0
        %1881 = vmatpush1.bf16.msra.mxu0 0
        %1882 = vmatprep.subr.bf16.mxu0 0
        %1883 = vmatpush1.bf16.msra.mxu0 0
        %1884 = vmatprep.subr.bf16.mxu0 0
        %1885 = vmatpush1.bf16.msra.mxu0 0
        %1886 = vmatprep.subr.bf16.mxu0 0
        %1887 = vmatpush1.bf16.msra.mxu0 0
        %1888 = vmatprep.subr.bf16.mxu0 0
        %1889 = vmatpush1.bf16.msra.mxu0 0
        %1890 = vmatprep.mubr.bf16.mxu0 0
        %1891 = vmatmul.mubr.bf16.gmra.mrb[0].mxu0 %v1853
        %v1892 = vpop.f32.mrb[0].mxu0
        %v1893 = vadd.f32 0.0, %v1892
        %v1894 = vpop.f32.mrb[0].mxu0
        %v1895 = vpop.f32.mrb[0].mxu0
        %v1896 = vpop.f32.mrb[0].mxu0
        %1897 = vdwg.mxu0
        %1898 = vrot.lane.b32.xlu0 %v1011, 80
        %v1899 = vpop.permute.xlu0 %1898
        %v1901 = vsel %vm1109, %v1849, 0
        %v1904 = vsel %vm1139, %v1899, 0
        %1906 = vmatprep.subr.bf16.mxu0 0
        %1907 = vmatpush1.bf16.msra.mxu0 %v1904
        %1908 = vmatprep.subr.bf16.mxu0 0
        %1909 = vmatpush1.bf16.msra.mxu0 0
        %1910 = vmatprep.subr.bf16.mxu0 0
        %1911 = vmatpush1.bf16.msra.mxu0 0
        %1912 = vmatprep.subr.bf16.mxu0 0
        %1913 = vmatpush1.bf16.msra.mxu0 0
        %1914 = vmatprep.subr.bf16.mxu0 0
        %1915 = vmatpush1.bf16.msra.mxu0 0
        %1916 = vmatprep.subr.bf16.mxu0 0
        %1917 = vmatpush1.bf16.msra.mxu0 0
        %1918 = vmatprep.subr.bf16.mxu0 0
        %1919 = vmatpush1.bf16.msra.mxu0 0
        %1920 = vmatprep.subr.bf16.mxu0 0
        %1921 = vmatpush1.bf16.msra.mxu0 0
        %1922 = vmatprep.subr.bf16.mxu0 0
        %1923 = vmatpush1.bf16.msra.mxu0 0
        %1924 = vmatprep.subr.bf16.mxu0 0
        %1925 = vmatpush1.bf16.msra.mxu0 0
        %1926 = vmatprep.subr.bf16.mxu0 0
        %1927 = vmatpush1.bf16.msra.mxu0 0
        %1928 = vmatprep.subr.bf16.mxu0 0
        %1929 = vmatpush1.bf16.msra.mxu0 0
        %1930 = vmatprep.subr.bf16.mxu0 0
        %1931 = vmatpush1.bf16.msra.mxu0 0
        %1932 = vmatprep.subr.bf16.mxu0 0
        %1933 = vmatpush1.bf16.msra.mxu0 0
        %1934 = vmatprep.subr.bf16.mxu0 0
        %1935 = vmatpush1.bf16.msra.mxu0 0
        %1936 = vmatprep.subr.bf16.mxu0 0
        %1937 = vmatpush1.bf16.msra.mxu0 0
        %1938 = vmatprep.mubr.bf16.mxu0 0
        %1939 = vmatmul.mubr.bf16.gmra.mrb[0].mxu0 %v1901
        %v1940 = vpop.f32.mrb[0].mxu0
        %v1941 = vadd.f32 0.0, %v1940
        %v1942 = vpop.f32.mrb[0].mxu0
        %v1943 = vpop.f32.mrb[0].mxu0
        %v1944 = vpop.f32.mrb[0].mxu0
        %1945 = vdwg.mxu0
        %1948 = vrot.lane.b32.xlu0 %v1893, 48
        %v1949 = vpop.permute.xlu0 %1948
        %1950 = vrot.lane.b32.xlu0 %v1941, 48
        %v1951 = vpop.permute.xlu0 %1950
        %vm1954 = vcmask 523648
        %1955 = vst.msk [vmem:[#allocation2] sm:$0xff] %vm1954, %v1949
        %1956 = vst.msk [vmem:[#allocation2 + $0x8] sm:$0xff] %vm1954, %v1951
        %1957 = vrot.lane.b32.xlu0 %v998, 64
        %v1958 = vpop.permute.xlu0 %1957
        %1959 = vrot.lane.b32.xlu0 %v1004, 64
        %v1960 = vpop.permute.xlu0 %1959
        %v1962 = vsel %vm1016, %v1958, 0
        %v1965 = vsel %vm1016, %v1960, 0
        %1967 = vmatprep.subr.bf16.mxu0 0
        %1968 = vmatpush1.bf16.xpose.msra.mxu0 %v1965
        %1969 = vmatprep.subr.bf16.mxu0 0
        %1970 = vmatpush1.bf16.xpose.msra.mxu0 0
        %1971 = vmatprep.subr.bf16.mxu0 0
        %1972 = vmatpush1.bf16.xpose.msra.mxu0 0
        %1973 = vmatprep.subr.bf16.mxu0 0
        %1974 = vmatpush1.bf16.xpose.msra.mxu0 0
        %1975 = vmatprep.subr.bf16.mxu0 0
        %1976 = vmatpush1.bf16.xpose.msra.mxu0 0
        %1977 = vmatprep.subr.bf16.mxu0 0
        %1978 = vmatpush1.bf16.xpose.msra.mxu0 0
        %1979 = vmatprep.subr.bf16.mxu0 0
        %1980 = vmatpush1.bf16.xpose.msra.mxu0 0
        %1981 = vmatprep.subr.bf16.mxu0 0
        %1982 = vmatpush1.bf16.xpose.msra.mxu0 0
        %1983 = vmatprep.subr.bf16.mxu0 0
        %1984 = vmatpush1.bf16.xpose.msra.mxu0 0
        %1985 = vmatprep.subr.bf16.mxu0 0
        %1986 = vmatpush1.bf16.xpose.msra.mxu0 0
        %1987 = vmatprep.subr.bf16.mxu0 0
        %1988 = vmatpush1.bf16.xpose.msra.mxu0 0
        %1989 = vmatprep.subr.bf16.mxu0 0
        %1990 = vmatpush1.bf16.xpose.msra.mxu0 0
        %1991 = vmatprep.subr.bf16.mxu0 0
        %1992 = vmatpush1.bf16.xpose.msra.mxu0 0
        %1993 = vmatprep.subr.bf16.mxu0 0
        %1994 = vmatpush1.bf16.xpose.msra.mxu0 0
        %1995 = vmatprep.subr.bf16.mxu0 0
        %1996 = vmatpush1.bf16.xpose.msra.mxu0 0
        %1997 = vmatprep.subr.bf16.mxu0 0
        %1998 = vmatpush1.bf16.xpose.msra.mxu0 0
        %1999 = vmatprep.mubr.bf16.mxu0 0
        %2000 = vmatmul.mubr.bf16.gmra.mrb[0].mxu0 %v1962
        %v2001 = vpop.f32.mrb[0].mxu0
        %v2002 = vadd.f32 %v1014, %v2001
        %v2003 = vpop.f32.mrb[0].mxu0
        %v2004 = vpop.f32.mrb[0].mxu0
        %v2005 = vpop.f32.mrb[0].mxu0
        %2006 = vdwg.mxu0
        %2007 = vrot.lane.b32.xlu0 %v999, 64
        %v2008 = vpop.permute.xlu0 %2007
        %2009 = vrot.lane.b32.xlu0 %v1005, 64
        %v2010 = vpop.permute.xlu0 %2009
        %v2012 = vsel %vm1016, %v2008, 0
        %v2015 = vsel %vm1016, %v2010, 0
        %2017 = vmatprep.subr.bf16.mxu0 0
        %2018 = vmatpush1.bf16.xpose.msra.mxu0 %v2015
        %2019 = vmatprep.subr.bf16.mxu0 0
        %2020 = vmatpush1.bf16.xpose.msra.mxu0 0
        %2021 = vmatprep.subr.bf16.mxu0 0
        %2022 = vmatpush1.bf16.xpose.msra.mxu0 0
        %2023 = vmatprep.subr.bf16.mxu0 0
        %2024 = vmatpush1.bf16.xpose.msra.mxu0 0
        %2025 = vmatprep.subr.bf16.mxu0 0
        %2026 = vmatpush1.bf16.xpose.msra.mxu0 0
        %2027 = vmatprep.subr.bf16.mxu0 0
        %2028 = vmatpush1.bf16.xpose.msra.mxu0 0
        %2029 = vmatprep.subr.bf16.mxu0 0
        %2030 = vmatpush1.bf16.xpose.msra.mxu0 0
        %2031 = vmatprep.subr.bf16.mxu0 0
        %2032 = vmatpush1.bf16.xpose.msra.mxu0 0
        %2033 = vmatprep.subr.bf16.mxu0 0
        %2034 = vmatpush1.bf16.xpose.msra.mxu0 0
        %2035 = vmatprep.subr.bf16.mxu0 0
        %2036 = vmatpush1.bf16.xpose.msra.mxu0 0
        %2037 = vmatprep.subr.bf16.mxu0 0
        %2038 = vmatpush1.bf16.xpose.msra.mxu0 0
        %2039 = vmatprep.subr.bf16.mxu0 0
        %2040 = vmatpush1.bf16.xpose.msra.mxu0 0
        %2041 = vmatprep.subr.bf16.mxu0 0
        %2042 = vmatpush1.bf16.xpose.msra.mxu0 0
        %2043 = vmatprep.subr.bf16.mxu0 0
        %2044 = vmatpush1.bf16.xpose.msra.mxu0 0
        %2045 = vmatprep.subr.bf16.mxu0 0
        %2046 = vmatpush1.bf16.xpose.msra.mxu0 0
        %2047 = vmatprep.subr.bf16.mxu0 0
        %2048 = vmatpush1.bf16.xpose.msra.mxu0 0
        %2049 = vmatprep.mubr.bf16.mxu0 0
        %2050 = vmatmul.mubr.bf16.gmra.mrb[0].mxu0 %v2012
        %v2051 = vpop.f32.mrb[0].mxu0
        %v2052 = vadd.f32 %v1015, %v2051
        %v2053 = vpop.f32.mrb[0].mxu0
        %v2054 = vpop.f32.mrb[0].mxu0
        %v2055 = vpop.f32.mrb[0].mxu0
        %2056 = vdwg.mxu0
        %v2057 = vsel %vm1109, %v2002, -inf
        %2058 = vmax.xlane.f32.xlu0 %v2057
        %v2059 = vpop.xlane.xlu0 %2058
        %v2060 = vsel %vm1109, %v2052, -inf
        %2061 = vmax.xlane.f32.xlu0 %v2060
        %v2062 = vpop.xlane.xlu0 %2061
        %v2063 = vsub.f32 %v2002, %v2059
        %v2064 = vsub.f32 %v2052, %v2062
        %v2065 = vmul.f32 %v2063, 1.442695
        %v2066 = vpow.pop %v2065
        %v2067 = vmul.f32 %v2064, 1.442695
        %v2068 = vpow.pop %v2067
        %v2069 = vsel %vm1109, %v2066, 0.0
        %2070 = vadd.xlane.f32.xlu0 %v2069
        %v2071 = vpop.xlane.xlu0 %2070
        %v2072 = vsel %vm1109, %v2068, 0.0
        %2073 = vadd.xlane.f32.xlu0 %v2072
        %v2074 = vpop.xlane.xlu0 %2073
        %v2075 = vrcp.pop %v2071
        %v2076 = vmul.f32 %v2066, %v2075
        %v2077 = vrcp.pop %v2074
        %v2078 = vmul.f32 %v2068, %v2077
        %2081 = vrot.lane.b32.xlu0 %v2076, 32
        %v2082 = vpop.permute.xlu0 %2081
        %2083 = vrot.lane.b32.xlu0 %v2078, 32
        %v2084 = vpop.permute.xlu0 %2083
        %vm2087 = vcmask 326912
        %2088 = vst.msk [vmem:[%s631] sm:$0xff] %vm2087, %v2082
        %2089 = vst.msk [vmem:[%s631 + $0x8] sm:$0xff] %vm2087, %v2084
        %v2090 = vpack.c.bf16 %v2076, %v2076
        %v2091 = vpack.c.bf16 %v2078, %v2078
        %2092 = vrot.lane.b32.xlu0 %v1010, 64
        %v2093 = vpop.permute.xlu0 %2092
        %v2095 = vsel %vm1109, %v2090, 0
        %v2098 = vsel %vm1139, %v2093, 0
        %2100 = vmatprep.subr.bf16.mxu0 0
        %2101 = vmatpush1.bf16.msra.mxu0 %v2098
        %2102 = vmatprep.subr.bf16.mxu0 0
        %2103 = vmatpush1.bf16.msra.mxu0 0
        %2104 = vmatprep.subr.bf16.mxu0 0
        %2105 = vmatpush1.bf16.msra.mxu0 0
        %2106 = vmatprep.subr.bf16.mxu0 0
        %2107 = vmatpush1.bf16.msra.mxu0 0
        %2108 = vmatprep.subr.bf16.mxu0 0
        %2109 = vmatpush1.bf16.msra.mxu0 0
        %2110 = vmatprep.subr.bf16.mxu0 0
        %2111 = vmatpush1.bf16.msra.mxu0 0
        %2112 = vmatprep.subr.bf16.mxu0 0
        %2113 = vmatpush1.bf16.msra.mxu0 0
        %2114 = vmatprep.subr.bf16.mxu0 0
        %2115 = vmatpush1.bf16.msra.mxu0 0
        %2116 = vmatprep.subr.bf16.mxu0 0
        %2117 = vmatpush1.bf16.msra.mxu0 0
        %2118 = vmatprep.subr.bf16.mxu0 0
        %2119 = vmatpush1.bf16.msra.mxu0 0
        %2120 = vmatprep.subr.bf16.mxu0 0
        %2121 = vmatpush1.bf16.msra.mxu0 0
        %2122 = vmatprep.subr.bf16.mxu0 0
        %2123 = vmatpush1.bf16.msra.mxu0 0
        %2124 = vmatprep.subr.bf16.mxu0 0
        %2125 = vmatpush1.bf16.msra.mxu0 0
        %2126 = vmatprep.subr.bf16.mxu0 0
        %2127 = vmatpush1.bf16.msra.mxu0 0
        %2128 = vmatprep.subr.bf16.mxu0 0
        %2129 = vmatpush1.bf16.msra.mxu0 0
        %2130 = vmatprep.subr.bf16.mxu0 0
        %2131 = vmatpush1.bf16.msra.mxu0 0
        %2132 = vmatprep.mubr.bf16.mxu0 0
        %2133 = vmatmul.mubr.bf16.gmra.mrb[0].mxu0 %v2095
        %v2134 = vpop.f32.mrb[0].mxu0
        %v2135 = vadd.f32 0.0, %v2134
        %v2136 = vpop.f32.mrb[0].mxu0
        %v2137 = vpop.f32.mrb[0].mxu0
        %v2138 = vpop.f32.mrb[0].mxu0
        %2139 = vdwg.mxu0
        %2140 = vrot.lane.b32.xlu0 %v1011, 64
        %v2141 = vpop.permute.xlu0 %2140
        %v2143 = vsel %vm1109, %v2091, 0
        %v2146 = vsel %vm1139, %v2141, 0
        %2148 = vmatprep.subr.bf16.mxu0 0
        %2149 = vmatpush1.bf16.msra.mxu0 %v2146
        %2150 = vmatprep.subr.bf16.mxu0 0
        %2151 = vmatpush1.bf16.msra.mxu0 0
        %2152 = vmatprep.subr.bf16.mxu0 0
        %2153 = vmatpush1.bf16.msra.mxu0 0
        %2154 = vmatprep.subr.bf16.mxu0 0
        %2155 = vmatpush1.bf16.msra.mxu0 0
        %2156 = vmatprep.subr.bf16.mxu0 0
        %2157 = vmatpush1.bf16.msra.mxu0 0
        %2158 = vmatprep.subr.bf16.mxu0 0
        %2159 = vmatpush1.bf16.msra.mxu0 0
        %2160 = vmatprep.subr.bf16.mxu0 0
        %2161 = vmatpush1.bf16.msra.mxu0 0
        %2162 = vmatprep.subr.bf16.mxu0 0
        %2163 = vmatpush1.bf16.msra.mxu0 0
        %2164 = vmatprep.subr.bf16.mxu0 0
        %2165 = vmatpush1.bf16.msra.mxu0 0
        %2166 = vmatprep.subr.bf16.mxu0 0
        %2167 = vmatpush1.bf16.msra.mxu0 0
        %2168 = vmatprep.subr.bf16.mxu0 0
        %2169 = vmatpush1.bf16.msra.mxu0 0
        %2170 = vmatprep.subr.bf16.mxu0 0
        %2171 = vmatpush1.bf16.msra.mxu0 0
        %2172 = vmatprep.subr.bf16.mxu0 0
        %2173 = vmatpush1.bf16.msra.mxu0 0
        %2174 = vmatprep.subr.bf16.mxu0 0
        %2175 = vmatpush1.bf16.msra.mxu0 0
        %2176 = vmatprep.subr.bf16.mxu0 0
        %2177 = vmatpush1.bf16.msra.mxu0 0
        %2178 = vmatprep.subr.bf16.mxu0 0
        %2179 = vmatpush1.bf16.msra.mxu0 0
        %2180 = vmatprep.mubr.bf16.mxu0 0
        %2181 = vmatmul.mubr.bf16.gmra.mrb[0].mxu0 %v2143
        %v2182 = vpop.f32.mrb[0].mxu0
        %v2183 = vadd.f32 0.0, %v2182
        %v2184 = vpop.f32.mrb[0].mxu0
        %v2185 = vpop.f32.mrb[0].mxu0
        %v2186 = vpop.f32.mrb[0].mxu0
        %2187 = vdwg.mxu0
        %2190 = vrot.lane.b32.xlu0 %v2135, 64
        %v2191 = vpop.permute.xlu0 %2190
        %2192 = vrot.lane.b32.xlu0 %v2183, 64
        %v2193 = vpop.permute.xlu0 %2192
        %vm2196 = vcmask 654848
        %2197 = vst.msk [vmem:[#allocation2] sm:$0xff] %vm2196, %v2191
        %2198 = vst.msk [vmem:[#allocation2 + $0x8] sm:$0xff] %vm2196, %v2193
        %2199 = vrot.lane.b32.xlu0 %v998, 48
        %v2200 = vpop.permute.xlu0 %2199
        %2201 = vrot.lane.b32.xlu0 %v1004, 48
        %v2202 = vpop.permute.xlu0 %2201
        %v2204 = vsel %vm1016, %v2200, 0
        %v2207 = vsel %vm1016, %v2202, 0
        %2209 = vmatprep.subr.bf16.mxu0 0
        %2210 = vmatpush1.bf16.xpose.msra.mxu0 %v2207
        %2211 = vmatprep.subr.bf16.mxu0 0
        %2212 = vmatpush1.bf16.xpose.msra.mxu0 0
        %2213 = vmatprep.subr.bf16.mxu0 0
        %2214 = vmatpush1.bf16.xpose.msra.mxu0 0
        %2215 = vmatprep.subr.bf16.mxu0 0
        %2216 = vmatpush1.bf16.xpose.msra.mxu0 0
        %2217 = vmatprep.subr.bf16.mxu0 0
        %2218 = vmatpush1.bf16.xpose.msra.mxu0 0
        %2219 = vmatprep.subr.bf16.mxu0 0
        %2220 = vmatpush1.bf16.xpose.msra.mxu0 0
        %2221 = vmatprep.subr.bf16.mxu0 0
        %2222 = vmatpush1.bf16.xpose.msra.mxu0 0
        %2223 = vmatprep.subr.bf16.mxu0 0
        %2224 = vmatpush1.bf16.xpose.msra.mxu0 0
        %2225 = vmatprep.subr.bf16.mxu0 0
        %2226 = vmatpush1.bf16.xpose.msra.mxu0 0
        %2227 = vmatprep.subr.bf16.mxu0 0
        %2228 = vmatpush1.bf16.xpose.msra.mxu0 0
        %2229 = vmatprep.subr.bf16.mxu0 0
        %2230 = vmatpush1.bf16.xpose.msra.mxu0 0
        %2231 = vmatprep.subr.bf16.mxu0 0
        %2232 = vmatpush1.bf16.xpose.msra.mxu0 0
        %2233 = vmatprep.subr.bf16.mxu0 0
        %2234 = vmatpush1.bf16.xpose.msra.mxu0 0
        %2235 = vmatprep.subr.bf16.mxu0 0
        %2236 = vmatpush1.bf16.xpose.msra.mxu0 0
        %2237 = vmatprep.subr.bf16.mxu0 0
        %2238 = vmatpush1.bf16.xpose.msra.mxu0 0
        %2239 = vmatprep.subr.bf16.mxu0 0
        %2240 = vmatpush1.bf16.xpose.msra.mxu0 0
        %2241 = vmatprep.mubr.bf16.mxu0 0
        %2242 = vmatmul.mubr.bf16.gmra.mrb[0].mxu0 %v2204
        %v2243 = vpop.f32.mrb[0].mxu0
        %v2244 = vadd.f32 %v1014, %v2243
        %v2245 = vpop.f32.mrb[0].mxu0
        %v2246 = vpop.f32.mrb[0].mxu0
        %v2247 = vpop.f32.mrb[0].mxu0
        %2248 = vdwg.mxu0
        %2249 = vrot.lane.b32.xlu0 %v999, 48
        %v2250 = vpop.permute.xlu0 %2249
        %2251 = vrot.lane.b32.xlu0 %v1005, 48
        %v2252 = vpop.permute.xlu0 %2251
        %v2254 = vsel %vm1016, %v2250, 0
        %v2257 = vsel %vm1016, %v2252, 0
        %2259 = vmatprep.subr.bf16.mxu0 0
        %2260 = vmatpush1.bf16.xpose.msra.mxu0 %v2257
        %2261 = vmatprep.subr.bf16.mxu0 0
        %2262 = vmatpush1.bf16.xpose.msra.mxu0 0
        %2263 = vmatprep.subr.bf16.mxu0 0
        %2264 = vmatpush1.bf16.xpose.msra.mxu0 0
        %2265 = vmatprep.subr.bf16.mxu0 0
        %2266 = vmatpush1.bf16.xpose.msra.mxu0 0
        %2267 = vmatprep.subr.bf16.mxu0 0
        %2268 = vmatpush1.bf16.xpose.msra.mxu0 0
        %2269 = vmatprep.subr.bf16.mxu0 0
        %2270 = vmatpush1.bf16.xpose.msra.mxu0 0
        %2271 = vmatprep.subr.bf16.mxu0 0
        %2272 = vmatpush1.bf16.xpose.msra.mxu0 0
        %2273 = vmatprep.subr.bf16.mxu0 0
        %2274 = vmatpush1.bf16.xpose.msra.mxu0 0
        %2275 = vmatprep.subr.bf16.mxu0 0
        %2276 = vmatpush1.bf16.xpose.msra.mxu0 0
        %2277 = vmatprep.subr.bf16.mxu0 0
        %2278 = vmatpush1.bf16.xpose.msra.mxu0 0
        %2279 = vmatprep.subr.bf16.mxu0 0
        %2280 = vmatpush1.bf16.xpose.msra.mxu0 0
        %2281 = vmatprep.subr.bf16.mxu0 0
        %2282 = vmatpush1.bf16.xpose.msra.mxu0 0
        %2283 = vmatprep.subr.bf16.mxu0 0
        %2284 = vmatpush1.bf16.xpose.msra.mxu0 0
        %2285 = vmatprep.subr.bf16.mxu0 0
        %2286 = vmatpush1.bf16.xpose.msra.mxu0 0
        %2287 = vmatprep.subr.bf16.mxu0 0
        %2288 = vmatpush1.bf16.xpose.msra.mxu0 0
        %2289 = vmatprep.subr.bf16.mxu0 0
        %2290 = vmatpush1.bf16.xpose.msra.mxu0 0
        %2291 = vmatprep.mubr.bf16.mxu0 0
        %2292 = vmatmul.mubr.bf16.gmra.mrb[0].mxu0 %v2254
        %v2293 = vpop.f32.mrb[0].mxu0
        %v2294 = vadd.f32 %v1015, %v2293
        %v2295 = vpop.f32.mrb[0].mxu0
        %v2296 = vpop.f32.mrb[0].mxu0
        %v2297 = vpop.f32.mrb[0].mxu0
        %2298 = vdwg.mxu0
        %v2299 = vsel %vm1109, %v2244, -inf
        %2300 = vmax.xlane.f32.xlu0 %v2299
        %v2301 = vpop.xlane.xlu0 %2300
        %v2302 = vsel %vm1109, %v2294, -inf
        %2303 = vmax.xlane.f32.xlu0 %v2302
        %v2304 = vpop.xlane.xlu0 %2303
        %v2305 = vsub.f32 %v2244, %v2301
        %v2306 = vsub.f32 %v2294, %v2304
        %v2307 = vmul.f32 %v2305, 1.442695
        %v2308 = vpow.pop %v2307
        %v2309 = vmul.f32 %v2306, 1.442695
        %v2310 = vpow.pop %v2309
        %v2311 = vsel %vm1109, %v2308, 0.0
        %2312 = vadd.xlane.f32.xlu0 %v2311
        %v2313 = vpop.xlane.xlu0 %2312
        %v2314 = vsel %vm1109, %v2310, 0.0
        %2315 = vadd.xlane.f32.xlu0 %v2314
        %v2316 = vpop.xlane.xlu0 %2315
        %v2317 = vrcp.pop %v2313
        %v2318 = vmul.f32 %v2308, %v2317
        %v2319 = vrcp.pop %v2316
        %v2320 = vmul.f32 %v2310, %v2319
        %2323 = vrot.lane.b32.xlu0 %v2318, 40
        %v2324 = vpop.permute.xlu0 %2323
        %2325 = vrot.lane.b32.xlu0 %v2320, 40
        %v2326 = vpop.permute.xlu0 %2325
        %vm2329 = vcmask 392512
        %2330 = vst.msk [vmem:[%s631] sm:$0xff] %vm2329, %v2324
        %2331 = vst.msk [vmem:[%s631 + $0x8] sm:$0xff] %vm2329, %v2326
        %v2332 = vpack.c.bf16 %v2318, %v2318
        %v2333 = vpack.c.bf16 %v2320, %v2320
        %2334 = vrot.lane.b32.xlu0 %v1010, 48
        %v2335 = vpop.permute.xlu0 %2334
        %v2337 = vsel %vm1109, %v2332, 0
        %v2340 = vsel %vm1139, %v2335, 0
        %2342 = vmatprep.subr.bf16.mxu0 0
        %2343 = vmatpush1.bf16.msra.mxu0 %v2340
        %2344 = vmatprep.subr.bf16.mxu0 0
        %2345 = vmatpush1.bf16.msra.mxu0 0
        %2346 = vmatprep.subr.bf16.mxu0 0
        %2347 = vmatpush1.bf16.msra.mxu0 0
        %2348 = vmatprep.subr.bf16.mxu0 0
        %2349 = vmatpush1.bf16.msra.mxu0 0
        %2350 = vmatprep.subr.bf16.mxu0 0
        %2351 = vmatpush1.bf16.msra.mxu0 0
        %2352 = vmatprep.subr.bf16.mxu0 0
        %2353 = vmatpush1.bf16.msra.mxu0 0
        %2354 = vmatprep.subr.bf16.mxu0 0
        %2355 = vmatpush1.bf16.msra.mxu0 0
        %2356 = vmatprep.subr.bf16.mxu0 0
        %2357 = vmatpush1.bf16.msra.mxu0 0
        %2358 = vmatprep.subr.bf16.mxu0 0
        %2359 = vmatpush1.bf16.msra.mxu0 0
        %2360 = vmatprep.subr.bf16.mxu0 0
        %2361 = vmatpush1.bf16.msra.mxu0 0
        %2362 = vmatprep.subr.bf16.mxu0 0
        %2363 = vmatpush1.bf16.msra.mxu0 0
        %2364 = vmatprep.subr.bf16.mxu0 0
        %2365 = vmatpush1.bf16.msra.mxu0 0
        %2366 = vmatprep.subr.bf16.mxu0 0
        %2367 = vmatpush1.bf16.msra.mxu0 0
        %2368 = vmatprep.subr.bf16.mxu0 0
        %2369 = vmatpush1.bf16.msra.mxu0 0
        %2370 = vmatprep.subr.bf16.mxu0 0
        %2371 = vmatpush1.bf16.msra.mxu0 0
        %2372 = vmatprep.subr.bf16.mxu0 0
        %2373 = vmatpush1.bf16.msra.mxu0 0
        %2374 = vmatprep.mubr.bf16.mxu0 0
        %2375 = vmatmul.mubr.bf16.gmra.mrb[0].mxu0 %v2337
        %v2376 = vpop.f32.mrb[0].mxu0
        %v2377 = vadd.f32 0.0, %v2376
        %v2378 = vpop.f32.mrb[0].mxu0
        %v2379 = vpop.f32.mrb[0].mxu0
        %v2380 = vpop.f32.mrb[0].mxu0
        %2381 = vdwg.mxu0
        %2382 = vrot.lane.b32.xlu0 %v1011, 48
        %v2383 = vpop.permute.xlu0 %2382
        %v2385 = vsel %vm1109, %v2333, 0
        %v2388 = vsel %vm1139, %v2383, 0
        %2390 = vmatprep.subr.bf16.mxu0 0
        %2391 = vmatpush1.bf16.msra.mxu0 %v2388
        %2392 = vmatprep.subr.bf16.mxu0 0
        %2393 = vmatpush1.bf16.msra.mxu0 0
        %2394 = vmatprep.subr.bf16.mxu0 0
        %2395 = vmatpush1.bf16.msra.mxu0 0
        %2396 = vmatprep.subr.bf16.mxu0 0
        %2397 = vmatpush1.bf16.msra.mxu0 0
        %2398 = vmatprep.subr.bf16.mxu0 0
        %2399 = vmatpush1.bf16.msra.mxu0 0
        %2400 = vmatprep.subr.bf16.mxu0 0
        %2401 = vmatpush1.bf16.msra.mxu0 0
        %2402 = vmatprep.subr.bf16.mxu0 0
        %2403 = vmatpush1.bf16.msra.mxu0 0
        %2404 = vmatprep.subr.bf16.mxu0 0
        %2405 = vmatpush1.bf16.msra.mxu0 0
        %2406 = vmatprep.subr.bf16.mxu0 0
        %2407 = vmatpush1.bf16.msra.mxu0 0
        %2408 = vmatprep.subr.bf16.mxu0 0
        %2409 = vmatpush1.bf16.msra.mxu0 0
        %2410 = vmatprep.subr.bf16.mxu0 0
        %2411 = vmatpush1.bf16.msra.mxu0 0
        %2412 = vmatprep.subr.bf16.mxu0 0
        %2413 = vmatpush1.bf16.msra.mxu0 0
        %2414 = vmatprep.subr.bf16.mxu0 0
        %2415 = vmatpush1.bf16.msra.mxu0 0
        %2416 = vmatprep.subr.bf16.mxu0 0
        %2417 = vmatpush1.bf16.msra.mxu0 0
        %2418 = vmatprep.subr.bf16.mxu0 0
        %2419 = vmatpush1.bf16.msra.mxu0 0
        %2420 = vmatprep.subr.bf16.mxu0 0
        %2421 = vmatpush1.bf16.msra.mxu0 0
        %2422 = vmatprep.mubr.bf16.mxu0 0
        %2423 = vmatmul.mubr.bf16.gmra.mrb[0].mxu0 %v2385
        %v2424 = vpop.f32.mrb[0].mxu0
        %v2425 = vadd.f32 0.0, %v2424
        %v2426 = vpop.f32.mrb[0].mxu0
        %v2427 = vpop.f32.mrb[0].mxu0
        %v2428 = vpop.f32.mrb[0].mxu0
        %2429 = vdwg.mxu0
        %2432 = vrot.lane.b32.xlu0 %v2377, 80
        %v2433 = vpop.permute.xlu0 %2432
        %2434 = vrot.lane.b32.xlu0 %v2425, 80
        %v2435 = vpop.permute.xlu0 %2434
        %vm2438 = vcmask 786048
        %2439 = vst.msk [vmem:[#allocation2] sm:$0xff] %vm2438, %v2433
        %2440 = vst.msk [vmem:[#allocation2 + $0x8] sm:$0xff] %vm2438, %v2435
        %2441 = vrot.lane.b32.xlu0 %v998, 32
        %v2442 = vpop.permute.xlu0 %2441
        %2443 = vrot.lane.b32.xlu0 %v1004, 32
        %v2444 = vpop.permute.xlu0 %2443
        %v2446 = vsel %vm1016, %v2442, 0
        %v2449 = vsel %vm1016, %v2444, 0
        %2451 = vmatprep.subr.bf16.mxu0 0
        %2452 = vmatpush1.bf16.xpose.msra.mxu0 %v2449
        %2453 = vmatprep.subr.bf16.mxu0 0
        %2454 = vmatpush1.bf16.xpose.msra.mxu0 0
        %2455 = vmatprep.subr.bf16.mxu0 0
        %2456 = vmatpush1.bf16.xpose.msra.mxu0 0
        %2457 = vmatprep.subr.bf16.mxu0 0
        %2458 = vmatpush1.bf16.xpose.msra.mxu0 0
        %2459 = vmatprep.subr.bf16.mxu0 0
        %2460 = vmatpush1.bf16.xpose.msra.mxu0 0
        %2461 = vmatprep.subr.bf16.mxu0 0
        %2462 = vmatpush1.bf16.xpose.msra.mxu0 0
        %2463 = vmatprep.subr.bf16.mxu0 0
        %2464 = vmatpush1.bf16.xpose.msra.mxu0 0
        %2465 = vmatprep.subr.bf16.mxu0 0
        %2466 = vmatpush1.bf16.xpose.msra.mxu0 0
        %2467 = vmatprep.subr.bf16.mxu0 0
        %2468 = vmatpush1.bf16.xpose.msra.mxu0 0
        %2469 = vmatprep.subr.bf16.mxu0 0
        %2470 = vmatpush1.bf16.xpose.msra.mxu0 0
        %2471 = vmatprep.subr.bf16.mxu0 0
        %2472 = vmatpush1.bf16.xpose.msra.mxu0 0
        %2473 = vmatprep.subr.bf16.mxu0 0
        %2474 = vmatpush1.bf16.xpose.msra.mxu0 0
        %2475 = vmatprep.subr.bf16.mxu0 0
        %2476 = vmatpush1.bf16.xpose.msra.mxu0 0
        %2477 = vmatprep.subr.bf16.mxu0 0
        %2478 = vmatpush1.bf16.xpose.msra.mxu0 0
        %2479 = vmatprep.subr.bf16.mxu0 0
        %2480 = vmatpush1.bf16.xpose.msra.mxu0 0
        %2481 = vmatprep.subr.bf16.mxu0 0
        %2482 = vmatpush1.bf16.xpose.msra.mxu0 0
        %2483 = vmatprep.mubr.bf16.mxu0 0
        %2484 = vmatmul.mubr.bf16.gmra.mrb[0].mxu0 %v2446
        %v2485 = vpop.f32.mrb[0].mxu0
        %v2486 = vadd.f32 %v1014, %v2485
        %v2487 = vpop.f32.mrb[0].mxu0
        %v2488 = vpop.f32.mrb[0].mxu0
        %v2489 = vpop.f32.mrb[0].mxu0
        %2490 = vdwg.mxu0
        %2491 = vrot.lane.b32.xlu0 %v999, 32
        %v2492 = vpop.permute.xlu0 %2491
        %2493 = vrot.lane.b32.xlu0 %v1005, 32
        %v2494 = vpop.permute.xlu0 %2493
        %v2496 = vsel %vm1016, %v2492, 0
        %v2499 = vsel %vm1016, %v2494, 0
        %2501 = vmatprep.subr.bf16.mxu0 0
        %2502 = vmatpush1.bf16.xpose.msra.mxu0 %v2499
        %2503 = vmatprep.subr.bf16.mxu0 0
        %2504 = vmatpush1.bf16.xpose.msra.mxu0 0
        %2505 = vmatprep.subr.bf16.mxu0 0
        %2506 = vmatpush1.bf16.xpose.msra.mxu0 0
        %2507 = vmatprep.subr.bf16.mxu0 0
        %2508 = vmatpush1.bf16.xpose.msra.mxu0 0
        %2509 = vmatprep.subr.bf16.mxu0 0
        %2510 = vmatpush1.bf16.xpose.msra.mxu0 0
        %2511 = vmatprep.subr.bf16.mxu0 0
        %2512 = vmatpush1.bf16.xpose.msra.mxu0 0
        %2513 = vmatprep.subr.bf16.mxu0 0
        %2514 = vmatpush1.bf16.xpose.msra.mxu0 0
        %2515 = vmatprep.subr.bf16.mxu0 0
        %2516 = vmatpush1.bf16.xpose.msra.mxu0 0
        %2517 = vmatprep.subr.bf16.mxu0 0
        %2518 = vmatpush1.bf16.xpose.msra.mxu0 0
        %2519 = vmatprep.subr.bf16.mxu0 0
        %2520 = vmatpush1.bf16.xpose.msra.mxu0 0
        %2521 = vmatprep.subr.bf16.mxu0 0
        %2522 = vmatpush1.bf16.xpose.msra.mxu0 0
        %2523 = vmatprep.subr.bf16.mxu0 0
        %2524 = vmatpush1.bf16.xpose.msra.mxu0 0
        %2525 = vmatprep.subr.bf16.mxu0 0
        %2526 = vmatpush1.bf16.xpose.msra.mxu0 0
        %2527 = vmatprep.subr.bf16.mxu0 0
        %2528 = vmatpush1.bf16.xpose.msra.mxu0 0
        %2529 = vmatprep.subr.bf16.mxu0 0
        %2530 = vmatpush1.bf16.xpose.msra.mxu0 0
        %2531 = vmatprep.subr.bf16.mxu0 0
        %2532 = vmatpush1.bf16.xpose.msra.mxu0 0
        %2533 = vmatprep.mubr.bf16.mxu0 0
        %2534 = vmatmul.mubr.bf16.gmra.mrb[0].mxu0 %v2496
        %v2535 = vpop.f32.mrb[0].mxu0
        %v2536 = vadd.f32 %v1015, %v2535
        %v2537 = vpop.f32.mrb[0].mxu0
        %v2538 = vpop.f32.mrb[0].mxu0
        %v2539 = vpop.f32.mrb[0].mxu0
        %2540 = vdwg.mxu0
        %v2541 = vsel %vm1109, %v2486, -inf
        %2542 = vmax.xlane.f32.xlu0 %v2541
        %v2543 = vpop.xlane.xlu0 %2542
        %v2544 = vsel %vm1109, %v2536, -inf
        %2545 = vmax.xlane.f32.xlu0 %v2544
        %v2546 = vpop.xlane.xlu0 %2545
        %v2547 = vsub.f32 %v2486, %v2543
        %v2548 = vsub.f32 %v2536, %v2546
        %v2549 = vmul.f32 %v2547, 1.442695
        %v2550 = vpow.pop %v2549
        %v2551 = vmul.f32 %v2548, 1.442695
        %v2552 = vpow.pop %v2551
        %v2553 = vsel %vm1109, %v2550, 0.0
        %2554 = vadd.xlane.f32.xlu0 %v2553
        %v2555 = vpop.xlane.xlu0 %2554
        %v2556 = vsel %vm1109, %v2552, 0.0
        %2557 = vadd.xlane.f32.xlu0 %v2556
        %v2558 = vpop.xlane.xlu0 %2557
        %v2559 = vrcp.pop %v2555
        %v2560 = vmul.f32 %v2550, %v2559
        %v2561 = vrcp.pop %v2558
        %v2562 = vmul.f32 %v2552, %v2561
        %2565 = vrot.lane.b32.xlu0 %v2560, 48
        %v2566 = vpop.permute.xlu0 %2565
        %2567 = vrot.lane.b32.xlu0 %v2562, 48
        %v2568 = vpop.permute.xlu0 %2567
        %vm2571 = vcmask 458112
        %2572 = vst.msk [vmem:[%s631] sm:$0xff] %vm2571, %v2566
        %2573 = vst.msk [vmem:[%s631 + $0x8] sm:$0xff] %vm2571, %v2568
        %v2574 = vpack.c.bf16 %v2560, %v2560
        %v2575 = vpack.c.bf16 %v2562, %v2562
        %2576 = vrot.lane.b32.xlu0 %v1010, 32
        %v2577 = vpop.permute.xlu0 %2576
        %v2579 = vsel %vm1109, %v2574, 0
        %v2582 = vsel %vm1139, %v2577, 0
        %2584 = vmatprep.subr.bf16.mxu0 0
        %2585 = vmatpush1.bf16.msra.mxu0 %v2582
        %2586 = vmatprep.subr.bf16.mxu0 0
        %2587 = vmatpush1.bf16.msra.mxu0 0
        %2588 = vmatprep.subr.bf16.mxu0 0
        %2589 = vmatpush1.bf16.msra.mxu0 0
        %2590 = vmatprep.subr.bf16.mxu0 0
        %2591 = vmatpush1.bf16.msra.mxu0 0
        %2592 = vmatprep.subr.bf16.mxu0 0
        %2593 = vmatpush1.bf16.msra.mxu0 0
        %2594 = vmatprep.subr.bf16.mxu0 0
        %2595 = vmatpush1.bf16.msra.mxu0 0
        %2596 = vmatprep.subr.bf16.mxu0 0
        %2597 = vmatpush1.bf16.msra.mxu0 0
        %2598 = vmatprep.subr.bf16.mxu0 0
        %2599 = vmatpush1.bf16.msra.mxu0 0
        %2600 = vmatprep.subr.bf16.mxu0 0
        %2601 = vmatpush1.bf16.msra.mxu0 0
        %2602 = vmatprep.subr.bf16.mxu0 0
        %2603 = vmatpush1.bf16.msra.mxu0 0
        %2604 = vmatprep.subr.bf16.mxu0 0
        %2605 = vmatpush1.bf16.msra.mxu0 0
        %2606 = vmatprep.subr.bf16.mxu0 0
        %2607 = vmatpush1.bf16.msra.mxu0 0
        %2608 = vmatprep.subr.bf16.mxu0 0
        %2609 = vmatpush1.bf16.msra.mxu0 0
        %2610 = vmatprep.subr.bf16.mxu0 0
        %2611 = vmatpush1.bf16.msra.mxu0 0
        %2612 = vmatprep.subr.bf16.mxu0 0
        %2613 = vmatpush1.bf16.msra.mxu0 0
        %2614 = vmatprep.subr.bf16.mxu0 0
        %2615 = vmatpush1.bf16.msra.mxu0 0
        %2616 = vmatprep.mubr.bf16.mxu0 0
        %2617 = vmatmul.mubr.bf16.gmra.mrb[0].mxu0 %v2579
        %v2618 = vpop.f32.mrb[0].mxu0
        %v2619 = vadd.f32 0.0, %v2618
        %v2620 = vpop.f32.mrb[0].mxu0
        %v2621 = vpop.f32.mrb[0].mxu0
        %v2622 = vpop.f32.mrb[0].mxu0
        %2623 = vdwg.mxu0
        %2624 = vrot.lane.b32.xlu0 %v1011, 32
        %v2625 = vpop.permute.xlu0 %2624
        %v2627 = vsel %vm1109, %v2575, 0
        %v2630 = vsel %vm1139, %v2625, 0
        %2632 = vmatprep.subr.bf16.mxu0 0
        %2633 = vmatpush1.bf16.msra.mxu0 %v2630
        %2634 = vmatprep.subr.bf16.mxu0 0
        %2635 = vmatpush1.bf16.msra.mxu0 0
        %2636 = vmatprep.subr.bf16.mxu0 0
        %2637 = vmatpush1.bf16.msra.mxu0 0
        %2638 = vmatprep.subr.bf16.mxu0 0
        %2639 = vmatpush1.bf16.msra.mxu0 0
        %2640 = vmatprep.subr.bf16.mxu0 0
        %2641 = vmatpush1.bf16.msra.mxu0 0
        %2642 = vmatprep.subr.bf16.mxu0 0
        %2643 = vmatpush1.bf16.msra.mxu0 0
        %2644 = vmatprep.subr.bf16.mxu0 0
        %2645 = vmatpush1.bf16.msra.mxu0 0
        %2646 = vmatprep.subr.bf16.mxu0 0
        %2647 = vmatpush1.bf16.msra.mxu0 0
        %2648 = vmatprep.subr.bf16.mxu0 0
        %2649 = vmatpush1.bf16.msra.mxu0 0
        %2650 = vmatprep.subr.bf16.mxu0 0
        %2651 = vmatpush1.bf16.msra.mxu0 0
        %2652 = vmatprep.subr.bf16.mxu0 0
        %2653 = vmatpush1.bf16.msra.mxu0 0
        %2654 = vmatprep.subr.bf16.mxu0 0
        %2655 = vmatpush1.bf16.msra.mxu0 0
        %2656 = vmatprep.subr.bf16.mxu0 0
        %2657 = vmatpush1.bf16.msra.mxu0 0
        %2658 = vmatprep.subr.bf16.mxu0 0
        %2659 = vmatpush1.bf16.msra.mxu0 0
        %2660 = vmatprep.subr.bf16.mxu0 0
        %2661 = vmatpush1.bf16.msra.mxu0 0
        %2662 = vmatprep.subr.bf16.mxu0 0
        %2663 = vmatpush1.bf16.msra.mxu0 0
        %2664 = vmatprep.mubr.bf16.mxu0 0
        %2665 = vmatmul.mubr.bf16.gmra.mrb[0].mxu0 %v2627
        %v2666 = vpop.f32.mrb[0].mxu0
        %v2667 = vadd.f32 0.0, %v2666
        %v2668 = vpop.f32.mrb[0].mxu0
        %v2669 = vpop.f32.mrb[0].mxu0
        %v2670 = vpop.f32.mrb[0].mxu0
        %2671 = vdwg.mxu0
        %2674 = vrot.lane.b32.xlu0 %v2619, 96
        %v2675 = vpop.permute.xlu0 %2674
        %2676 = vrot.lane.b32.xlu0 %v2667, 96
        %v2677 = vpop.permute.xlu0 %2676
        %vm2680 = vcmask 917248
        %2681 = vst.msk [vmem:[#allocation2] sm:$0xff] %vm2680, %v2675
        %2682 = vst.msk [vmem:[#allocation2 + $0x8] sm:$0xff] %vm2680, %v2677
        %2683 = vrot.lane.b32.xlu0 %v998, 16
        %v2684 = vpop.permute.xlu0 %2683
        %2685 = vrot.lane.b32.xlu0 %v1004, 16
        %v2686 = vpop.permute.xlu0 %2685
        %v2688 = vsel %vm1016, %v2684, 0
        %v2691 = vsel %vm1016, %v2686, 0
        %2693 = vmatprep.subr.bf16.mxu0 0
        %2694 = vmatpush1.bf16.xpose.msra.mxu0 %v2691
        %2695 = vmatprep.subr.bf16.mxu0 0
        %2696 = vmatpush1.bf16.xpose.msra.mxu0 0
        %2697 = vmatprep.subr.bf16.mxu0 0
        %2698 = vmatpush1.bf16.xpose.msra.mxu0 0
        %2699 = vmatprep.subr.bf16.mxu0 0
        %2700 = vmatpush1.bf16.xpose.msra.mxu0 0
        %2701 = vmatprep.subr.bf16.mxu0 0
        %2702 = vmatpush1.bf16.xpose.msra.mxu0 0
        %2703 = vmatprep.subr.bf16.mxu0 0
        %2704 = vmatpush1.bf16.xpose.msra.mxu0 0
        %2705 = vmatprep.subr.bf16.mxu0 0
        %2706 = vmatpush1.bf16.xpose.msra.mxu0 0
        %2707 = vmatprep.subr.bf16.mxu0 0
        %2708 = vmatpush1.bf16.xpose.msra.mxu0 0
        %2709 = vmatprep.subr.bf16.mxu0 0
        %2710 = vmatpush1.bf16.xpose.msra.mxu0 0
        %2711 = vmatprep.subr.bf16.mxu0 0
        %2712 = vmatpush1.bf16.xpose.msra.mxu0 0
        %2713 = vmatprep.subr.bf16.mxu0 0
        %2714 = vmatpush1.bf16.xpose.msra.mxu0 0
        %2715 = vmatprep.subr.bf16.mxu0 0
        %2716 = vmatpush1.bf16.xpose.msra.mxu0 0
        %2717 = vmatprep.subr.bf16.mxu0 0
        %2718 = vmatpush1.bf16.xpose.msra.mxu0 0
        %2719 = vmatprep.subr.bf16.mxu0 0
        %2720 = vmatpush1.bf16.xpose.msra.mxu0 0
        %2721 = vmatprep.subr.bf16.mxu0 0
        %2722 = vmatpush1.bf16.xpose.msra.mxu0 0
        %2723 = vmatprep.subr.bf16.mxu0 0
        %2724 = vmatpush1.bf16.xpose.msra.mxu0 0
        %2725 = vmatprep.mubr.bf16.mxu0 0
        %2726 = vmatmul.mubr.bf16.gmra.mrb[0].mxu0 %v2688
        %v2727 = vpop.f32.mrb[0].mxu0
        %v2728 = vadd.f32 %v1014, %v2727
        %v2729 = vpop.f32.mrb[0].mxu0
        %v2730 = vpop.f32.mrb[0].mxu0
        %v2731 = vpop.f32.mrb[0].mxu0
        %2732 = vdwg.mxu0
        %2733 = vrot.lane.b32.xlu0 %v999, 16
        %v2734 = vpop.permute.xlu0 %2733
        %2735 = vrot.lane.b32.xlu0 %v1005, 16
        %v2736 = vpop.permute.xlu0 %2735
        %v2738 = vsel %vm1016, %v2734, 0
        %v2741 = vsel %vm1016, %v2736, 0
        %2743 = vmatprep.subr.bf16.mxu0 0
        %2744 = vmatpush1.bf16.xpose.msra.mxu0 %v2741
        %2745 = vmatprep.subr.bf16.mxu0 0
        %2746 = vmatpush1.bf16.xpose.msra.mxu0 0
        %2747 = vmatprep.subr.bf16.mxu0 0
        %2748 = vmatpush1.bf16.xpose.msra.mxu0 0
        %2749 = vmatprep.subr.bf16.mxu0 0
        %2750 = vmatpush1.bf16.xpose.msra.mxu0 0
        %2751 = vmatprep.subr.bf16.mxu0 0
        %2752 = vmatpush1.bf16.xpose.msra.mxu0 0
        %2753 = vmatprep.subr.bf16.mxu0 0
        %2754 = vmatpush1.bf16.xpose.msra.mxu0 0
        %2755 = vmatprep.subr.bf16.mxu0 0
        %2756 = vmatpush1.bf16.xpose.msra.mxu0 0
        %2757 = vmatprep.subr.bf16.mxu0 0
        %2758 = vmatpush1.bf16.xpose.msra.mxu0 0
        %2759 = vmatprep.subr.bf16.mxu0 0
        %2760 = vmatpush1.bf16.xpose.msra.mxu0 0
        %2761 = vmatprep.subr.bf16.mxu0 0
        %2762 = vmatpush1.bf16.xpose.msra.mxu0 0
        %2763 = vmatprep.subr.bf16.mxu0 0
        %2764 = vmatpush1.bf16.xpose.msra.mxu0 0
        %2765 = vmatprep.subr.bf16.mxu0 0
        %2766 = vmatpush1.bf16.xpose.msra.mxu0 0
        %2767 = vmatprep.subr.bf16.mxu0 0
        %2768 = vmatpush1.bf16.xpose.msra.mxu0 0
        %2769 = vmatprep.subr.bf16.mxu0 0
        %2770 = vmatpush1.bf16.xpose.msra.mxu0 0
        %2771 = vmatprep.subr.bf16.mxu0 0
        %2772 = vmatpush1.bf16.xpose.msra.mxu0 0
        %2773 = vmatprep.subr.bf16.mxu0 0
        %2774 = vmatpush1.bf16.xpose.msra.mxu0 0
        %2775 = vmatprep.mubr.bf16.mxu0 0
        %2776 = vmatmul.mubr.bf16.gmra.mrb[0].mxu0 %v2738
        %v2777 = vpop.f32.mrb[0].mxu0
        %v2778 = vadd.f32 %v1015, %v2777
        %v2779 = vpop.f32.mrb[0].mxu0
        %v2780 = vpop.f32.mrb[0].mxu0
        %v2781 = vpop.f32.mrb[0].mxu0
        %2782 = vdwg.mxu0
        %v2783 = vsel %vm1109, %v2728, -inf
        %2784 = vmax.xlane.f32.xlu0 %v2783
        %v2785 = vpop.xlane.xlu0 %2784
        %v2786 = vsel %vm1109, %v2778, -inf
        %2787 = vmax.xlane.f32.xlu0 %v2786
        %v2788 = vpop.xlane.xlu0 %2787
        %v2789 = vsub.f32 %v2728, %v2785
        %v2790 = vsub.f32 %v2778, %v2788
        %v2791 = vmul.f32 %v2789, 1.442695
        %v2792 = vpow.pop %v2791
        %v2793 = vmul.f32 %v2790, 1.442695
        %v2794 = vpow.pop %v2793
        %v2795 = vsel %vm1109, %v2792, 0.0
        %2796 = vadd.xlane.f32.xlu0 %v2795
        %v2797 = vpop.xlane.xlu0 %2796
        %v2798 = vsel %vm1109, %v2794, 0.0
        %2799 = vadd.xlane.f32.xlu0 %v2798
        %v2800 = vpop.xlane.xlu0 %2799
        %v2801 = vrcp.pop %v2797
        %v2802 = vmul.f32 %v2792, %v2801
        %v2803 = vrcp.pop %v2800
        %v2804 = vmul.f32 %v2794, %v2803
        %2807 = vrot.lane.b32.xlu0 %v2802, 56
        %v2808 = vpop.permute.xlu0 %2807
        %2809 = vrot.lane.b32.xlu0 %v2804, 56
        %v2810 = vpop.permute.xlu0 %2809
        %vm2813 = vcmask 523712
        %2814 = vst.msk [vmem:[%s631] sm:$0xff] %vm2813, %v2808
        %2815 = vst.msk [vmem:[%s631 + $0x8] sm:$0xff] %vm2813, %v2810
        %v2816 = vpack.c.bf16 %v2802, %v2802
        %v2817 = vpack.c.bf16 %v2804, %v2804
        %2818 = vrot.lane.b32.xlu0 %v1010, 16
        %v2819 = vpop.permute.xlu0 %2818
        %v2821 = vsel %vm1109, %v2816, 0
        %v2824 = vsel %vm1139, %v2819, 0
        %2826 = vmatprep.subr.bf16.mxu0 0
        %2827 = vmatpush1.bf16.msra.mxu0 %v2824
        %2828 = vmatprep.subr.bf16.mxu0 0
        %2829 = vmatpush1.bf16.msra.mxu0 0
        %2830 = vmatprep.subr.bf16.mxu0 0
        %2831 = vmatpush1.bf16.msra.mxu0 0
        %2832 = vmatprep.subr.bf16.mxu0 0
        %2833 = vmatpush1.bf16.msra.mxu0 0
        %2834 = vmatprep.subr.bf16.mxu0 0
        %2835 = vmatpush1.bf16.msra.mxu0 0
        %2836 = vmatprep.subr.bf16.mxu0 0
        %2837 = vmatpush1.bf16.msra.mxu0 0
        %2838 = vmatprep.subr.bf16.mxu0 0
        %2839 = vmatpush1.bf16.msra.mxu0 0
        %2840 = vmatprep.subr.bf16.mxu0 0
        %2841 = vmatpush1.bf16.msra.mxu0 0
        %2842 = vmatprep.subr.bf16.mxu0 0
        %2843 = vmatpush1.bf16.msra.mxu0 0
        %2844 = vmatprep.subr.bf16.mxu0 0
        %2845 = vmatpush1.bf16.msra.mxu0 0
        %2846 = vmatprep.subr.bf16.mxu0 0
        %2847 = vmatpush1.bf16.msra.mxu0 0
        %2848 = vmatprep.subr.bf16.mxu0 0
        %2849 = vmatpush1.bf16.msra.mxu0 0
        %2850 = vmatprep.subr.bf16.mxu0 0
        %2851 = vmatpush1.bf16.msra.mxu0 0
        %2852 = vmatprep.subr.bf16.mxu0 0
        %2853 = vmatpush1.bf16.msra.mxu0 0
        %2854 = vmatprep.subr.bf16.mxu0 0
        %2855 = vmatpush1.bf16.msra.mxu0 0
        %2856 = vmatprep.subr.bf16.mxu0 0
        %2857 = vmatpush1.bf16.msra.mxu0 0
        %2858 = vmatprep.mubr.bf16.mxu0 0
        %2859 = vmatmul.mubr.bf16.gmra.mrb[0].mxu0 %v2821
        %v2860 = vpop.f32.mrb[0].mxu0
        %v2861 = vadd.f32 0.0, %v2860
        %v2862 = vpop.f32.mrb[0].mxu0
        %v2863 = vpop.f32.mrb[0].mxu0
        %v2864 = vpop.f32.mrb[0].mxu0
        %2865 = vdwg.mxu0
        %2866 = vrot.lane.b32.xlu0 %v1011, 16
        %v2867 = vpop.permute.xlu0 %2866
        %v2869 = vsel %vm1109, %v2817, 0
        %v2872 = vsel %vm1139, %v2867, 0
        %2874 = vmatprep.subr.bf16.mxu0 0
        %2875 = vmatpush1.bf16.msra.mxu0 %v2872
        %2876 = vmatprep.subr.bf16.mxu0 0
        %2877 = vmatpush1.bf16.msra.mxu0 0
        %2878 = vmatprep.subr.bf16.mxu0 0
        %2879 = vmatpush1.bf16.msra.mxu0 0
        %2880 = vmatprep.subr.bf16.mxu0 0
        %2881 = vmatpush1.bf16.msra.mxu0 0
        %2882 = vmatprep.subr.bf16.mxu0 0
        %2883 = vmatpush1.bf16.msra.mxu0 0
        %2884 = vmatprep.subr.bf16.mxu0 0
        %2885 = vmatpush1.bf16.msra.mxu0 0
        %2886 = vmatprep.subr.bf16.mxu0 0
        %2887 = vmatpush1.bf16.msra.mxu0 0
        %2888 = vmatprep.subr.bf16.mxu0 0
        %2889 = vmatpush1.bf16.msra.mxu0 0
        %2890 = vmatprep.subr.bf16.mxu0 0
        %2891 = vmatpush1.bf16.msra.mxu0 0
        %2892 = vmatprep.subr.bf16.mxu0 0
        %2893 = vmatpush1.bf16.msra.mxu0 0
        %2894 = vmatprep.subr.bf16.mxu0 0
        %2895 = vmatpush1.bf16.msra.mxu0 0
        %2896 = vmatprep.subr.bf16.mxu0 0
        %2897 = vmatpush1.bf16.msra.mxu0 0
        %2898 = vmatprep.subr.bf16.mxu0 0
        %2899 = vmatpush1.bf16.msra.mxu0 0
        %2900 = vmatprep.subr.bf16.mxu0 0
        %2901 = vmatpush1.bf16.msra.mxu0 0
        %2902 = vmatprep.subr.bf16.mxu0 0
        %2903 = vmatpush1.bf16.msra.mxu0 0
        %2904 = vmatprep.subr.bf16.mxu0 0
        %2905 = vmatpush1.bf16.msra.mxu0 0
        %2906 = vmatprep.mubr.bf16.mxu0 0
        %2907 = vmatmul.mubr.bf16.gmra.mrb[0].mxu0 %v2869
        %v2908 = vpop.f32.mrb[0].mxu0
        %v2909 = vadd.f32 0.0, %v2908
        %v2910 = vpop.f32.mrb[0].mxu0
        %v2911 = vpop.f32.mrb[0].mxu0
        %v2912 = vpop.f32.mrb[0].mxu0
        %2913 = vdwg.mxu0
        %2916 = vrot.lane.b32.xlu0 %v2861, 112
        %v2917 = vpop.permute.xlu0 %2916
        %2918 = vrot.lane.b32.xlu0 %v2909, 112
        %v2919 = vpop.permute.xlu0 %2918
        %vm2922 = vcmask 1048448
        %2923 = vst.msk [vmem:[#allocation2] sm:$0xff] %vm2922, %v2917
        %2924 = vst.msk [vmem:[#allocation2 + $0x8] sm:$0xff] %vm2922, %v2919
        %v2925 = vld [vmem:[#allocation2] sm:$0xff]
        %v2926 = vld [vmem:[#allocation2 + $0x8] sm:$0xff]
        %v2927 = vpack.c.bf16 %v2925, %v2925
        %v2928 = vpack.c.bf16 %v2926, %v2926
        %v2929 = vld [vmem:[#allocation17] sm:$0xf]
        %v2930 = vld [vmem:[#allocation17 + $0x4] sm:$0xf]
        %v2931 = vld [vmem:[#allocation17 + $0x8] sm:$0xf]
        %v2932 = vld [vmem:[#allocation17 + $0xc] sm:$0xf]
        %v2933 = vld [vmem:[#allocation17 + $0x10] sm:$0xf]
        %v2934 = vld [vmem:[#allocation17 + $0x14] sm:$0xf]
        %v2935 = vld [vmem:[#allocation17 + $0x18] sm:$0xf]
        %v2936 = vld [vmem:[#allocation17 + $0x1c] sm:$0xf]
        %v2937 = vld [vmem:[#allocation17 + $0x20] sm:$0xf]
        %v2938 = vld [vmem:[#allocation17 + $0x24] sm:$0xf]
        %v2939 = vld [vmem:[#allocation17 + $0x28] sm:$0xf]
        %v2940 = vld [vmem:[#allocation17 + $0x2c] sm:$0xf]
        %v2941 = vld [vmem:[#allocation17 + $0x30] sm:$0xf]
        %v2942 = vld [vmem:[#allocation17 + $0x34] sm:$0xf]
        %v2943 = vld [vmem:[#allocation17 + $0x38] sm:$0xf]
        %v2944 = vld [vmem:[#allocation17 + $0x3c] sm:$0xf]
        %v2947 = vunpack.c.l.b16 %v2927
        %v2948 = vunpack.c.l.b16 %v2928
        %v2949 = vpack.c.b16 %v2948, %v2947
        %v2967 = vunpack.c.l.b16 %v2929
        %v2968 = vunpack.c.l.b16 %v2930
        %v2969 = vunpack.c.l.b16 %v2931
        %v2970 = vunpack.c.l.b16 %v2932
        %v2971 = vunpack.c.l.b16 %v2933
        %v2972 = vunpack.c.l.b16 %v2934
        %v2973 = vunpack.c.l.b16 %v2935
        %v2974 = vunpack.c.l.b16 %v2936
        %v2975 = vunpack.c.l.b16 %v2937
        %v2976 = vunpack.c.l.b16 %v2938
        %v2977 = vunpack.c.l.b16 %v2939
        %v2978 = vunpack.c.l.b16 %v2940
        %v2979 = vunpack.c.l.b16 %v2941
        %v2980 = vunpack.c.l.b16 %v2942
        %v2981 = vunpack.c.l.b16 %v2943
        %v2982 = vunpack.c.l.b16 %v2944
        %v2983 = vpack.c.b16 %v2968, %v2967
        %v2984 = vpack.c.b16 %v2970, %v2969
        %v2985 = vpack.c.b16 %v2972, %v2971
        %v2986 = vpack.c.b16 %v2974, %v2973
        %v2987 = vpack.c.b16 %v2976, %v2975
        %v2988 = vpack.c.b16 %v2978, %v2977
        %v2989 = vpack.c.b16 %v2980, %v2979
        %v2990 = vpack.c.b16 %v2982, %v2981
        %2999 = vmatprep.subr.bf16.mxu0 0
        %3000 = vmatpush1.bf16.msra.mxu0 %v2983
        %3001 = vmatprep.subr.bf16.mxu0 0
        %3002 = vmatpush1.bf16.msra.mxu0 %v2984
        %3003 = vmatprep.subr.bf16.mxu0 0
        %3004 = vmatpush1.bf16.msra.mxu0 %v2985
        %3005 = vmatprep.subr.bf16.mxu0 0
        %3006 = vmatpush1.bf16.msra.mxu0 %v2986
        %3007 = vmatprep.subr.bf16.mxu0 0
        %3008 = vmatpush1.bf16.msra.mxu0 %v2987
        %3009 = vmatprep.subr.bf16.mxu0 0
        %3010 = vmatpush1.bf16.msra.mxu0 %v2988
        %3011 = vmatprep.subr.bf16.mxu0 0
        %3012 = vmatpush1.bf16.msra.mxu0 %v2989
        %3013 = vmatprep.subr.bf16.mxu0 0
        %3014 = vmatpush1.bf16.msra.mxu0 %v2990
        %3015 = vmatprep.subr.bf16.mxu0 0
        %3016 = vmatpush1.bf16.msra.mxu0 0
        %3017 = vmatprep.subr.bf16.mxu0 0
        %3018 = vmatpush1.bf16.msra.mxu0 0
        %3019 = vmatprep.subr.bf16.mxu0 0
        %3020 = vmatpush1.bf16.msra.mxu0 0
        %3021 = vmatprep.subr.bf16.mxu0 0
        %3022 = vmatpush1.bf16.msra.mxu0 0
        %3023 = vmatprep.subr.bf16.mxu0 0
        %3024 = vmatpush1.bf16.msra.mxu0 0
        %3025 = vmatprep.subr.bf16.mxu0 0
        %3026 = vmatpush1.bf16.msra.mxu0 0
        %3027 = vmatprep.subr.bf16.mxu0 0
        %3028 = vmatpush1.bf16.msra.mxu0 0
        %3029 = vmatprep.subr.bf16.mxu0 0
        %3030 = vmatpush1.bf16.msra.mxu0 0
        %3031 = vmatprep.mubr.bf16.mxu0 0
        %3032 = vmatmul.mubr.bf16.gmra.mrb[0].mxu0 %v2949
        %v3033 = vpop.f32.mrb[0].mxu0
        %v3034 = vadd.f32 0.0, %v3033
        %v3035 = vpop.f32.mrb[0].mxu0
        %v3036 = vpop.f32.mrb[0].mxu0
        %v3037 = vadd.f32 0.0, %v3036
        %v3038 = vpop.f32.mrb[0].mxu0
        %3039 = vdwg.mxu0
        %v3056 = vunpack.c.l.b16 %v645
        %v3057 = vunpack.c.l.b16 %v646
        %v3058 = vunpack.c.l.b16 %v647
        %v3059 = vunpack.c.l.b16 %v648
        %v3060 = vunpack.c.l.b16 %v649
        %v3061 = vunpack.c.l.b16 %v650
        %v3062 = vunpack.c.l.b16 %v651
        %v3063 = vunpack.c.l.b16 %v652
        %v3064 = vunpack.c.l.b16 %v653
        %v3065 = vunpack.c.l.b16 %v654
        %v3066 = vunpack.c.l.b16 %v655
        %v3067 = vunpack.c.l.b16 %v656
        %v3068 = vunpack.c.l.b16 %v657
        %v3069 = vunpack.c.l.b16 %v658
        %v3070 = vunpack.c.l.b16 %v659
        %v3071 = vunpack.c.l.b16 %v660
        %v3072 = vpack.c.b16 %v3057, %v3056
        %v3073 = vpack.c.b16 %v3059, %v3058
        %v3074 = vpack.c.b16 %v3061, %v3060
        %v3075 = vpack.c.b16 %v3063, %v3062
        %v3076 = vpack.c.b16 %v3065, %v3064
        %v3077 = vpack.c.b16 %v3067, %v3066
        %v3078 = vpack.c.b16 %v3069, %v3068
        %v3079 = vpack.c.b16 %v3071, %v3070
        %3088 = vmatprep.subr.bf16.mxu0 0
        %3089 = vmatpush1.bf16.msra.mxu0 %v3072
        %3090 = vmatprep.subr.bf16.mxu0 0
        %3091 = vmatpush1.bf16.msra.mxu0 %v3073
        %3092 = vmatprep.subr.bf16.mxu0 0
        %3093 = vmatpush1.bf16.msra.mxu0 %v3074
        %3094 = vmatprep.subr.bf16.mxu0 0
        %3095 = vmatpush1.bf16.msra.mxu0 %v3075
        %3096 = vmatprep.subr.bf16.mxu0 0
        %3097 = vmatpush1.bf16.msra.mxu0 %v3076
        %3098 = vmatprep.subr.bf16.mxu0 0
        %3099 = vmatpush1.bf16.msra.mxu0 %v3077
        %3100 = vmatprep.subr.bf16.mxu0 0
        %3101 = vmatpush1.bf16.msra.mxu0 %v3078
        %3102 = vmatprep.subr.bf16.mxu0 0
        %3103 = vmatpush1.bf16.msra.mxu0 %v3079
        %3104 = vmatprep.subr.bf16.mxu0 0
        %3105 = vmatpush1.bf16.msra.mxu0 0
        %3106 = vmatprep.subr.bf16.mxu0 0
        %3107 = vmatpush1.bf16.msra.mxu0 0
        %3108 = vmatprep.subr.bf16.mxu0 0
        %3109 = vmatpush1.bf16.msra.mxu0 0
        %3110 = vmatprep.subr.bf16.mxu0 0
        %3111 = vmatpush1.bf16.msra.mxu0 0
        %3112 = vmatprep.subr.bf16.mxu0 0
        %3113 = vmatpush1.bf16.msra.mxu0 0
        %3114 = vmatprep.subr.bf16.mxu0 0
        %3115 = vmatpush1.bf16.msra.mxu0 0
        %3116 = vmatprep.subr.bf16.mxu0 0
        %3117 = vmatpush1.bf16.msra.mxu0 0
        %3118 = vmatprep.subr.bf16.mxu0 0
        %3119 = vmatpush1.bf16.msra.mxu0 0
        %3120 = vmatprep.mubr.bf16.mxu0 0
        %3121 = vmatmul.mubr.bf16.gmra.mrb[0].mxu0 %v681
        %v3122 = vpop.f32.mrb[0].mxu0
        %v3123 = vadd.f32 %v3034, %v3122
        %v3124 = vpop.f32.mrb[0].mxu0
        %v3125 = vpop.f32.mrb[0].mxu0
        %v3126 = vadd.f32 %v3037, %v3125
        %v3127 = vpop.f32.mrb[0].mxu0
        %3128 = vdwg.mxu0
        %3129 = vadd.xlane.f32.xlu0 %v3123
        %v3130 = vpop.xlane.xlu0 %3129
        %3131 = vadd.xlane.f32.xlu0 %v3126
        %v3132 = vpop.xlane.xlu0 %3131
        %v3133 = vrcp.pop 128.0
        %v3134 = vmul.f32 %v3130, %v3133
        %v3135 = vmul.f32 %v3132, %v3133
        %v3136 = vsub.f32 %v3123, %v3134
        %v3137 = vsub.f32 %v3126, %v3135
        %v3138 = vmul.f32 %v3136, %v3136
        %v3139 = vmul.f32 %v3137, %v3137
        %3140 = vadd.xlane.f32.xlu0 %v3138
        %v3141 = vpop.xlane.xlu0 %3140
        %3142 = vadd.xlane.f32.xlu0 %v3139
        %v3143 = vpop.xlane.xlu0 %3142
        %v3144 = vmul.f32 %v3141, %v3133
        %v3145 = vmul.f32 %v3143, %v3133
        %v3146 = vadd.f32 %v3144, 1e-05
        %v3147 = vadd.f32 %v3145, 1e-05
        %v3148 = vrsqrt.pop %v3146
        %v3149 = vrsqrt.pop %v3147
        %v3150 = vmul.f32 %v3136, %v3148
        %v3151 = vmul.f32 %v3137, %v3149
        %v3152 = vld [vmem:[%s9] sm:$0x1]
        %v3154 = vlaneseq
        %v3155 = vshrl.u32 %v3154, 7
        %v3156 = vsub.s32 0, %v3155
        %v3157 = vrot.slane %v3152, %v3156
        %v3159 = vmul.f32 %v3150, %v3157
        %v3160 = vmul.f32 %v3151, %v3157
        %v3161 = vld [vmem:[%s10] sm:$0x1]
        %v3163 = vlaneseq
        %v3164 = vshrl.u32 %v3163, 7
        %v3165 = vsub.s32 0, %v3164
        %v3166 = vrot.slane %v3161, %v3165
        %v3168 = vadd.f32 %v3159, %v3166
        %v3169 = vadd.f32 %v3160, %v3166
        %3170 = vst [vmem:[%s624] sm:$0xff] %v3168
        %3171 = vst [vmem:[%s624 + $0x8] sm:$0xff] %v3169
        %s3172 = sand.u32 %s300, 1
        %s3173 = scalar_lea.sflag [#allocation5], %s3172
        %s3174 = sand.u32 %s300, 1
        %s3175 = smul.addr %s3174, 16
        %s3176 = scalar_lea.vmem [#allocation18], %s3175
        %s3177 = sand.u32 %s326, 1
        %s3178 = scalar_lea.sflag [#allocation20], %s3177
        %s3179 = sand.u32 %s326, 1
        %s3180 = smul.addr %s3179, 16
        %s3181 = scalar_lea.vmem [#allocation19], %s3180
        // Predicated region
        $region101: #{tpu_custom_call.1} parent=63 // pred_check
          %p3182 = pneg %p310
        $region102: #{tpu_custom_call.1} parent=63 // pred_check_branch
          %3184 = sbr.rel (%p3182) target = $region104
        $region103: #{tpu_custom_call.1} parent=63 // pred_region
          %s3185 = smul.u32 2, %s41
          %s3187 = ssub.s32 256, 256
          %3188 = vsyncadd %s3173, %s3187
          %s3189 = smul.addr %s3185, 128
          %s3190 = scalar_lea.hbm %s11, %s3189
          %s3191 = sshll.u32 %s3176, 4
          %s3192 = int_to_ptr.vmem [resolvable:$true] %s3191
          %3197 = dma.vmem_to_hbm [thread:$0]  %s3192, 256, %s3190, %s3173, 128, 128, 8
        $region104: #{tpu_custom_call.1} parent=63 // pred_fallthru
          _
        // Predicated region
        $region105: #{tpu_custom_call.1} parent=63 // pred_check
          %p3198 = pneg %p336
        $region106: #{tpu_custom_call.1} parent=63 // pred_check_branch
          %3200 = sbr.rel (%p3198) target = $region108
        $region107: #{tpu_custom_call.1} parent=63 // pred_region
          %s3201 = smul.u32 2, %s41
          %s3203 = ssub.s32 256, 256
          %3204 = vsyncadd %s3178, %s3203
          %s3205 = smul.addr %s3201, 128
          %s3206 = scalar_lea.hbm %s12, %s3205
          %s3207 = sshll.u32 %s3181, 4
          %s3208 = int_to_ptr.vmem [resolvable:$true] %s3207
          %3213 = dma.vmem_to_hbm [thread:$0]  %s3208, 256, %s3206, %s3178, 128, 128, 8
        $region108: #{tpu_custom_call.1} parent=63 // pred_fallthru
          _
      $region64: #{tpu_custom_call.1} parent=5 // pred_fallthru
        _
      %p3214 = scmp.le.s32.totalorder 2, %s36
      // Predicated region
      $region109: #{tpu_custom_call.1} parent=5 // pred_check
        %p3215 = pneg %p3214
      $region110: #{tpu_custom_call.1} parent=5 // pred_check_branch
        %3217 = sbr.rel (%p3215) target = $region112
      $region111: #{tpu_custom_call.1} parent=5 // pred_region
        %s3218 = ssub.s32 %s36, 2
        // Predicated region
        $region113: #{tpu_custom_call.1} parent=111 // pred_check
          %p3219 = pneg %p316
        $region114: #{tpu_custom_call.1} parent=111 // pred_check_branch
          %3221 = sbr.rel (%p3219) target = $region116
        $region115: #{tpu_custom_call.1} parent=111 // pred_region
          %s3222 = sand.u32 %s301, 1
          %s3223 = scalar_lea.sflag [#allocation5], %s3222
          %s3224 = sand.u32 %s301, 1
          %s3225 = smul.addr %s3224, 16
          %s3226 = scalar_lea.vmem [#allocation18], %s3225
          %3227 = dma.done %s3223, 256
        $region116: #{tpu_custom_call.1} parent=111 // pred_fallthru
          _
        // Predicated region
        $region117: #{tpu_custom_call.1} parent=111 // pred_check
          %p3228 = pneg %p342
        $region118: #{tpu_custom_call.1} parent=111 // pred_check_branch
          %3230 = sbr.rel (%p3228) target = $region120
        $region119: #{tpu_custom_call.1} parent=111 // pred_region
          %s3231 = sand.u32 %s327, 1
          %s3232 = scalar_lea.sflag [#allocation20], %s3231
          %s3233 = sand.u32 %s327, 1
          %s3234 = smul.addr %s3233, 16
          %s3235 = scalar_lea.vmem [#allocation19], %s3234
          %3236 = dma.done %s3232, 256
        $region120: #{tpu_custom_call.1} parent=111 // pred_fallthru
          _
      $region112: #{tpu_custom_call.1} parent=5 // pred_fallthru
        _
    $region6: #{tpu_custom_call.1} parent=1 // loop_footer
      %s40 = sadd.s32 1, %s36
    $region7: #{tpu_custom_call.1} parent=1 // loop_footer_branch
      %35 = sbr.rel target = $region3
    $region8: #{tpu_custom_call.1} parent=1 // loop_exit
      _
    %3237 = vsyncpa [#allocation4], 1
    %s3238 = scalar_lea.sflag [#allocation4], 1
    %3239 = vsyncpa %s3238, 1
    %3240 = vsyncpa [#allocation7], 1
    %s3241 = scalar_lea.sflag [#allocation7], 1
    %3242 = vsyncpa %s3241, 1
    %3243 = vsyncpa [#allocation10], 1
    %s3244 = scalar_lea.sflag [#allocation10], 1
    %3245 = vsyncpa %s3244, 1
    %3246 = vsyncpa [#allocation13], 1
    %3247 = vsyncpa [#allocation16], 1
    %3248 = vsyncpa [#allocation5], 1
    %s3249 = scalar_lea.sflag [#allocation5], 1
    %3250 = vsyncpa %s3249, 1
    %3251 = vsyncpa [#allocation20], 1
    %s3252 = scalar_lea.sflag [#allocation20], 1
    %3253 = vsyncpa %s3252, 1

</llo_original>
